<compile_context>
chip_gen: v7x
topology: tpu7x:2x2x1
jax: 0.10.0
libtpu: 0.0.40
codegen_flags: <defaults>
</compile_context>

<pallas_src>
import functools

import jax
import jax.numpy as jnp
from jax.experimental import pallas as pl
from jax.experimental.pallas import tpu as pltpu

# bf16 matmul operands (f32 accumulation + f32 gate math) per perf review.
# Set to jnp.float32 for bit-close agreement with the PyTorch reference.
MATMUL_DTYPE = jnp.bfloat16


def _round_up(n, m):
    return ((n + m - 1) // m) * m


def _pick_tile(n, candidates):
    for c in candidates:
        if c <= n and n % c == 0:
            return c
    return n


# ----------------------------------------------------------------------------
# Tiled matmul + bias kernel:  out = x @ w + b   (used for the vocab projection)
# Weight tiles are the OUTER grid axis so each weight block is DMA'd exactly
# once; the (much smaller) activation blocks are the ones re-read M//tm times.
# ----------------------------------------------------------------------------
def _matmul_bias_kernel(x_ref, w_ref, b_ref, o_ref):
    o_ref[...] = (
        jnp.dot(x_ref[...], w_ref[...], preferred_element_type=jnp.float32)
        + b_ref[...]
    )


def matmul_bias_pallas(x2d, w, b):
    """x2d: (N, K), w: (K, M), b: (1, M) f32.  N % 8 == 0, M % 128 == 0."""
    N, K = x2d.shape
    _, M = w.shape
    tn = _pick_tile(N, (512, 256, 128, 64, 32, 16, 8))
    tm = _pick_tile(M, (512, 256, 128))
    return pl.pallas_call(
        _matmul_bias_kernel,
        out_shape=jax.ShapeDtypeStruct((N, M), jnp.float32),
        grid=(M // tm, N // tn),            # weight axis OUTER -> W read once
        in_specs=[
            pl.BlockSpec((tn, K), lambda j, i: (i, 0)),
            pl.BlockSpec((K, tm), lambda j, i: (0, j)),
            pl.BlockSpec((1, tm), lambda j, i: (0, j)),
        ],
        out_specs=pl.BlockSpec((tn, tm), lambda j, i: (i, j)),
        compiler_params=pltpu.CompilerParams(
            dimension_semantics=("parallel", "parallel")),
    )(x2d, w, b)


# ----------------------------------------------------------------------------
# Fused LSTM layer kernel: per grid step (batch-block b, time-block t)
#   IG = x_block @ W_ih^T + bias          -- one MXU matmul, M = TT*TB rows
#   for k in 0..TT-1:  gates = IG[k] + h @ W_hh^T ; elementwise LSTM update
# h/c persist in VMEM scratch across the sequential time axis.
# Gate columns are ordered [i, f, o, g], each a 128-aligned block of width Up.
# ----------------------------------------------------------------------------
def _lstm_layer_kernel(Up, TT, TB, x_ref, wih_ref, whh_ref, b_ref, out_ref,
                       ig_ref, h_ref, c_ref):
    @pl.when(pl.program_id(1) == 0)
    def _():
        h_ref[...] = jnp.zeros_like(h_ref)
        c_ref[...] = jnp.zeros_like(c_ref)

    # Hoisted input projection for the whole TT-block (kept in VMEM, never HBM).
    ig_ref[...] = (
        jnp.dot(x_ref[...], wih_ref[...], preferred_element_type=jnp.float32)
        + b_ref[...]
    )

    whh = whh_ref[...]   # load W_hh^T once per block, reuse across timesteps

    def step(k, carry):
        h, c = carry
        row = pl.multiple_of(k * TB, 8)
        hw = jnp.dot(h.astype(whh.dtype), whh,
                     preferred_element_type=jnp.float32)
        gates = ig_ref[pl.ds(row, TB), :] + hw            # (TB, 4*Up) f32

        sig = jax.nn.sigmoid(gates[:, : 3 * Up])          # [ i | f | o ]
        i_g = sig[:, 0 * Up:1 * Up]
        f_g = sig[:, 1 * Up:2 * Up]
        o_g = sig[:, 2 * Up:3 * Up]
        g_g = jnp.tanh(gates[:, 3 * Up:4 * Up])

        c_new = f_g * c + i_g * g_g
        h_new = o_g * jnp.tanh(c_new)
        out_ref[pl.ds(row, TB), :] = h_new.astype(out_ref.dtype)
        return (h_new, c_new)

    h_f, c_f = jax.lax.fori_loop(
        0, TT, step, (h_ref[...], c_ref[...]), unroll=True)
    h_ref[...] = h_f
    c_ref[...] = c_f


def lstm_layer_pallas(x, wih_t, whh_t, bias, *, tt, tb, out_dtype):
    """x: (Bb, Tp*tb, Up) activations, batch-block major / time-major inside.
    wih_t, whh_t: (Up, 4*Up); bias: (1, 4*Up) f32."""
    Bb, R, Up = x.shape
    G = 4 * Up
    Tt = R // (tt * tb)
    kernel = functools.partial(_lstm_layer_kernel, Up, tt, tb)
    return pl.pallas_call(
        kernel,
        out_shape=jax.ShapeDtypeStruct((Bb, R, Up), out_dtype),
        grid=(Bb, Tt),
        in_specs=[
            pl.BlockSpec((pl.Squeezed(), tt * tb, Up), lambda b, t: (b, t, 0)),
            pl.BlockSpec((Up, G), lambda b, t: (0, 0)),
            pl.BlockSpec((Up, G), lambda b, t: (0, 0)),
            pl.BlockSpec((1, G), lambda b, t: (0, 0)),
        ],
        out_specs=pl.BlockSpec(
            (pl.Squeezed(), tt * tb, Up), lambda b, t: (b, t, 0)),
        scratch_shapes=[
            pltpu.VMEM((tt * tb, G), jnp.float32),   # IG for this block
            pltpu.VMEM((tb, Up), jnp.float32),       # h carry
            pltpu.VMEM((tb, Up), jnp.float32),       # c carry
        ],
        # Batch blocks are independent ("parallel": split across the 2 TCs on
        # v7x); the time axis carries the recurrence through scratch ->
        # "arbitrary" (sequential), never "parallel".
        compiler_params=pltpu.CompilerParams(
            dimension_semantics=("parallel", "arbitrary")),
    )(x, wih_t, whh_t, bias)


# ----------------------------------------------------------------------------
# One-time parameter preparation (pad + transpose + reorder + cast).
# Padded gate lanes have zero weights/bias => sigmoid(0)=0.5, tanh(0)=0, so
# padded h/c lanes stay exactly 0 and never leak into real lanes.
# ----------------------------------------------------------------------------
_GATE_SRC = (0, 1, 3, 2)   # dest blocks [i, f, o, g] <- PyTorch rows [i, f, g, o]


def _pad_gate_weight(w, U, Up):
    wt = jnp.transpose(w).astype(jnp.float32)            # (U, 4U) cols [i|f|g|o]
    out = jnp.zeros((Up, 4 * Up), jnp.float32)
    for k, src in enumerate(_GATE_SRC):
        out = out.at[:U, k * Up:k * Up + U].set(wt[:, src * U:(src + 1) * U])
    return out.astype(MATMUL_DTYPE)


def _pad_gate_bias(b, U, Up):
    out = jnp.zeros((1, 4 * Up), jnp.float32)
    for k, src in enumerate(_GATE_SRC):
        out = out.at[0, k * Up:k * Up + U].set(b[src * U:(src + 1) * U])
    return out


def prepare_params(params):
    emb = params["embedding"].astype(jnp.float32)        # (V, U)
    V, U = emb.shape
    Up = _round_up(U, 128)
    Vp = _round_up(V, 128)

    prep = {
        "emb": jnp.pad(emb, ((0, 0), (0, Up - U))).astype(MATMUL_DTYPE),
        "wih_t": [], "whh_t": [], "bias": [],
    }
    for layer in params["lstm"]:
        prep["wih_t"].append(_pad_gate_weight(layer["w_ih"], U, Up))
        prep["whh_t"].append(_pad_gate_weight(layer["w_hh"], U, Up))
        prep["bias"].append(_pad_gate_bias(layer["b_ih"] + layer["b_hh"], U, Up))

    prep["w_out_t"] = (
        jnp.zeros((Up, Vp), jnp.float32)
        .at[:U, :V].set(jnp.transpose(params["w_out"]).astype(jnp.float32))
        .astype(MATMUL_DTYPE))
    prep["b_out"] = (
        jnp.zeros((1, Vp), jnp.float32)
        .at[0, :V].set(params["b_out"].astype(jnp.float32)))
    return prep


# ----------------------------------------------------------------------------
# Full model forward
# ----------------------------------------------------------------------------
def cvae_forward(prep, X, L, *, tt=8):
    """X: int32 (B, T) token ids.  L: lengths (unused, matches PyTorch forward).
    Returns logits (B, T, vocab_size) float32."""
    del L  # the reference forward ignores L
    B, T = X.shape
    V, Up = prep["emb"].shape
    Vp = prep["w_out_t"].shape[1]

    Bp = _round_up(B, 8)
    Tp = _round_up(T, tt)
    # Two batch blocks when sublane alignment allows, so the "parallel" grid
    # axis can be split across v7x's two TensorCores.
    tb = Bp // 2 if (Bp >= 16 and (Bp // 2) % 8 == 0) else Bp
    Bb = Bp // tb

    # Pad ids (token 0 is valid; padded rows / trailing timesteps are sliced
    # off at the end and cannot influence real outputs — the LSTM is causal).
    Xp = jnp.pad(X, ((0, Bp - B), (0, Tp - T)))

    # Activation layout (batch_block, T*tb, U): every kernel block is a
    # contiguous lane-dense 2-D slab, so no in-kernel reshapes are needed.
    ids = jnp.transpose(Xp.reshape(Bb, tb, Tp), (0, 2, 1)).reshape(Bb, Tp * tb)
    h = jnp.take(prep["emb"], ids, axis=0)                # (Bb, Tp*tb, Up)

    for wih_t, whh_t, bias in zip(prep["wih_t"], prep["whh_t"], prep["bias"]):
        h = lstm_layer_pallas(h, wih_t, whh_t, bias,
                              tt=tt, tb=tb, out_dtype=MATMUL_DTYPE)

    # Output projection (weight tiles DMA'd once; lane-dense Vp output).
    logits = matmul_bias_pallas(
        h.reshape(Bb * Tp * tb, Up), prep["w_out_t"], prep["b_out"])
    logits = logits.reshape(Bb, Tp, tb, Vp)
    logits = jnp.transpose(logits, (0, 2, 1, 3)).reshape(Bp, Tp, Vp)
    return logits[:B, :T, :V]                              # (B, T, V) float32


# ----------------------------------------------------------------------------
# Pure-JAX f32 reference (for self-check)
# ----------------------------------------------------------------------------
def cvae_forward_ref(params, X, L):
    del L
    x = jnp.take(params["embedding"], X, axis=0)           # (B, T, U)
    B, T, U = x.shape
    h_seq = x
    for layer in params["lstm"]:
        wih_t = layer["w_ih"].T
        whh_t = layer["w_hh"].T
        bias = layer["b_ih"] + layer["b_hh"]

        def step(carry, xt):
            h, c = carry
            gates = xt @ wih_t + h @ whh_t + bias
            i = jax.nn.sigmoid(gates[:, 0 * U:1 * U])
            f = jax.nn.sigmoid(gates[:, 1 * U:2 * U])
            g = jnp.tanh(gates[:, 2 * U:3 * U])
            o = jax.nn.sigmoid(gates[:, 3 * U:4 * U])
            c = f * c + i * g
            h = o * jnp.tanh(c)
            return (h, c), h

        init = (jnp.zeros((B, U), jnp.float32), jnp.zeros((B, U), jnp.float32))
        _, h_tm = jax.lax.scan(step, init, jnp.transpose(h_seq, (1, 0, 2)))
        h_seq = jnp.transpose(h_tm, (1, 0, 2))
    return h_seq @ params["w_out"].T + params["b_out"]


# ----------------------------------------------------------------------------
# Deterministic parameter init (PyTorch-style uniform(-1/sqrt(U), 1/sqrt(U)))
# ----------------------------------------------------------------------------
def init_params(key, vocab_size, unit_size, n_rnn_layer):
    k = 1.0 / jnp.sqrt(jnp.float32(unit_size))
    keys = jax.random.split(key, 2 + 4 * n_rnn_layer + 2)
    ki = iter(keys)

    params = {}
    params["embedding"] = jax.random.normal(
        next(ki), (vocab_size, unit_size), jnp.float32)

    lstm = []
    for _ in range(n_rnn_layer):
        layer = {
            "w_ih": jax.random.uniform(
                next(ki), (4 * unit_size, unit_size), jnp.float32, -k, k),
            "w_hh": jax.random.uniform(
                next(ki), (4 * unit_size, unit_size), jnp.float32, -k, k),
            "b_ih": jax.random.uniform(
                next(ki), (4 * unit_size,), jnp.float32, -k, k),
            "b_hh": jax.random.uniform(
                next(ki), (4 * unit_size,), jnp.float32, -k, k),
        }
        lstm.append(layer)
    params["lstm"] = lstm

    params["w_out"] = jax.random.uniform(
        next(ki), (vocab_size, unit_size), jnp.float32, -k, k)
    params["b_out"] = jax.random.uniform(
        next(ki), (vocab_size,), jnp.float32, -k, k)
    return params


if __name__ == "__main__":
    # Small config consistent with the module's args.
    vocab_size = 32
    args = {"batch_size": 2, "lr": 1e-3, "unit_size": 32, "n_rnn_layer": 2}
    B, T, U = args["batch_size"], 8, args["unit_size"]

    key = jax.random.PRNGKey(0)
    k_param, k_x, k_l = jax.random.split(key, 3)

    params = init_params(k_param, vocab_size, U, args["n_rnn_layer"])
    X = jax.random.randint(k_x, (B, T), 0, vocab_size, dtype=jnp.int32)
    L = jax.random.randint(k_l, (B,), 1, T + 1, dtype=jnp.int32)  # unused

    # One-time padded / transposed / bf16-cast kernel-native parameter layout.
    prep = prepare_params(params)

    logits = jax.jit(cvae_forward)(prep, X, L)
    logits = jax.block_until_ready(logits)

    # Self-check against a pure-JAX f32 reference (looser tol for bf16 matmuls).
    ref = jax.block_until_ready(cvae_forward_ref(params, X, L))
    assert logits.shape == (B, T, vocab_size)
    tol = 5e-2 if MATMUL_DTYPE == jnp.bfloat16 else 1e-4
    max_err = float(jnp.max(jnp.abs(logits - ref)))
    assert jnp.allclose(logits, ref, rtol=tol, atol=tol), max_err

    print("KERNEL_OK")
</pallas_src>

<mosaic_0001>
module attributes {stable_mosaic.version = 11 : i64} {
  func.func @_matmul_bias_kernel(%arg0: i32, %arg1: i32, %arg2: memref<64x128xbf16, #tpu.memory_space<vmem>>, %arg3: memref<128x128xbf16, #tpu.memory_space<vmem>>, %arg4: memref<1x128xf32, #tpu.memory_space<vmem>>, %arg5: memref<64x128xf32, #tpu.memory_space<vmem>>) attributes {dimension_semantics = [#tpu.dimension_semantics<parallel>, #tpu.dimension_semantics<parallel>], iteration_bounds = array<i64: 1, 1>, scalar_prefetch = 0 : i64, scratch_operands = 0 : i64, tpu.core_type = #tpu.core_type<tc>, window_params = [{transform_indices = @transform_0, window_bounds = array<i64: 64, 128>}, {transform_indices = @transform_1, window_bounds = array<i64: 128, 128>}, {transform_indices = @transform_2, window_bounds = array<i64: 1, 128>}, {transform_indices = @transform_3, window_bounds = array<i64: 64, 128>}]} {
    %c0 = arith.constant 0 : index
    %c0_0 = arith.constant 0 : index
    %0 = vector.load %arg2[%c0, %c0_0] : memref<64x128xbf16, #tpu.memory_space<vmem>>, vector<64x128xbf16>
    %c0_1 = arith.constant 0 : index
    %c0_2 = arith.constant 0 : index
    %1 = vector.load %arg3[%c0_1, %c0_2] : memref<128x128xbf16, #tpu.memory_space<vmem>>, vector<128x128xbf16>
    %cst = arith.constant dense<0.000000e+00> : vector<64x128xf32>
    %2 = tpu.matmul %0, %1, %cst {dimension_numbers = #tpu.dot_dimension_numbers<[1], [0], [0], [1], [0, 0, 1, 1], [], []>} : vector<64x128xbf16>, vector<128x128xbf16>, vector<64x128xf32> -> vector<64x128xf32>
    %c0_3 = arith.constant 0 : index
    %c0_4 = arith.constant 0 : index
    %3 = vector.load %arg4[%c0_3, %c0_4] : memref<1x128xf32, #tpu.memory_space<vmem>>, vector<1x128xf32>
    %4 = vector.broadcast %3 : vector<1x128xf32> to vector<64x128xf32>
    %5 = arith.addf %2, %4 : vector<64x128xf32>
    %c0_5 = arith.constant 0 : index
    %c0_6 = arith.constant 0 : index
    %6 = vector.load %arg5[%c0_5, %c0_6] : memref<64x128xf32, #tpu.memory_space<vmem>>, vector<64x128xf32>
    tpu.vector_store %arg5[%c0_5, %c0_6], %5 {strides = array<i32>} : memref<64x128xf32, #tpu.memory_space<vmem>>, vector<64x128xf32>,
    return
  }
  func.func @transform_0(%arg0: i32, %arg1: i32) -> (i32, i32) {
    %c0_i32 = arith.constant 0 : i32
    %c0_i32_0 = arith.constant 0 : i32
    return %arg1, %c0_i32 : i32, i32
  }
  func.func @transform_1(%arg0: i32, %arg1: i32) -> (i32, i32) {
    %c0_i32 = arith.constant 0 : i32
    %c0_i32_0 = arith.constant 0 : i32
    return %c0_i32, %arg0 : i32, i32
  }
  func.func @transform_2(%arg0: i32, %arg1: i32) -> (i32, i32) {
    %c0_i32 = arith.constant 0 : i32
    %c0_i32_0 = arith.constant 0 : i32
    return %c0_i32, %arg0 : i32, i32
  }
  func.func @transform_3(%arg0: i32, %arg1: i32) -> (i32, i32) {
    %c0_i32 = arith.constant 0 : i32
    return %arg1, %arg0 : i32, i32
  }
}

module attributes {stable_mosaic.version = 11 : i64} {
  func.func @_lstm_layer_kernel(%arg0: i32, %arg1: i32, %arg2: memref<1x64x128xbf16, #tpu.memory_space<vmem>>, %arg3: memref<128x512xbf16, #tpu.memory_space<vmem>>, %arg4: memref<128x512xbf16, #tpu.memory_space<vmem>>, %arg5: memref<1x512xf32, #tpu.memory_space<vmem>>, %arg6: memref<1x64x128xbf16, #tpu.memory_space<vmem>>, %arg7: memref<64x512xf32, #tpu.memory_space<vmem>>, %arg8: memref<8x128xf32, #tpu.memory_space<vmem>>, %arg9: memref<8x128xf32, #tpu.memory_space<vmem>>) attributes {dimension_semantics = [#tpu.dimension_semantics<parallel>, #tpu.dimension_semantics<arbitrary>], iteration_bounds = array<i64: 1, 1>, scalar_prefetch = 0 : i64, scratch_operands = 3 : i64, tpu.core_type = #tpu.core_type<tc>, window_params = [{transform_indices = @transform_0, window_bounds = array<i64: 1, 64, 128>}, {pipeline_mode = #tpu.pipeline_mode<synchronous>, transform_indices = @transform_1, window_bounds = array<i64: 128, 512>}, {pipeline_mode = #tpu.pipeline_mode<synchronous>, transform_indices = @transform_2, window_bounds = array<i64: 128, 512>}, {pipeline_mode = #tpu.pipeline_mode<synchronous>, transform_indices = @transform_3, window_bounds = array<i64: 1, 512>}, {transform_indices = @transform_4, window_bounds = array<i64: 1, 64, 128>}]} {
    %c0_i32 = arith.constant 0 : i32
    %0 = arith.cmpi eq, %arg1, %c0_i32 : i32
    %1 = arith.extui %0 : i1 to i32
    %c0_i32_0 = arith.constant 0 : i32
    %2 = arith.cmpi ne, %1, %c0_i32_0 : i32
    scf.if %2 {
      %cst_68 = arith.constant 0.000000e+00 : f32
      %240 = vector.broadcast %cst_68 : f32 to vector<8x128xf32>
      %c0_69 = arith.constant 0 : index
      %c0_70 = arith.constant 0 : index
      %241 = vector.load %arg8[%c0_69, %c0_70] : memref<8x128xf32, #tpu.memory_space<vmem>>, vector<8x128xf32>
      tpu.vector_store %arg8[%c0_69, %c0_70], %240 {strides = array<i32>} : memref<8x128xf32, #tpu.memory_space<vmem>>, vector<8x128xf32>,
      %cst_71 = arith.constant 0.000000e+00 : f32
      %242 = vector.broadcast %cst_71 : f32 to vector<8x128xf32>
      %c0_72 = arith.constant 0 : index
      %c0_73 = arith.constant 0 : index
      %243 = vector.load %arg9[%c0_72, %c0_73] : memref<8x128xf32, #tpu.memory_space<vmem>>, vector<8x128xf32>
      tpu.vector_store %arg9[%c0_72, %c0_73], %242 {strides = array<i32>} : memref<8x128xf32, #tpu.memory_space<vmem>>, vector<8x128xf32>,
    } else {
    }
    %c0 = arith.constant 0 : index
    %c0_1 = arith.constant 0 : index
    %c0_2 = arith.constant 0 : index
    %3 = vector.load %arg2[%c0, %c0_1, %c0_2] : memref<1x64x128xbf16, #tpu.memory_space<vmem>>, vector<1x64x128xbf16>
    %4 = vector.shape_cast %3 : vector<1x64x128xbf16> to vector<64x128xbf16>
    %c0_3 = arith.constant 0 : index
    %c0_4 = arith.constant 0 : index
    %5 = vector.load %arg3[%c0_3, %c0_4] : memref<128x512xbf16, #tpu.memory_space<vmem>>, vector<128x512xbf16>
    %cst = arith.constant dense<0.000000e+00> : vector<64x512xf32>
    %6 = tpu.matmul %4, %5, %cst {dimension_numbers = #tpu.dot_dimension_numbers<[1], [0], [0], [1], [0, 0, 1, 1], [], []>} : vector<64x128xbf16>, vector<128x512xbf16>, vector<64x512xf32> -> vector<64x512xf32>
    %c0_5 = arith.constant 0 : index
    %c0_6 = arith.constant 0 : index
    %7 = vector.load %arg5[%c0_5, %c0_6] : memref<1x512xf32, #tpu.memory_space<vmem>>, vector<1x512xf32>
    %8 = vector.broadcast %7 : vector<1x512xf32> to vector<64x512xf32>
    %9 = arith.addf %6, %8 : vector<64x512xf32>
    %c0_7 = arith.constant 0 : index
    %c0_8 = arith.constant 0 : index
    %10 = vector.load %arg7[%c0_7, %c0_8] : memref<64x512xf32, #tpu.memory_space<vmem>>, vector<64x512xf32>
    tpu.vector_store %arg7[%c0_7, %c0_8], %9 {strides = array<i32>} : memref<64x512xf32, #tpu.memory_space<vmem>>, vector<64x512xf32>,
    %c0_9 = arith.constant 0 : index
    %c0_10 = arith.constant 0 : index
    %11 = vector.load %arg4[%c0_9, %c0_10] : memref<128x512xbf16, #tpu.memory_space<vmem>>, vector<128x512xbf16>
    %c0_11 = arith.constant 0 : index
    %c0_12 = arith.constant 0 : index
    %12 = vector.load %arg8[%c0_11, %c0_12] : memref<8x128xf32, #tpu.memory_space<vmem>>, vector<8x128xf32>
    %c0_13 = arith.constant 0 : index
    %c0_14 = arith.constant 0 : index
    %13 = vector.load %arg9[%c0_13, %c0_14] : memref<8x128xf32, #tpu.memory_space<vmem>>, vector<8x128xf32>
    %c0_i32_15 = arith.constant 0 : i32
    %c8_i32 = arith.constant 8 : i32
    %14 = arith.muli %c0_i32_15, %c8_i32 : i32
    %15 = tpu.assume_multiple %14, 8 : i32
    %16 = arith.truncf %12 : vector<8x128xf32> to vector<8x128xbf16>
    %cst_16 = arith.constant dense<0.000000e+00> : vector<8x512xf32>
    %17 = tpu.matmul %16, %11, %cst_16 {dimension_numbers = #tpu.dot_dimension_numbers<[1], [0], [0], [1], [0, 0, 1, 1], [], []>} : vector<8x128xbf16>, vector<128x512xbf16>, vector<8x512xf32> -> vector<8x512xf32>
    %18 = arith.index_cast %15 : i32 to index
    %c0_17 = arith.constant 0 : index
    %19 = vector.load %arg7[%18, %c0_17] : memref<64x512xf32, #tpu.memory_space<vmem>>, vector<8x512xf32>
    %20 = arith.addf %19, %17 : vector<8x512xf32>
    %21 = vector.extract_strided_slice %20 {offsets = [0, 0], sizes = [8, 384], strides = [1, 1]} : vector<8x512xf32> to vector<8x384xf32>
    %22 = arith.negf %21 : vector<8x384xf32>
    %23 = math.exp %22 : vector<8x384xf32>
    %cst_18 = arith.constant 1.000000e+00 : f32
    %24 = vector.broadcast %cst_18 : f32 to vector<8x384xf32>
    %25 = arith.addf %24, %23 : vector<8x384xf32>
    %26 = arith.divf %24, %25 : vector<8x384xf32>
    %27 = vector.extract_strided_slice %26 {offsets = [0, 0], sizes = [8, 128], strides = [1, 1]} : vector<8x384xf32> to vector<8x128xf32>
    %28 = vector.extract_strided_slice %26 {offsets = [0, 128], sizes = [8, 128], strides = [1, 1]} : vector<8x384xf32> to vector<8x128xf32>
    %29 = vector.extract_strided_slice %26 {offsets = [0, 256], sizes = [8, 128], strides = [1, 1]} : vector<8x384xf32> to vector<8x128xf32>
    %30 = vector.extract_strided_slice %20 {offsets = [0, 384], sizes = [8, 128], strides = [1, 1]} : vector<8x512xf32> to vector<8x128xf32>
    %31 = math.tanh %30 : vector<8x128xf32>
    %32 = arith.mulf %28, %13 : vector<8x128xf32>
    %33 = arith.mulf %27, %31 : vector<8x128xf32>
    %34 = arith.addf %32, %33 : vector<8x128xf32>
    %35 = math.tanh %34 : vector<8x128xf32>
    %36 = arith.mulf %29, %35 : vector<8x128xf32>
    %37 = arith.truncf %36 : vector<8x128xf32> to vector<8x128xbf16>
    %c0_19 = arith.constant 0 : index
    %38 = arith.index_cast %15 : i32 to index
    %c0_20 = arith.constant 0 : index
    %39 = vector.load %arg6[%c0_19, %38, %c0_20] : memref<1x64x128xbf16, #tpu.memory_space<vmem>>, vector<1x8x128xbf16>
    %40 = vector.shape_cast %39 : vector<1x8x128xbf16> to vector<8x128xbf16>
    %41 = vector.shape_cast %37 : vector<8x128xbf16> to vector<1x8x128xbf16>
    tpu.vector_store %arg6[%c0_19, %38, %c0_20], %41 {strides = array<i32>} : memref<1x64x128xbf16, #tpu.memory_space<vmem>>, vector<1x8x128xbf16>,
    %c1_i32 = arith.constant 1 : i32
    %c8_i32_21 = arith.constant 8 : i32
    %42 = arith.muli %c1_i32, %c8_i32_21 : i32
    %43 = tpu.assume_multiple %42, 8 : i32
    %44 = arith.truncf %36 : vector<8x128xf32> to vector<8x128xbf16>
    %cst_22 = arith.constant dense<0.000000e+00> : vector<8x512xf32>
    %45 = tpu.matmul %44, %11, %cst_22 {dimension_numbers = #tpu.dot_dimension_numbers<[1], [0], [0], [1], [0, 0, 1, 1], [], []>} : vector<8x128xbf16>, vector<128x512xbf16>, vector<8x512xf32> -> vector<8x512xf32>
    %46 = arith.index_cast %43 : i32 to index
    %c0_23 = arith.constant 0 : index
    %47 = vector.load %arg7[%46, %c0_23] : memref<64x512xf32, #tpu.memory_space<vmem>>, vector<8x512xf32>
    %48 = arith.addf %47, %45 : vector<8x512xf32>
    %49 = vector.extract_strided_slice %48 {offsets = [0, 0], sizes = [8, 384], strides = [1, 1]} : vector<8x512xf32> to vector<8x384xf32>
    %50 = arith.negf %49 : vector<8x384xf32>
    %51 = math.exp %50 : vector<8x384xf32>
    %cst_24 = arith.constant 1.000000e+00 : f32
    %52 = vector.broadcast %cst_24 : f32 to vector<8x384xf32>
    %53 = arith.addf %52, %51 : vector<8x384xf32>
    %54 = arith.divf %52, %53 : vector<8x384xf32>
    %55 = vector.extract_strided_slice %54 {offsets = [0, 0], sizes = [8, 128], strides = [1, 1]} : vector<8x384xf32> to vector<8x128xf32>
    %56 = vector.extract_strided_slice %54 {offsets = [0, 128], sizes = [8, 128], strides = [1, 1]} : vector<8x384xf32> to vector<8x128xf32>
    %57 = vector.extract_strided_slice %54 {offsets = [0, 256], sizes = [8, 128], strides = [1, 1]} : vector<8x384xf32> to vector<8x128xf32>
    %58 = vector.extract_strided_slice %48 {offsets = [0, 384], sizes = [8, 128], strides = [1, 1]} : vector<8x512xf32> to vector<8x128xf32>
    %59 = math.tanh %58 : vector<8x128xf32>
    %60 = arith.mulf %56, %34 : vector<8x128xf32>
    %61 = arith.mulf %55, %59 : vector<8x128xf32>
    %62 = arith.addf %60, %61 : vector<8x128xf32>
    %63 = math.tanh %62 : vector<8x128xf32>
    %64 = arith.mulf %57, %63 : vector<8x128xf32>
    %65 = arith.truncf %64 : vector<8x128xf32> to vector<8x128xbf16>
    %c0_25 = arith.constant 0 : index
    %66 = arith.index_cast %43 : i32 to index
    %c0_26 = arith.constant 0 : index
    %67 = vector.load %arg6[%c0_25, %66, %c0_26] : memref<1x64x128xbf16, #tpu.memory_space<vmem>>, vector<1x8x128xbf16>
    %68 = vector.shape_cast %67 : vector<1x8x128xbf16> to vector<8x128xbf16>
    %69 = vector.shape_cast %65 : vector<8x128xbf16> to vector<1x8x128xbf16>
    tpu.vector_store %arg6[%c0_25, %66, %c0_26], %69 {strides = array<i32>} : memref<1x64x128xbf16, #tpu.memory_space<vmem>>, vector<1x8x128xbf16>,
    %c2_i32 = arith.constant 2 : i32
    %c8_i32_27 = arith.constant 8 : i32
    %70 = arith.muli %c2_i32, %c8_i32_27 : i32
    %71 = tpu.assume_multiple %70, 8 : i32
    %72 = arith.truncf %64 : vector<8x128xf32> to vector<8x128xbf16>
    %cst_28 = arith.constant dense<0.000000e+00> : vector<8x512xf32>
    %73 = tpu.matmul %72, %11, %cst_28 {dimension_numbers = #tpu.dot_dimension_numbers<[1], [0], [0], [1], [0, 0, 1, 1], [], []>} : vector<8x128xbf16>, vector<128x512xbf16>, vector<8x512xf32> -> vector<8x512xf32>
    %74 = arith.index_cast %71 : i32 to index
    %c0_29 = arith.constant 0 : index
    %75 = vector.load %arg7[%74, %c0_29] : memref<64x512xf32, #tpu.memory_space<vmem>>, vector<8x512xf32>
    %76 = arith.addf %75, %73 : vector<8x512xf32>
    %77 = vector.extract_strided_slice %76 {offsets = [0, 0], sizes = [8, 384], strides = [1, 1]} : vector<8x512xf32> to vector<8x384xf32>
    %78 = arith.negf %77 : vector<8x384xf32>
    %79 = math.exp %78 : vector<8x384xf32>
    %cst_30 = arith.constant 1.000000e+00 : f32
    %80 = vector.broadcast %cst_30 : f32 to vector<8x384xf32>
    %81 = arith.addf %80, %79 : vector<8x384xf32>
    %82 = arith.divf %80, %81 : vector<8x384xf32>
    %83 = vector.extract_strided_slice %82 {offsets = [0, 0], sizes = [8, 128], strides = [1, 1]} : vector<8x384xf32> to vector<8x128xf32>
    %84 = vector.extract_strided_slice %82 {offsets = [0, 128], sizes = [8, 128], strides = [1, 1]} : vector<8x384xf32> to vector<8x128xf32>
    %85 = vector.extract_strided_slice %82 {offsets = [0, 256], sizes = [8, 128], strides = [1, 1]} : vector<8x384xf32> to vector<8x128xf32>
    %86 = vector.extract_strided_slice %76 {offsets = [0, 384], sizes = [8, 128], strides = [1, 1]} : vector<8x512xf32> to vector<8x128xf32>
    %87 = math.tanh %86 : vector<8x128xf32>
    %88 = arith.mulf %84, %62 : vector<8x128xf32>
    %89 = arith.mulf %83, %87 : vector<8x128xf32>
    %90 = arith.addf %88, %89 : vector<8x128xf32>
    %91 = math.tanh %90 : vector<8x128xf32>
    %92 = arith.mulf %85, %91 : vector<8x128xf32>
    %93 = arith.truncf %92 : vector<8x128xf32> to vector<8x128xbf16>
    %c0_31 = arith.constant 0 : index
    %94 = arith.index_cast %71 : i32 to index
    %c0_32 = arith.constant 0 : index
    %95 = vector.load %arg6[%c0_31, %94, %c0_32] : memref<1x64x128xbf16, #tpu.memory_space<vmem>>, vector<1x8x128xbf16>
    %96 = vector.shape_cast %95 : vector<1x8x128xbf16> to vector<8x128xbf16>
    %97 = vector.shape_cast %93 : vector<8x128xbf16> to vector<1x8x128xbf16>
    tpu.vector_store %arg6[%c0_31, %94, %c0_32], %97 {strides = array<i32>} : memref<1x64x128xbf16, #tpu.memory_space<vmem>>, vector<1x8x128xbf16>,
    %c3_i32 = arith.constant 3 : i32
    %c8_i32_33 = arith.constant 8 : i32
    %98 = arith.muli %c3_i32, %c8_i32_33 : i32
    %99 = tpu.assume_multiple %98, 8 : i32
    %100 = arith.truncf %92 : vector<8x128xf32> to vector<8x128xbf16>
    %cst_34 = arith.constant dense<0.000000e+00> : vector<8x512xf32>
    %101 = tpu.matmul %100, %11, %cst_34 {dimension_numbers = #tpu.dot_dimension_numbers<[1], [0], [0], [1], [0, 0, 1, 1], [], []>} : vector<8x128xbf16>, vector<128x512xbf16>, vector<8x512xf32> -> vector<8x512xf32>
    %102 = arith.index_cast %99 : i32 to index
    %c0_35 = arith.constant 0 : index
    %103 = vector.load %arg7[%102, %c0_35] : memref<64x512xf32, #tpu.memory_space<vmem>>, vector<8x512xf32>
    %104 = arith.addf %103, %101 : vector<8x512xf32>
    %105 = vector.extract_strided_slice %104 {offsets = [0, 0], sizes = [8, 384], strides = [1, 1]} : vector<8x512xf32> to vector<8x384xf32>
    %106 = arith.negf %105 : vector<8x384xf32>
    %107 = math.exp %106 : vector<8x384xf32>
    %cst_36 = arith.constant 1.000000e+00 : f32
    %108 = vector.broadcast %cst_36 : f32 to vector<8x384xf32>
    %109 = arith.addf %108, %107 : vector<8x384xf32>
    %110 = arith.divf %108, %109 : vector<8x384xf32>
    %111 = vector.extract_strided_slice %110 {offsets = [0, 0], sizes = [8, 128], strides = [1, 1]} : vector<8x384xf32> to vector<8x128xf32>
    %112 = vector.extract_strided_slice %110 {offsets = [0, 128], sizes = [8, 128], strides = [1, 1]} : vector<8x384xf32> to vector<8x128xf32>
    %113 = vector.extract_strided_slice %110 {offsets = [0, 256], sizes = [8, 128], strides = [1, 1]} : vector<8x384xf32> to vector<8x128xf32>
    %114 = vector.extract_strided_slice %104 {offsets = [0, 384], sizes = [8, 128], strides = [1, 1]} : vector<8x512xf32> to vector<8x128xf32>
    %115 = math.tanh %114 : vector<8x128xf32>
    %116 = arith.mulf %112, %90 : vector<8x128xf32>
    %117 = arith.mulf %111, %115 : vector<8x128xf32>
    %118 = arith.addf %116, %117 : vector<8x128xf32>
    %119 = math.tanh %118 : vector<8x128xf32>
    %120 = arith.mulf %113, %119 : vector<8x128xf32>
    %121 = arith.truncf %120 : vector<8x128xf32> to vector<8x128xbf16>
    %c0_37 = arith.constant 0 : index
    %122 = arith.index_cast %99 : i32 to index
    %c0_38 = arith.constant 0 : index
    %123 = vector.load %arg6[%c0_37, %122, %c0_38] : memref<1x64x128xbf16, #tpu.memory_space<vmem>>, vector<1x8x128xbf16>
    %124 = vector.shape_cast %123 : vector<1x8x128xbf16> to vector<8x128xbf16>
    %125 = vector.shape_cast %121 : vector<8x128xbf16> to vector<1x8x128xbf16>
    tpu.vector_store %arg6[%c0_37, %122, %c0_38], %125 {strides = array<i32>} : memref<1x64x128xbf16, #tpu.memory_space<vmem>>, vector<1x8x128xbf16>,
    %c4_i32 = arith.constant 4 : i32
    %c8_i32_39 = arith.constant 8 : i32
    %126 = arith.muli %c4_i32, %c8_i32_39 : i32
    %127 = tpu.assume_multiple %126, 8 : i32
    %128 = arith.truncf %120 : vector<8x128xf32> to vector<8x128xbf16>
    %cst_40 = arith.constant dense<0.000000e+00> : vector<8x512xf32>
    %129 = tpu.matmul %128, %11, %cst_40 {dimension_numbers = #tpu.dot_dimension_numbers<[1], [0], [0], [1], [0, 0, 1, 1], [], []>} : vector<8x128xbf16>, vector<128x512xbf16>, vector<8x512xf32> -> vector<8x512xf32>
    %130 = arith.index_cast %127 : i32 to index
    %c0_41 = arith.constant 0 : index
    %131 = vector.load %arg7[%130, %c0_41] : memref<64x512xf32, #tpu.memory_space<vmem>>, vector<8x512xf32>
    %132 = arith.addf %131, %129 : vector<8x512xf32>
    %133 = vector.extract_strided_slice %132 {offsets = [0, 0], sizes = [8, 384], strides = [1, 1]} : vector<8x512xf32> to vector<8x384xf32>
    %134 = arith.negf %133 : vector<8x384xf32>
    %135 = math.exp %134 : vector<8x384xf32>
    %cst_42 = arith.constant 1.000000e+00 : f32
    %136 = vector.broadcast %cst_42 : f32 to vector<8x384xf32>
    %137 = arith.addf %136, %135 : vector<8x384xf32>
    %138 = arith.divf %136, %137 : vector<8x384xf32>
    %139 = vector.extract_strided_slice %138 {offsets = [0, 0], sizes = [8, 128], strides = [1, 1]} : vector<8x384xf32> to vector<8x128xf32>
    %140 = vector.extract_strided_slice %138 {offsets = [0, 128], sizes = [8, 128], strides = [1, 1]} : vector<8x384xf32> to vector<8x128xf32>
    %141 = vector.extract_strided_slice %138 {offsets = [0, 256], sizes = [8, 128], strides = [1, 1]} : vector<8x384xf32> to vector<8x128xf32>
    %142 = vector.extract_strided_slice %132 {offsets = [0, 384], sizes = [8, 128], strides = [1, 1]} : vector<8x512xf32> to vector<8x128xf32>
    %143 = math.tanh %142 : vector<8x128xf32>
    %144 = arith.mulf %140, %118 : vector<8x128xf32>
    %145 = arith.mulf %139, %143 : vector<8x128xf32>
    %146 = arith.addf %144, %145 : vector<8x128xf32>
    %147 = math.tanh %146 : vector<8x128xf32>
    %148 = arith.mulf %141, %147 : vector<8x128xf32>
    %149 = arith.truncf %148 : vector<8x128xf32> to vector<8x128xbf16>
    %c0_43 = arith.constant 0 : index
    %150 = arith.index_cast %127 : i32 to index
    %c0_44 = arith.constant 0 : index
    %151 = vector.load %arg6[%c0_43, %150, %c0_44] : memref<1x64x128xbf16, #tpu.memory_space<vmem>>, vector<1x8x128xbf16>
    %152 = vector.shape_cast %151 : vector<1x8x128xbf16> to vector<8x128xbf16>
    %153 = vector.shape_cast %149 : vector<8x128xbf16> to vector<1x8x128xbf16>
    tpu.vector_store %arg6[%c0_43, %150, %c0_44], %153 {strides = array<i32>} : memref<1x64x128xbf16, #tpu.memory_space<vmem>>, vector<1x8x128xbf16>,
    %c5_i32 = arith.constant 5 : i32
    %c8_i32_45 = arith.constant 8 : i32
    %154 = arith.muli %c5_i32, %c8_i32_45 : i32
    %155 = tpu.assume_multiple %154, 8 : i32
    %156 = arith.truncf %148 : vector<8x128xf32> to vector<8x128xbf16>
    %cst_46 = arith.constant dense<0.000000e+00> : vector<8x512xf32>
    %157 = tpu.matmul %156, %11, %cst_46 {dimension_numbers = #tpu.dot_dimension_numbers<[1], [0], [0], [1], [0, 0, 1, 1], [], []>} : vector<8x128xbf16>, vector<128x512xbf16>, vector<8x512xf32> -> vector<8x512xf32>
    %158 = arith.index_cast %155 : i32 to index
    %c0_47 = arith.constant 0 : index
    %159 = vector.load %arg7[%158, %c0_47] : memref<64x512xf32, #tpu.memory_space<vmem>>, vector<8x512xf32>
    %160 = arith.addf %159, %157 : vector<8x512xf32>
    %161 = vector.extract_strided_slice %160 {offsets = [0, 0], sizes = [8, 384], strides = [1, 1]} : vector<8x512xf32> to vector<8x384xf32>
    %162 = arith.negf %161 : vector<8x384xf32>
    %163 = math.exp %162 : vector<8x384xf32>
    %cst_48 = arith.constant 1.000000e+00 : f32
    %164 = vector.broadcast %cst_48 : f32 to vector<8x384xf32>
    %165 = arith.addf %164, %163 : vector<8x384xf32>
    %166 = arith.divf %164, %165 : vector<8x384xf32>
    %167 = vector.extract_strided_slice %166 {offsets = [0, 0], sizes = [8, 128], strides = [1, 1]} : vector<8x384xf32> to vector<8x128xf32>
    %168 = vector.extract_strided_slice %166 {offsets = [0, 128], sizes = [8, 128], strides = [1, 1]} : vector<8x384xf32> to vector<8x128xf32>
    %169 = vector.extract_strided_slice %166 {offsets = [0, 256], sizes = [8, 128], strides = [1, 1]} : vector<8x384xf32> to vector<8x128xf32>
    %170 = vector.extract_strided_slice %160 {offsets = [0, 384], sizes = [8, 128], strides = [1, 1]} : vector<8x512xf32> to vector<8x128xf32>
    %171 = math.tanh %170 : vector<8x128xf32>
    %172 = arith.mulf %168, %146 : vector<8x128xf32>
    %173 = arith.mulf %167, %171 : vector<8x128xf32>
    %174 = arith.addf %172, %173 : vector<8x128xf32>
    %175 = math.tanh %174 : vector<8x128xf32>
    %176 = arith.mulf %169, %175 : vector<8x128xf32>
    %177 = arith.truncf %176 : vector<8x128xf32> to vector<8x128xbf16>
    %c0_49 = arith.constant 0 : index
    %178 = arith.index_cast %155 : i32 to index
    %c0_50 = arith.constant 0 : index
    %179 = vector.load %arg6[%c0_49, %178, %c0_50] : memref<1x64x128xbf16, #tpu.memory_space<vmem>>, vector<1x8x128xbf16>
    %180 = vector.shape_cast %179 : vector<1x8x128xbf16> to vector<8x128xbf16>
    %181 = vector.shape_cast %177 : vector<8x128xbf16> to vector<1x8x128xbf16>
    tpu.vector_store %arg6[%c0_49, %178, %c0_50], %181 {strides = array<i32>} : memref<1x64x128xbf16, #tpu.memory_space<vmem>>, vector<1x8x128xbf16>,
    %c6_i32 = arith.constant 6 : i32
    %c8_i32_51 = arith.constant 8 : i32
    %182 = arith.muli %c6_i32, %c8_i32_51 : i32
    %183 = tpu.assume_multiple %182, 8 : i32
    %184 = arith.truncf %176 : vector<8x128xf32> to vector<8x128xbf16>
    %cst_52 = arith.constant dense<0.000000e+00> : vector<8x512xf32>
    %185 = tpu.matmul %184, %11, %cst_52 {dimension_numbers = #tpu.dot_dimension_numbers<[1], [0], [0], [1], [0, 0, 1, 1], [], []>} : vector<8x128xbf16>, vector<128x512xbf16>, vector<8x512xf32> -> vector<8x512xf32>
    %186 = arith.index_cast %183 : i32 to index
    %c0_53 = arith.constant 0 : index
    %187 = vector.load %arg7[%186, %c0_53] : memref<64x512xf32, #tpu.memory_space<vmem>>, vector<8x512xf32>
    %188 = arith.addf %187, %185 : vector<8x512xf32>
    %189 = vector.extract_strided_slice %188 {offsets = [0, 0], sizes = [8, 384], strides = [1, 1]} : vector<8x512xf32> to vector<8x384xf32>
    %190 = arith.negf %189 : vector<8x384xf32>
    %191 = math.exp %190 : vector<8x384xf32>
    %cst_54 = arith.constant 1.000000e+00 : f32
    %192 = vector.broadcast %cst_54 : f32 to vector<8x384xf32>
    %193 = arith.addf %192, %191 : vector<8x384xf32>
    %194 = arith.divf %192, %193 : vector<8x384xf32>
    %195 = vector.extract_strided_slice %194 {offsets = [0, 0], sizes = [8, 128], strides = [1, 1]} : vector<8x384xf32> to vector<8x128xf32>
    %196 = vector.extract_strided_slice %194 {offsets = [0, 128], sizes = [8, 128], strides = [1, 1]} : vector<8x384xf32> to vector<8x128xf32>
    %197 = vector.extract_strided_slice %194 {offsets = [0, 256], sizes = [8, 128], strides = [1, 1]} : vector<8x384xf32> to vector<8x128xf32>
    %198 = vector.extract_strided_slice %188 {offsets = [0, 384], sizes = [8, 128], strides = [1, 1]} : vector<8x512xf32> to vector<8x128xf32>
    %199 = math.tanh %198 : vector<8x128xf32>
    %200 = arith.mulf %196, %174 : vector<8x128xf32>
    %201 = arith.mulf %195, %199 : vector<8x128xf32>
    %202 = arith.addf %200, %201 : vector<8x128xf32>
    %203 = math.tanh %202 : vector<8x128xf32>
    %204 = arith.mulf %197, %203 : vector<8x128xf32>
    %205 = arith.truncf %204 : vector<8x128xf32> to vector<8x128xbf16>
    %c0_55 = arith.constant 0 : index
    %206 = arith.index_cast %183 : i32 to index
    %c0_56 = arith.constant 0 : index
    %207 = vector.load %arg6[%c0_55, %206, %c0_56] : memref<1x64x128xbf16, #tpu.memory_space<vmem>>, vector<1x8x128xbf16>
    %208 = vector.shape_cast %207 : vector<1x8x128xbf16> to vector<8x128xbf16>
    %209 = vector.shape_cast %205 : vector<8x128xbf16> to vector<1x8x128xbf16>
    tpu.vector_store %arg6[%c0_55, %206, %c0_56], %209 {strides = array<i32>} : memref<1x64x128xbf16, #tpu.memory_space<vmem>>, vector<1x8x128xbf16>,
    %c7_i32 = arith.constant 7 : i32
    %c8_i32_57 = arith.constant 8 : i32
    %210 = arith.muli %c7_i32, %c8_i32_57 : i32
    %211 = tpu.assume_multiple %210, 8 : i32
    %212 = arith.truncf %204 : vector<8x128xf32> to vector<8x128xbf16>
    %cst_58 = arith.constant dense<0.000000e+00> : vector<8x512xf32>
    %213 = tpu.matmul %212, %11, %cst_58 {dimension_numbers = #tpu.dot_dimension_numbers<[1], [0], [0], [1], [0, 0, 1, 1], [], []>} : vector<8x128xbf16>, vector<128x512xbf16>, vector<8x512xf32> -> vector<8x512xf32>
    %214 = arith.index_cast %211 : i32 to index
    %c0_59 = arith.constant 0 : index
    %215 = vector.load %arg7[%214, %c0_59] : memref<64x512xf32, #tpu.memory_space<vmem>>, vector<8x512xf32>
    %216 = arith.addf %215, %213 : vector<8x512xf32>
    %217 = vector.extract_strided_slice %216 {offsets = [0, 0], sizes = [8, 384], strides = [1, 1]} : vector<8x512xf32> to vector<8x384xf32>
    %218 = arith.negf %217 : vector<8x384xf32>
    %219 = math.exp %218 : vector<8x384xf32>
    %cst_60 = arith.constant 1.000000e+00 : f32
    %220 = vector.broadcast %cst_60 : f32 to vector<8x384xf32>
    %221 = arith.addf %220, %219 : vector<8x384xf32>
    %222 = arith.divf %220, %221 : vector<8x384xf32>
    %223 = vector.extract_strided_slice %222 {offsets = [0, 0], sizes = [8, 128], strides = [1, 1]} : vector<8x384xf32> to vector<8x128xf32>
    %224 = vector.extract_strided_slice %222 {offsets = [0, 128], sizes = [8, 128], strides = [1, 1]} : vector<8x384xf32> to vector<8x128xf32>
    %225 = vector.extract_strided_slice %222 {offsets = [0, 256], sizes = [8, 128], strides = [1, 1]} : vector<8x384xf32> to vector<8x128xf32>
    %226 = vector.extract_strided_slice %216 {offsets = [0, 384], sizes = [8, 128], strides = [1, 1]} : vector<8x512xf32> to vector<8x128xf32>
    %227 = math.tanh %226 : vector<8x128xf32>
    %228 = arith.mulf %224, %202 : vector<8x128xf32>
    %229 = arith.mulf %223, %227 : vector<8x128xf32>
    %230 = arith.addf %228, %229 : vector<8x128xf32>
    %231 = math.tanh %230 : vector<8x128xf32>
    %232 = arith.mulf %225, %231 : vector<8x128xf32>
    %233 = arith.truncf %232 : vector<8x128xf32> to vector<8x128xbf16>
    %c0_61 = arith.constant 0 : index
    %234 = arith.index_cast %211 : i32 to index
    %c0_62 = arith.constant 0 : index
    %235 = vector.load %arg6[%c0_61, %234, %c0_62] : memref<1x64x128xbf16, #tpu.memory_space<vmem>>, vector<1x8x128xbf16>
    %236 = vector.shape_cast %235 : vector<1x8x128xbf16> to vector<8x128xbf16>
    %237 = vector.shape_cast %233 : vector<8x128xbf16> to vector<1x8x128xbf16>
    tpu.vector_store %arg6[%c0_61, %234, %c0_62], %237 {strides = array<i32>} : memref<1x64x128xbf16, #tpu.memory_space<vmem>>, vector<1x8x128xbf16>,
    %c8_i32_63 = arith.constant 8 : i32
    %c0_64 = arith.constant 0 : index
    %c0_65 = arith.constant 0 : index
    %238 = vector.load %arg8[%c0_64, %c0_65] : memref<8x128xf32, #tpu.memory_space<vmem>>, vector<8x128xf32>
    tpu.vector_store %arg8[%c0_64, %c0_65], %232 {strides = array<i32>} : memref<8x128xf32, #tpu.memory_space<vmem>>, vector<8x128xf32>,
    %c0_66 = arith.constant 0 : index
    %c0_67 = arith.constant 0 : index
    %239 = vector.load %arg9[%c0_66, %c0_67] : memref<8x128xf32, #tpu.memory_space<vmem>>, vector<8x128xf32>
    tpu.vector_store %arg9[%c0_66, %c0_67], %230 {strides = array<i32>} : memref<8x128xf32, #tpu.memory_space<vmem>>, vector<8x128xf32>,
    return
  }
  func.func @transform_0(%arg0: i32, %arg1: i32) -> (i32, i32, i32) {
    %c0_i32 = arith.constant 0 : i32
    %c0_i32_0 = arith.constant 0 : i32
    return %arg0, %arg1, %c0_i32 : i32, i32, i32
  }
  func.func @transform_1(%arg0: i32, %arg1: i32) -> (i32, i32) {
    %c0_i32 = arith.constant 0 : i32
    %c0_i32_0 = arith.constant 0 : i32
    %c0_i32_1 = arith.constant 0 : i32
    return %c0_i32, %c0_i32_0 : i32, i32
  }
  func.func @transform_2(%arg0: i32, %arg1: i32) -> (i32, i32) {
    %c0_i32 = arith.constant 0 : i32
    %c0_i32_0 = arith.constant 0 : i32
    %c0_i32_1 = arith.constant 0 : i32
    return %c0_i32, %c0_i32_0 : i32, i32
  }
  func.func @transform_3(%arg0: i32, %arg1: i32) -> (i32, i32) {
    %c0_i32 = arith.constant 0 : i32
    %c0_i32_0 = arith.constant 0 : i32
    %c0_i32_1 = arith.constant 0 : i32
    return %c0_i32, %c0_i32_0 : i32, i32
  }
  func.func @transform_4(%arg0: i32, %arg1: i32) -> (i32, i32, i32) {
    %c0_i32 = arith.constant 0 : i32
    %c0_i32_0 = arith.constant 0 : i32
    return %arg0, %arg1, %c0_i32 : i32, i32, i32
  }
}

module attributes {stable_mosaic.version = 11 : i64} {
  func.func @_lstm_layer_kernel(%arg0: i32, %arg1: i32, %arg2: memref<1x64x128xbf16, #tpu.memory_space<vmem>>, %arg3: memref<128x512xbf16, #tpu.memory_space<vmem>>, %arg4: memref<128x512xbf16, #tpu.memory_space<vmem>>, %arg5: memref<1x512xf32, #tpu.memory_space<vmem>>, %arg6: memref<1x64x128xbf16, #tpu.memory_space<vmem>>, %arg7: memref<64x512xf32, #tpu.memory_space<vmem>>, %arg8: memref<8x128xf32, #tpu.memory_space<vmem>>, %arg9: memref<8x128xf32, #tpu.memory_space<vmem>>) attributes {dimension_semantics = [#tpu.dimension_semantics<parallel>, #tpu.dimension_semantics<arbitrary>], iteration_bounds = array<i64: 1, 1>, scalar_prefetch = 0 : i64, scratch_operands = 3 : i64, tpu.core_type = #tpu.core_type<tc>, window_params = [{transform_indices = @transform_0, window_bounds = array<i64: 1, 64, 128>}, {pipeline_mode = #tpu.pipeline_mode<synchronous>, transform_indices = @transform_1, window_bounds = array<i64: 128, 512>}, {pipeline_mode = #tpu.pipeline_mode<synchronous>, transform_indices = @transform_2, window_bounds = array<i64: 128, 512>}, {pipeline_mode = #tpu.pipeline_mode<synchronous>, transform_indices = @transform_3, window_bounds = array<i64: 1, 512>}, {transform_indices = @transform_4, window_bounds = array<i64: 1, 64, 128>}]} {
    %c0_i32 = arith.constant 0 : i32
    %0 = arith.cmpi eq, %arg1, %c0_i32 : i32
    %1 = arith.extui %0 : i1 to i32
    %c0_i32_0 = arith.constant 0 : i32
    %2 = arith.cmpi ne, %1, %c0_i32_0 : i32
    scf.if %2 {
      %cst_68 = arith.constant 0.000000e+00 : f32
      %240 = vector.broadcast %cst_68 : f32 to vector<8x128xf32>
      %c0_69 = arith.constant 0 : index
      %c0_70 = arith.constant 0 : index
      %241 = vector.load %arg8[%c0_69, %c0_70] : memref<8x128xf32, #tpu.memory_space<vmem>>, vector<8x128xf32>
      tpu.vector_store %arg8[%c0_69, %c0_70], %240 {strides = array<i32>} : memref<8x128xf32, #tpu.memory_space<vmem>>, vector<8x128xf32>,
      %cst_71 = arith.constant 0.000000e+00 : f32
      %242 = vector.broadcast %cst_71 : f32 to vector<8x128xf32>
      %c0_72 = arith.constant 0 : index
      %c0_73 = arith.constant 0 : index
      %243 = vector.load %arg9[%c0_72, %c0_73] : memref<8x128xf32, #tpu.memory_space<vmem>>, vector<8x128xf32>
      tpu.vector_store %arg9[%c0_72, %c0_73], %242 {strides = array<i32>} : memref<8x128xf32, #tpu.memory_space<vmem>>, vector<8x128xf32>,
    } else {
    }
    %c0 = arith.constant 0 : index
    %c0_1 = arith.constant 0 : index
    %c0_2 = arith.constant 0 : index
    %3 = vector.load %arg2[%c0, %c0_1, %c0_2] : memref<1x64x128xbf16, #tpu.memory_space<vmem>>, vector<1x64x128xbf16>
    %4 = vector.shape_cast %3 : vector<1x64x128xbf16> to vector<64x128xbf16>
    %c0_3 = arith.constant 0 : index
    %c0_4 = arith.constant 0 : index
    %5 = vector.load %arg3[%c0_3, %c0_4] : memref<128x512xbf16, #tpu.memory_space<vmem>>, vector<128x512xbf16>
    %cst = arith.constant dense<0.000000e+00> : vector<64x512xf32>
    %6 = tpu.matmul %4, %5, %cst {dimension_numbers = #tpu.dot_dimension_numbers<[1], [0], [0], [1], [0, 0, 1, 1], [], []>} : vector<64x128xbf16>, vector<128x512xbf16>, vector<64x512xf32> -> vector<64x512xf32>
    %c0_5 = arith.constant 0 : index
    %c0_6 = arith.constant 0 : index
    %7 = vector.load %arg5[%c0_5, %c0_6] : memref<1x512xf32, #tpu.memory_space<vmem>>, vector<1x512xf32>
    %8 = vector.broadcast %7 : vector<1x512xf32> to vector<64x512xf32>
    %9 = arith.addf %6, %8 : vector<64x512xf32>
    %c0_7 = arith.constant 0 : index
    %c0_8 = arith.constant 0 : index
    %10 = vector.load %arg7[%c0_7, %c0_8] : memref<64x512xf32, #tpu.memory_space<vmem>>, vector<64x512xf32>
    tpu.vector_store %arg7[%c0_7, %c0_8], %9 {strides = array<i32>} : memref<64x512xf32, #tpu.memory_space<vmem>>, vector<64x512xf32>,
    %c0_9 = arith.constant 0 : index
    %c0_10 = arith.constant 0 : index
    %11 = vector.load %arg4[%c0_9, %c0_10] : memref<128x512xbf16, #tpu.memory_space<vmem>>, vector<128x512xbf16>
    %c0_11 = arith.constant 0 : index
    %c0_12 = arith.constant 0 : index
    %12 = vector.load %arg8[%c0_11, %c0_12] : memref<8x128xf32, #tpu.memory_space<vmem>>, vector<8x128xf32>
    %c0_13 = arith.constant 0 : index
    %c0_14 = arith.constant 0 : index
    %13 = vector.load %arg9[%c0_13, %c0_14] : memref<8x128xf32, #tpu.memory_space<vmem>>, vector<8x128xf32>
    %c0_i32_15 = arith.constant 0 : i32
    %c8_i32 = arith.constant 8 : i32
    %14 = arith.muli %c0_i32_15, %c8_i32 : i32
    %15 = tpu.assume_multiple %14, 8 : i32
    %16 = arith.truncf %12 : vector<8x128xf32> to vector<8x128xbf16>
    %cst_16 = arith.constant dense<0.000000e+00> : vector<8x512xf32>
    %17 = tpu.matmul %16, %11, %cst_16 {dimension_numbers = #tpu.dot_dimension_numbers<[1], [0], [0], [1], [0, 0, 1, 1], [], []>} : vector<8x128xbf16>, vector<128x512xbf16>, vector<8x512xf32> -> vector<8x512xf32>
    %18 = arith.index_cast %15 : i32 to index
    %c0_17 = arith.constant 0 : index
    %19 = vector.load %arg7[%18, %c0_17] : memref<64x512xf32, #tpu.memory_space<vmem>>, vector<8x512xf32>
    %20 = arith.addf %19, %17 : vector<8x512xf32>
    %21 = vector.extract_strided_slice %20 {offsets = [0, 0], sizes = [8, 384], strides = [1, 1]} : vector<8x512xf32> to vector<8x384xf32>
    %22 = arith.negf %21 : vector<8x384xf32>
    %23 = math.exp %22 : vector<8x384xf32>
    %cst_18 = arith.constant 1.000000e+00 : f32
    %24 = vector.broadcast %cst_18 : f32 to vector<8x384xf32>
    %25 = arith.addf %24, %23 : vector<8x384xf32>
    %26 = arith.divf %24, %25 : vector<8x384xf32>
    %27 = vector.extract_strided_slice %26 {offsets = [0, 0], sizes = [8, 128], strides = [1, 1]} : vector<8x384xf32> to vector<8x128xf32>
    %28 = vector.extract_strided_slice %26 {offsets = [0, 128], sizes = [8, 128], strides = [1, 1]} : vector<8x384xf32> to vector<8x128xf32>
    %29 = vector.extract_strided_slice %26 {offsets = [0, 256], sizes = [8, 128], strides = [1, 1]} : vector<8x384xf32> to vector<8x128xf32>
    %30 = vector.extract_strided_slice %20 {offsets = [0, 384], sizes = [8, 128], strides = [1, 1]} : vector<8x512xf32> to vector<8x128xf32>
    %31 = math.tanh %30 : vector<8x128xf32>
    %32 = arith.mulf %28, %13 : vector<8x128xf32>
    %33 = arith.mulf %27, %31 : vector<8x128xf32>
    %34 = arith.addf %32, %33 : vector<8x128xf32>
    %35 = math.tanh %34 : vector<8x128xf32>
    %36 = arith.mulf %29, %35 : vector<8x128xf32>
    %37 = arith.truncf %36 : vector<8x128xf32> to vector<8x128xbf16>
    %c0_19 = arith.constant 0 : index
    %38 = arith.index_cast %15 : i32 to index
    %c0_20 = arith.constant 0 : index
    %39 = vector.load %arg6[%c0_19, %38, %c0_20] : memref<1x64x128xbf16, #tpu.memory_space<vmem>>, vector<1x8x128xbf16>
    %40 = vector.shape_cast %39 : vector<1x8x128xbf16> to vector<8x128xbf16>
    %41 = vector.shape_cast %37 : vector<8x128xbf16> to vector<1x8x128xbf16>
    tpu.vector_store %arg6[%c0_19, %38, %c0_20], %41 {strides = array<i32>} : memref<1x64x128xbf16, #tpu.memory_space<vmem>>, vector<1x8x128xbf16>,
    %c1_i32 = arith.constant 1 : i32
    %c8_i32_21 = arith.constant 8 : i32
    %42 = arith.muli %c1_i32, %c8_i32_21 : i32
    %43 = tpu.assume_multiple %42, 8 : i32
    %44 = arith.truncf %36 : vector<8x128xf32> to vector<8x128xbf16>
    %cst_22 = arith.constant dense<0.000000e+00> : vector<8x512xf32>
    %45 = tpu.matmul %44, %11, %cst_22 {dimension_numbers = #tpu.dot_dimension_numbers<[1], [0], [0], [1], [0, 0, 1, 1], [], []>} : vector<8x128xbf16>, vector<128x512xbf16>, vector<8x512xf32> -> vector<8x512xf32>
    %46 = arith.index_cast %43 : i32 to index
    %c0_23 = arith.constant 0 : index
    %47 = vector.load %arg7[%46, %c0_23] : memref<64x512xf32, #tpu.memory_space<vmem>>, vector<8x512xf32>
    %48 = arith.addf %47, %45 : vector<8x512xf32>
    %49 = vector.extract_strided_slice %48 {offsets = [0, 0], sizes = [8, 384], strides = [1, 1]} : vector<8x512xf32> to vector<8x384xf32>
    %50 = arith.negf %49 : vector<8x384xf32>
    %51 = math.exp %50 : vector<8x384xf32>
    %cst_24 = arith.constant 1.000000e+00 : f32
    %52 = vector.broadcast %cst_24 : f32 to vector<8x384xf32>
    %53 = arith.addf %52, %51 : vector<8x384xf32>
    %54 = arith.divf %52, %53 : vector<8x384xf32>
    %55 = vector.extract_strided_slice %54 {offsets = [0, 0], sizes = [8, 128], strides = [1, 1]} : vector<8x384xf32> to vector<8x128xf32>
    %56 = vector.extract_strided_slice %54 {offsets = [0, 128], sizes = [8, 128], strides = [1, 1]} : vector<8x384xf32> to vector<8x128xf32>
    %57 = vector.extract_strided_slice %54 {offsets = [0, 256], sizes = [8, 128], strides = [1, 1]} : vector<8x384xf32> to vector<8x128xf32>
    %58 = vector.extract_strided_slice %48 {offsets = [0, 384], sizes = [8, 128], strides = [1, 1]} : vector<8x512xf32> to vector<8x128xf32>
    %59 = math.tanh %58 : vector<8x128xf32>
    %60 = arith.mulf %56, %34 : vector<8x128xf32>
    %61 = arith.mulf %55, %59 : vector<8x128xf32>
    %62 = arith.addf %60, %61 : vector<8x128xf32>
    %63 = math.tanh %62 : vector<8x128xf32>
    %64 = arith.mulf %57, %63 : vector<8x128xf32>
    %65 = arith.truncf %64 : vector<8x128xf32> to vector<8x128xbf16>
    %c0_25 = arith.constant 0 : index
    %66 = arith.index_cast %43 : i32 to index
    %c0_26 = arith.constant 0 : index
    %67 = vector.load %arg6[%c0_25, %66, %c0_26] : memref<1x64x128xbf16, #tpu.memory_space<vmem>>, vector<1x8x128xbf16>
    %68 = vector.shape_cast %67 : vector<1x8x128xbf16> to vector<8x128xbf16>
    %69 = vector.shape_cast %65 : vector<8x128xbf16> to vector<1x8x128xbf16>
    tpu.vector_store %arg6[%c0_25, %66, %c0_26], %69 {strides = array<i32>} : memref<1x64x128xbf16, #tpu.memory_space<vmem>>, vector<1x8x128xbf16>,
    %c2_i32 = arith.constant 2 : i32
    %c8_i32_27 = arith.constant 8 : i32
    %70 = arith.muli %c2_i32, %c8_i32_27 : i32
    %71 = tpu.assume_multiple %70, 8 : i32
    %72 = arith.truncf %64 : vector<8x128xf32> to vector<8x128xbf16>
    %cst_28 = arith.constant dense<0.000000e+00> : vector<8x512xf32>
    %73 = tpu.matmul %72, %11, %cst_28 {dimension_numbers = #tpu.dot_dimension_numbers<[1], [0], [0], [1], [0, 0, 1, 1], [], []>} : vector<8x128xbf16>, vector<128x512xbf16>, vector<8x512xf32> -> vector<8x512xf32>
    %74 = arith.index_cast %71 : i32 to index
    %c0_29 = arith.constant 0 : index
    %75 = vector.load %arg7[%74, %c0_29] : memref<64x512xf32, #tpu.memory_space<vmem>>, vector<8x512xf32>
    %76 = arith.addf %75, %73 : vector<8x512xf32>
    %77 = vector.extract_strided_slice %76 {offsets = [0, 0], sizes = [8, 384], strides = [1, 1]} : vector<8x512xf32> to vector<8x384xf32>
    %78 = arith.negf %77 : vector<8x384xf32>
    %79 = math.exp %78 : vector<8x384xf32>
    %cst_30 = arith.constant 1.000000e+00 : f32
    %80 = vector.broadcast %cst_30 : f32 to vector<8x384xf32>
    %81 = arith.addf %80, %79 : vector<8x384xf32>
    %82 = arith.divf %80, %81 : vector<8x384xf32>
    %83 = vector.extract_strided_slice %82 {offsets = [0, 0], sizes = [8, 128], strides = [1, 1]} : vector<8x384xf32> to vector<8x128xf32>
    %84 = vector.extract_strided_slice %82 {offsets = [0, 128], sizes = [8, 128], strides = [1, 1]} : vector<8x384xf32> to vector<8x128xf32>
    %85 = vector.extract_strided_slice %82 {offsets = [0, 256], sizes = [8, 128], strides = [1, 1]} : vector<8x384xf32> to vector<8x128xf32>
    %86 = vector.extract_strided_slice %76 {offsets = [0, 384], sizes = [8, 128], strides = [1, 1]} : vector<8x512xf32> to vector<8x128xf32>
    %87 = math.tanh %86 : vector<8x128xf32>
    %88 = arith.mulf %84, %62 : vector<8x128xf32>
    %89 = arith.mulf %83, %87 : vector<8x128xf32>
    %90 = arith.addf %88, %89 : vector<8x128xf32>
    %91 = math.tanh %90 : vector<8x128xf32>
    %92 = arith.mulf %85, %91 : vector<8x128xf32>
    %93 = arith.truncf %92 : vector<8x128xf32> to vector<8x128xbf16>
    %c0_31 = arith.constant 0 : index
    %94 = arith.index_cast %71 : i32 to index
    %c0_32 = arith.constant 0 : index
    %95 = vector.load %arg6[%c0_31, %94, %c0_32] : memref<1x64x128xbf16, #tpu.memory_space<vmem>>, vector<1x8x128xbf16>
    %96 = vector.shape_cast %95 : vector<1x8x128xbf16> to vector<8x128xbf16>
    %97 = vector.shape_cast %93 : vector<8x128xbf16> to vector<1x8x128xbf16>
    tpu.vector_store %arg6[%c0_31, %94, %c0_32], %97 {strides = array<i32>} : memref<1x64x128xbf16, #tpu.memory_space<vmem>>, vector<1x8x128xbf16>,
    %c3_i32 = arith.constant 3 : i32
    %c8_i32_33 = arith.constant 8 : i32
    %98 = arith.muli %c3_i32, %c8_i32_33 : i32
    %99 = tpu.assume_multiple %98, 8 : i32
    %100 = arith.truncf %92 : vector<8x128xf32> to vector<8x128xbf16>
    %cst_34 = arith.constant dense<0.000000e+00> : vector<8x512xf32>
    %101 = tpu.matmul %100, %11, %cst_34 {dimension_numbers = #tpu.dot_dimension_numbers<[1], [0], [0], [1], [0, 0, 1, 1], [], []>} : vector<8x128xbf16>, vector<128x512xbf16>, vector<8x512xf32> -> vector<8x512xf32>
    %102 = arith.index_cast %99 : i32 to index
    %c0_35 = arith.constant 0 : index
    %103 = vector.load %arg7[%102, %c0_35] : memref<64x512xf32, #tpu.memory_space<vmem>>, vector<8x512xf32>
    %104 = arith.addf %103, %101 : vector<8x512xf32>
    %105 = vector.extract_strided_slice %104 {offsets = [0, 0], sizes = [8, 384], strides = [1, 1]} : vector<8x512xf32> to vector<8x384xf32>
    %106 = arith.negf %105 : vector<8x384xf32>
    %107 = math.exp %106 : vector<8x384xf32>
    %cst_36 = arith.constant 1.000000e+00 : f32
    %108 = vector.broadcast %cst_36 : f32 to vector<8x384xf32>
    %109 = arith.addf %108, %107 : vector<8x384xf32>
    %110 = arith.divf %108, %109 : vector<8x384xf32>
    %111 = vector.extract_strided_slice %110 {offsets = [0, 0], sizes = [8, 128], strides = [1, 1]} : vector<8x384xf32> to vector<8x128xf32>
    %112 = vector.extract_strided_slice %110 {offsets = [0, 128], sizes = [8, 128], strides = [1, 1]} : vector<8x384xf32> to vector<8x128xf32>
    %113 = vector.extract_strided_slice %110 {offsets = [0, 256], sizes = [8, 128], strides = [1, 1]} : vector<8x384xf32> to vector<8x128xf32>
    %114 = vector.extract_strided_slice %104 {offsets = [0, 384], sizes = [8, 128], strides = [1, 1]} : vector<8x512xf32> to vector<8x128xf32>
    %115 = math.tanh %114 : vector<8x128xf32>
    %116 = arith.mulf %112, %90 : vector<8x128xf32>
    %117 = arith.mulf %111, %115 : vector<8x128xf32>
    %118 = arith.addf %116, %117 : vector<8x128xf32>
    %119 = math.tanh %118 : vector<8x128xf32>
    %120 = arith.mulf %113, %119 : vector<8x128xf32>
    %121 = arith.truncf %120 : vector<8x128xf32> to vector<8x128xbf16>
    %c0_37 = arith.constant 0 : index
    %122 = arith.index_cast %99 : i32 to index
    %c0_38 = arith.constant 0 : index
    %123 = vector.load %arg6[%c0_37, %122, %c0_38] : memref<1x64x128xbf16, #tpu.memory_space<vmem>>, vector<1x8x128xbf16>
    %124 = vector.shape_cast %123 : vector<1x8x128xbf16> to vector<8x128xbf16>
    %125 = vector.shape_cast %121 : vector<8x128xbf16> to vector<1x8x128xbf16>
    tpu.vector_store %arg6[%c0_37, %122, %c0_38], %125 {strides = array<i32>} : memref<1x64x128xbf16, #tpu.memory_space<vmem>>, vector<1x8x128xbf16>,
    %c4_i32 = arith.constant 4 : i32
    %c8_i32_39 = arith.constant 8 : i32
    %126 = arith.muli %c4_i32, %c8_i32_39 : i32
    %127 = tpu.assume_multiple %126, 8 : i32
    %128 = arith.truncf %120 : vector<8x128xf32> to vector<8x128xbf16>
    %cst_40 = arith.constant dense<0.000000e+00> : vector<8x512xf32>
    %129 = tpu.matmul %128, %11, %cst_40 {dimension_numbers = #tpu.dot_dimension_numbers<[1], [0], [0], [1], [0, 0, 1, 1], [], []>} : vector<8x128xbf16>, vector<128x512xbf16>, vector<8x512xf32> -> vector<8x512xf32>
    %130 = arith.index_cast %127 : i32 to index
    %c0_41 = arith.constant 0 : index
    %131 = vector.load %arg7[%130, %c0_41] : memref<64x512xf32, #tpu.memory_space<vmem>>, vector<8x512xf32>
    %132 = arith.addf %131, %129 : vector<8x512xf32>
    %133 = vector.extract_strided_slice %132 {offsets = [0, 0], sizes = [8, 384], strides = [1, 1]} : vector<8x512xf32> to vector<8x384xf32>
    %134 = arith.negf %133 : vector<8x384xf32>
    %135 = math.exp %134 : vector<8x384xf32>
    %cst_42 = arith.constant 1.000000e+00 : f32
    %136 = vector.broadcast %cst_42 : f32 to vector<8x384xf32>
    %137 = arith.addf %136, %135 : vector<8x384xf32>
    %138 = arith.divf %136, %137 : vector<8x384xf32>
    %139 = vector.extract_strided_slice %138 {offsets = [0, 0], sizes = [8, 128], strides = [1, 1]} : vector<8x384xf32> to vector<8x128xf32>
    %140 = vector.extract_strided_slice %138 {offsets = [0, 128], sizes = [8, 128], strides = [1, 1]} : vector<8x384xf32> to vector<8x128xf32>
    %141 = vector.extract_strided_slice %138 {offsets = [0, 256], sizes = [8, 128], strides = [1, 1]} : vector<8x384xf32> to vector<8x128xf32>
    %142 = vector.extract_strided_slice %132 {offsets = [0, 384], sizes = [8, 128], strides = [1, 1]} : vector<8x512xf32> to vector<8x128xf32>
    %143 = math.tanh %142 : vector<8x128xf32>
    %144 = arith.mulf %140, %118 : vector<8x128xf32>
    %145 = arith.mulf %139, %143 : vector<8x128xf32>
    %146 = arith.addf %144, %145 : vector<8x128xf32>
    %147 = math.tanh %146 : vector<8x128xf32>
    %148 = arith.mulf %141, %147 : vector<8x128xf32>
    %149 = arith.truncf %148 : vector<8x128xf32> to vector<8x128xbf16>
    %c0_43 = arith.constant 0 : index
    %150 = arith.index_cast %127 : i32 to index
    %c0_44 = arith.constant 0 : index
    %151 = vector.load %arg6[%c0_43, %150, %c0_44] : memref<1x64x128xbf16, #tpu.memory_space<vmem>>, vector<1x8x128xbf16>
    %152 = vector.shape_cast %151 : vector<1x8x128xbf16> to vector<8x128xbf16>
    %153 = vector.shape_cast %149 : vector<8x128xbf16> to vector<1x8x128xbf16>
    tpu.vector_store %arg6[%c0_43, %150, %c0_44], %153 {strides = array<i32>} : memref<1x64x128xbf16, #tpu.memory_space<vmem>>, vector<1x8x128xbf16>,
    %c5_i32 = arith.constant 5 : i32
    %c8_i32_45 = arith.constant 8 : i32
    %154 = arith.muli %c5_i32, %c8_i32_45 : i32
    %155 = tpu.assume_multiple %154, 8 : i32
    %156 = arith.truncf %148 : vector<8x128xf32> to vector<8x128xbf16>
    %cst_46 = arith.constant dense<0.000000e+00> : vector<8x512xf32>
    %157 = tpu.matmul %156, %11, %cst_46 {dimension_numbers = #tpu.dot_dimension_numbers<[1], [0], [0], [1], [0, 0, 1, 1], [], []>} : vector<8x128xbf16>, vector<128x512xbf16>, vector<8x512xf32> -> vector<8x512xf32>
    %158 = arith.index_cast %155 : i32 to index
    %c0_47 = arith.constant 0 : index
    %159 = vector.load %arg7[%158, %c0_47] : memref<64x512xf32, #tpu.memory_space<vmem>>, vector<8x512xf32>
    %160 = arith.addf %159, %157 : vector<8x512xf32>
    %161 = vector.extract_strided_slice %160 {offsets = [0, 0], sizes = [8, 384], strides = [1, 1]} : vector<8x512xf32> to vector<8x384xf32>
    %162 = arith.negf %161 : vector<8x384xf32>
    %163 = math.exp %162 : vector<8x384xf32>
    %cst_48 = arith.constant 1.000000e+00 : f32
    %164 = vector.broadcast %cst_48 : f32 to vector<8x384xf32>
    %165 = arith.addf %164, %163 : vector<8x384xf32>
    %166 = arith.divf %164, %165 : vector<8x384xf32>
    %167 = vector.extract_strided_slice %166 {offsets = [0, 0], sizes = [8, 128], strides = [1, 1]} : vector<8x384xf32> to vector<8x128xf32>
    %168 = vector.extract_strided_slice %166 {offsets = [0, 128], sizes = [8, 128], strides = [1, 1]} : vector<8x384xf32> to vector<8x128xf32>
    %169 = vector.extract_strided_slice %166 {offsets = [0, 256], sizes = [8, 128], strides = [1, 1]} : vector<8x384xf32> to vector<8x128xf32>
    %170 = vector.extract_strided_slice %160 {offsets = [0, 384], sizes = [8, 128], strides = [1, 1]} : vector<8x512xf32> to vector<8x128xf32>
    %171 = math.tanh %170 : vector<8x128xf32>
    %172 = arith.mulf %168, %146 : vector<8x128xf32>
    %173 = arith.mulf %167, %171 : vector<8x128xf32>
    %174 = arith.addf %172, %173 : vector<8x128xf32>
    %175 = math.tanh %174 : vector<8x128xf32>
    %176 = arith.mulf %169, %175 : vector<8x128xf32>
    %177 = arith.truncf %176 : vector<8x128xf32> to vector<8x128xbf16>
    %c0_49 = arith.constant 0 : index
    %178 = arith.index_cast %155 : i32 to index
    %c0_50 = arith.constant 0 : index
    %179 = vector.load %arg6[%c0_49, %178, %c0_50] : memref<1x64x128xbf16, #tpu.memory_space<vmem>>, vector<1x8x128xbf16>
    %180 = vector.shape_cast %179 : vector<1x8x128xbf16> to vector<8x128xbf16>
    %181 = vector.shape_cast %177 : vector<8x128xbf16> to vector<1x8x128xbf16>
    tpu.vector_store %arg6[%c0_49, %178, %c0_50], %181 {strides = array<i32>} : memref<1x64x128xbf16, #tpu.memory_space<vmem>>, vector<1x8x128xbf16>,
    %c6_i32 = arith.constant 6 : i32
    %c8_i32_51 = arith.constant 8 : i32
    %182 = arith.muli %c6_i32, %c8_i32_51 : i32
    %183 = tpu.assume_multiple %182, 8 : i32
    %184 = arith.truncf %176 : vector<8x128xf32> to vector<8x128xbf16>
    %cst_52 = arith.constant dense<0.000000e+00> : vector<8x512xf32>
    %185 = tpu.matmul %184, %11, %cst_52 {dimension_numbers = #tpu.dot_dimension_numbers<[1], [0], [0], [1], [0, 0, 1, 1], [], []>} : vector<8x128xbf16>, vector<128x512xbf16>, vector<8x512xf32> -> vector<8x512xf32>
    %186 = arith.index_cast %183 : i32 to index
    %c0_53 = arith.constant 0 : index
    %187 = vector.load %arg7[%186, %c0_53] : memref<64x512xf32, #tpu.memory_space<vmem>>, vector<8x512xf32>
    %188 = arith.addf %187, %185 : vector<8x512xf32>
    %189 = vector.extract_strided_slice %188 {offsets = [0, 0], sizes = [8, 384], strides = [1, 1]} : vector<8x512xf32> to vector<8x384xf32>
    %190 = arith.negf %189 : vector<8x384xf32>
    %191 = math.exp %190 : vector<8x384xf32>
    %cst_54 = arith.constant 1.000000e+00 : f32
    %192 = vector.broadcast %cst_54 : f32 to vector<8x384xf32>
    %193 = arith.addf %192, %191 : vector<8x384xf32>
    %194 = arith.divf %192, %193 : vector<8x384xf32>
    %195 = vector.extract_strided_slice %194 {offsets = [0, 0], sizes = [8, 128], strides = [1, 1]} : vector<8x384xf32> to vector<8x128xf32>
    %196 = vector.extract_strided_slice %194 {offsets = [0, 128], sizes = [8, 128], strides = [1, 1]} : vector<8x384xf32> to vector<8x128xf32>
    %197 = vector.extract_strided_slice %194 {offsets = [0, 256], sizes = [8, 128], strides = [1, 1]} : vector<8x384xf32> to vector<8x128xf32>
    %198 = vector.extract_strided_slice %188 {offsets = [0, 384], sizes = [8, 128], strides = [1, 1]} : vector<8x512xf32> to vector<8x128xf32>
    %199 = math.tanh %198 : vector<8x128xf32>
    %200 = arith.mulf %196, %174 : vector<8x128xf32>
    %201 = arith.mulf %195, %199 : vector<8x128xf32>
    %202 = arith.addf %200, %201 : vector<8x128xf32>
    %203 = math.tanh %202 : vector<8x128xf32>
    %204 = arith.mulf %197, %203 : vector<8x128xf32>
    %205 = arith.truncf %204 : vector<8x128xf32> to vector<8x128xbf16>
    %c0_55 = arith.constant 0 : index
    %206 = arith.index_cast %183 : i32 to index
    %c0_56 = arith.constant 0 : index
    %207 = vector.load %arg6[%c0_55, %206, %c0_56] : memref<1x64x128xbf16, #tpu.memory_space<vmem>>, vector<1x8x128xbf16>
    %208 = vector.shape_cast %207 : vector<1x8x128xbf16> to vector<8x128xbf16>
    %209 = vector.shape_cast %205 : vector<8x128xbf16> to vector<1x8x128xbf16>
    tpu.vector_store %arg6[%c0_55, %206, %c0_56], %209 {strides = array<i32>} : memref<1x64x128xbf16, #tpu.memory_space<vmem>>, vector<1x8x128xbf16>,
    %c7_i32 = arith.constant 7 : i32
    %c8_i32_57 = arith.constant 8 : i32
    %210 = arith.muli %c7_i32, %c8_i32_57 : i32
    %211 = tpu.assume_multiple %210, 8 : i32
    %212 = arith.truncf %204 : vector<8x128xf32> to vector<8x128xbf16>
    %cst_58 = arith.constant dense<0.000000e+00> : vector<8x512xf32>
    %213 = tpu.matmul %212, %11, %cst_58 {dimension_numbers = #tpu.dot_dimension_numbers<[1], [0], [0], [1], [0, 0, 1, 1], [], []>} : vector<8x128xbf16>, vector<128x512xbf16>, vector<8x512xf32> -> vector<8x512xf32>
    %214 = arith.index_cast %211 : i32 to index
    %c0_59 = arith.constant 0 : index
    %215 = vector.load %arg7[%214, %c0_59] : memref<64x512xf32, #tpu.memory_space<vmem>>, vector<8x512xf32>
    %216 = arith.addf %215, %213 : vector<8x512xf32>
    %217 = vector.extract_strided_slice %216 {offsets = [0, 0], sizes = [8, 384], strides = [1, 1]} : vector<8x512xf32> to vector<8x384xf32>
    %218 = arith.negf %217 : vector<8x384xf32>
    %219 = math.exp %218 : vector<8x384xf32>
    %cst_60 = arith.constant 1.000000e+00 : f32
    %220 = vector.broadcast %cst_60 : f32 to vector<8x384xf32>
    %221 = arith.addf %220, %219 : vector<8x384xf32>
    %222 = arith.divf %220, %221 : vector<8x384xf32>
    %223 = vector.extract_strided_slice %222 {offsets = [0, 0], sizes = [8, 128], strides = [1, 1]} : vector<8x384xf32> to vector<8x128xf32>
    %224 = vector.extract_strided_slice %222 {offsets = [0, 128], sizes = [8, 128], strides = [1, 1]} : vector<8x384xf32> to vector<8x128xf32>
    %225 = vector.extract_strided_slice %222 {offsets = [0, 256], sizes = [8, 128], strides = [1, 1]} : vector<8x384xf32> to vector<8x128xf32>
    %226 = vector.extract_strided_slice %216 {offsets = [0, 384], sizes = [8, 128], strides = [1, 1]} : vector<8x512xf32> to vector<8x128xf32>
    %227 = math.tanh %226 : vector<8x128xf32>
    %228 = arith.mulf %224, %202 : vector<8x128xf32>
    %229 = arith.mulf %223, %227 : vector<8x128xf32>
    %230 = arith.addf %228, %229 : vector<8x128xf32>
    %231 = math.tanh %230 : vector<8x128xf32>
    %232 = arith.mulf %225, %231 : vector<8x128xf32>
    %233 = arith.truncf %232 : vector<8x128xf32> to vector<8x128xbf16>
    %c0_61 = arith.constant 0 : index
    %234 = arith.index_cast %211 : i32 to index
    %c0_62 = arith.constant 0 : index
    %235 = vector.load %arg6[%c0_61, %234, %c0_62] : memref<1x64x128xbf16, #tpu.memory_space<vmem>>, vector<1x8x128xbf16>
    %236 = vector.shape_cast %235 : vector<1x8x128xbf16> to vector<8x128xbf16>
    %237 = vector.shape_cast %233 : vector<8x128xbf16> to vector<1x8x128xbf16>
    tpu.vector_store %arg6[%c0_61, %234, %c0_62], %237 {strides = array<i32>} : memref<1x64x128xbf16, #tpu.memory_space<vmem>>, vector<1x8x128xbf16>,
    %c8_i32_63 = arith.constant 8 : i32
    %c0_64 = arith.constant 0 : index
    %c0_65 = arith.constant 0 : index
    %238 = vector.load %arg8[%c0_64, %c0_65] : memref<8x128xf32, #tpu.memory_space<vmem>>, vector<8x128xf32>
    tpu.vector_store %arg8[%c0_64, %c0_65], %232 {strides = array<i32>} : memref<8x128xf32, #tpu.memory_space<vmem>>, vector<8x128xf32>,
    %c0_66 = arith.constant 0 : index
    %c0_67 = arith.constant 0 : index
    %239 = vector.load %arg9[%c0_66, %c0_67] : memref<8x128xf32, #tpu.memory_space<vmem>>, vector<8x128xf32>
    tpu.vector_store %arg9[%c0_66, %c0_67], %230 {strides = array<i32>} : memref<8x128xf32, #tpu.memory_space<vmem>>, vector<8x128xf32>,
    return
  }
  func.func @transform_0(%arg0: i32, %arg1: i32) -> (i32, i32, i32) {
    %c0_i32 = arith.constant 0 : i32
    %c0_i32_0 = arith.constant 0 : i32
    return %arg0, %arg1, %c0_i32 : i32, i32, i32
  }
  func.func @transform_1(%arg0: i32, %arg1: i32) -> (i32, i32) {
    %c0_i32 = arith.constant 0 : i32
    %c0_i32_0 = arith.constant 0 : i32
    %c0_i32_1 = arith.constant 0 : i32
    return %c0_i32, %c0_i32_0 : i32, i32
  }
  func.func @transform_2(%arg0: i32, %arg1: i32) -> (i32, i32) {
    %c0_i32 = arith.constant 0 : i32
    %c0_i32_0 = arith.constant 0 : i32
    %c0_i32_1 = arith.constant 0 : i32
    return %c0_i32, %c0_i32_0 : i32, i32
  }
  func.func @transform_3(%arg0: i32, %arg1: i32) -> (i32, i32) {
    %c0_i32 = arith.constant 0 : i32
    %c0_i32_0 = arith.constant 0 : i32
    %c0_i32_1 = arith.constant 0 : i32
    return %c0_i32, %c0_i32_0 : i32, i32
  }
  func.func @transform_4(%arg0: i32, %arg1: i32) -> (i32, i32, i32) {
    %c0_i32 = arith.constant 0 : i32
    %c0_i32_0 = arith.constant 0 : i32
    return %arg0, %arg1, %c0_i32 : i32, i32, i32
  }
}

</mosaic_0001>

<llo_original>
// kernel: cvae_forward.5
$region0: #{cvae_forward.5}
  #allocation0 [shape = 'u32[]', space=smem, size = 0x4, offset = 0x4, fixed_abs, tag = 'smem constant byte address 0x4 - core index']
  #allocation1 [shape = 'u32[144,128]{1,0:T(1,128)}', space=vmem, size = 0x12000, scoped, tag = 'internal scratch']
  %s0 = inlined_call_operand.vmem [shape: bf16[64,128], index: 0, kind: input, shape index: {}]
  %s1 = inlined_call_operand.vmem [shape: bf16[128,128], index: 1, kind: input, shape index: {}]
  %s2 = inlined_call_operand.vmem [shape: f32[1,128], index: 2, kind: input, shape index: {}]
  %s3 = inlined_call_operand.vmem [shape: f32[64,128], index: 3, kind: output, shape index: {}]
  %s4 = sld [smem:[#allocation0]]
  $region22: #{cvae_forward.5} parent=0
    _
  %s6 = ssub.s32 1, %s4
  %s7 = scalar_select 0, %s6, %s4
  // Predicated region
  $region2: #{cvae_forward.5} parent=0 // pred_check
    _
  $region3: #{cvae_forward.5} parent=0 // pred_check_branch
    %9 = sbr.rel (0) target = $region5
  $region4: #{cvae_forward.5} parent=0 // pred_region
    _
  $region5: #{cvae_forward.5} parent=0 // pred_fallthru
    _
  // Predicated region
  $region6: #{cvae_forward.5} parent=0 // pred_check
    _
  $region7: #{cvae_forward.5} parent=0 // pred_check_branch
    %11 = sbr.rel (0) target = $region9
  $region8: #{cvae_forward.5} parent=0 // pred_region
    _
  $region9: #{cvae_forward.5} parent=0 // pred_fallthru
    _
  // Predicated region
  $region10: #{cvae_forward.5} parent=0 // pred_check
    _
  $region11: #{cvae_forward.5} parent=0 // pred_check_branch
    %13 = sbr.rel (0) target = $region13
  $region12: #{cvae_forward.5} parent=0 // pred_region
    _
  $region13: #{cvae_forward.5} parent=0 // pred_fallthru
    _
  %v15 = vld [vmem:[%s0] sm:$0xf]
  %v16 = vld [vmem:[%s0 + $0x4] sm:$0xf]
  %v17 = vld [vmem:[%s0 + $0x8] sm:$0xf]
  %v18 = vld [vmem:[%s0 + $0xc] sm:$0xf]
  %v19 = vld [vmem:[%s0 + $0x10] sm:$0xf]
  %v20 = vld [vmem:[%s0 + $0x14] sm:$0xf]
  %v21 = vld [vmem:[%s0 + $0x18] sm:$0xf]
  %v22 = vld [vmem:[%s0 + $0x1c] sm:$0xf]
  %v23 = vld [vmem:[%s1] sm:$0xf]
  %v24 = vld [vmem:[%s1 + $0x4] sm:$0xf]
  %v25 = vld [vmem:[%s1 + $0x8] sm:$0xf]
  %v26 = vld [vmem:[%s1 + $0xc] sm:$0xf]
  %v27 = vld [vmem:[%s1 + $0x10] sm:$0xf]
  %v28 = vld [vmem:[%s1 + $0x14] sm:$0xf]
  %v29 = vld [vmem:[%s1 + $0x18] sm:$0xf]
  %v30 = vld [vmem:[%s1 + $0x1c] sm:$0xf]
  %v31 = vld [vmem:[%s1 + $0x20] sm:$0xf]
  %v32 = vld [vmem:[%s1 + $0x24] sm:$0xf]
  %v33 = vld [vmem:[%s1 + $0x28] sm:$0xf]
  %v34 = vld [vmem:[%s1 + $0x2c] sm:$0xf]
  %v35 = vld [vmem:[%s1 + $0x30] sm:$0xf]
  %v36 = vld [vmem:[%s1 + $0x34] sm:$0xf]
  %v37 = vld [vmem:[%s1 + $0x38] sm:$0xf]
  %v38 = vld [vmem:[%s1 + $0x3c] sm:$0xf]
  %v39 = vld [vmem:[%s2] sm:$0x1]
  %v41 = vlaneseq
  %v42 = vshrl.u32 %v41, 7
  %v43 = vsub.s32 0, %v42
  %v44 = vrot.slane %v39, %v43
  %v54 = vunpack.c.l.b16 %v15
  %v55 = vunpack.c.l.b16 %v16
  %v56 = vunpack.c.l.b16 %v17
  %v57 = vunpack.c.l.b16 %v18
  %v58 = vunpack.c.l.b16 %v19
  %v59 = vunpack.c.l.b16 %v20
  %v60 = vunpack.c.l.b16 %v21
  %v61 = vunpack.c.l.b16 %v22
  %v62 = vpack.c.b16 %v55, %v54
  %v63 = vpack.c.b16 %v57, %v56
  %v64 = vpack.c.b16 %v59, %v58
  %v65 = vpack.c.b16 %v61, %v60
  %v86 = vunpack.c.l.b16 %v23
  %v87 = vunpack.c.l.b16 %v24
  %v88 = vunpack.c.l.b16 %v25
  %v89 = vunpack.c.l.b16 %v26
  %v90 = vunpack.c.l.b16 %v27
  %v91 = vunpack.c.l.b16 %v28
  %v92 = vunpack.c.l.b16 %v29
  %v93 = vunpack.c.l.b16 %v30
  %v94 = vunpack.c.l.b16 %v31
  %v95 = vunpack.c.l.b16 %v32
  %v96 = vunpack.c.l.b16 %v33
  %v97 = vunpack.c.l.b16 %v34
  %v98 = vunpack.c.l.b16 %v35
  %v99 = vunpack.c.l.b16 %v36
  %v100 = vunpack.c.l.b16 %v37
  %v101 = vunpack.c.l.b16 %v38
  %v102 = vpack.c.b16 %v87, %v86
  %v103 = vpack.c.b16 %v89, %v88
  %v104 = vpack.c.b16 %v91, %v90
  %v105 = vpack.c.b16 %v93, %v92
  %v106 = vpack.c.b16 %v95, %v94
  %v107 = vpack.c.b16 %v97, %v96
  %v108 = vpack.c.b16 %v99, %v98
  %v109 = vpack.c.b16 %v101, %v100
  %118 = vmatprep.subr.bf16.mxu0 0
  %119 = vmatpush1.bf16.msra.mxu0 %v102
  %120 = vmatprep.subr.bf16.mxu0 0
  %121 = vmatpush1.bf16.msra.mxu0 %v103
  %122 = vmatprep.subr.bf16.mxu0 0
  %123 = vmatpush1.bf16.msra.mxu0 %v104
  %124 = vmatprep.subr.bf16.mxu0 0
  %125 = vmatpush1.bf16.msra.mxu0 %v105
  %126 = vmatprep.subr.bf16.mxu0 0
  %127 = vmatpush1.bf16.msra.mxu0 %v106
  %128 = vmatprep.subr.bf16.mxu0 0
  %129 = vmatpush1.bf16.msra.mxu0 %v107
  %130 = vmatprep.subr.bf16.mxu0 0
  %131 = vmatpush1.bf16.msra.mxu0 %v108
  %132 = vmatprep.subr.bf16.mxu0 0
  %133 = vmatpush1.bf16.msra.mxu0 %v109
  %134 = vmatprep.subr.bf16.mxu0 0
  %135 = vmatpush1.bf16.msra.mxu0 0
  %136 = vmatprep.subr.bf16.mxu0 0
  %137 = vmatpush1.bf16.msra.mxu0 0
  %138 = vmatprep.subr.bf16.mxu0 0
  %139 = vmatpush1.bf16.msra.mxu0 0
  %140 = vmatprep.subr.bf16.mxu0 0
  %141 = vmatpush1.bf16.msra.mxu0 0
  %142 = vmatprep.subr.bf16.mxu0 0
  %143 = vmatpush1.bf16.msra.mxu0 0
  %144 = vmatprep.subr.bf16.mxu0 0
  %145 = vmatpush1.bf16.msra.mxu0 0
  %146 = vmatprep.subr.bf16.mxu0 0
  %147 = vmatpush1.bf16.msra.mxu0 0
  %148 = vmatprep.subr.bf16.mxu0 0
  %149 = vmatpush1.bf16.msra.mxu0 0
  %150 = vmatprep.mubr.bf16.mxu0 0
  %151 = vmatmul.mubr.bf16.gmra.mrb[0].mxu0 %v62
  %v152 = vpop.f32.mrb[0].mxu0
  %v153 = vadd.f32 %v44, %v152
  %v154 = vpop.f32.mrb[0].mxu0
  %v155 = vpop.f32.mrb[0].mxu0
  %v156 = vadd.f32 %v44, %v155
  %v157 = vpop.f32.mrb[0].mxu0
  %158 = vmatprep.mubr.bf16.mxu0 0
  %159 = vmatmul.mubr.bf16.gmra.mrb[0].mxu0 %v63
  %v160 = vpop.f32.mrb[0].mxu0
  %v161 = vadd.f32 %v44, %v160
  %v162 = vpop.f32.mrb[0].mxu0
  %v163 = vpop.f32.mrb[0].mxu0
  %v164 = vadd.f32 %v44, %v163
  %v165 = vpop.f32.mrb[0].mxu0
  %166 = vmatprep.mubr.bf16.mxu0 0
  %167 = vmatmul.mubr.bf16.gmra.mrb[0].mxu0 %v64
  %v168 = vpop.f32.mrb[0].mxu0
  %v169 = vadd.f32 %v44, %v168
  %v170 = vpop.f32.mrb[0].mxu0
  %v171 = vpop.f32.mrb[0].mxu0
  %v172 = vadd.f32 %v44, %v171
  %v173 = vpop.f32.mrb[0].mxu0
  %174 = vmatprep.mubr.bf16.mxu0 0
  %175 = vmatmul.mubr.bf16.gmra.mrb[0].mxu0 %v65
  %v176 = vpop.f32.mrb[0].mxu0
  %v177 = vadd.f32 %v44, %v176
  %v178 = vpop.f32.mrb[0].mxu0
  %v179 = vpop.f32.mrb[0].mxu0
  %v180 = vadd.f32 %v44, %v179
  %v181 = vpop.f32.mrb[0].mxu0
  %182 = vdwg.mxu0
  %183 = vst [vmem:[%s3] sm:$0xff] %v153
  %184 = vst [vmem:[%s3 + $0x8] sm:$0xff] %v156
  %185 = vst [vmem:[%s3 + $0x10] sm:$0xff] %v161
  %186 = vst [vmem:[%s3 + $0x18] sm:$0xff] %v164
  %187 = vst [vmem:[%s3 + $0x20] sm:$0xff] %v169
  %188 = vst [vmem:[%s3 + $0x28] sm:$0xff] %v172
  %189 = vst [vmem:[%s3 + $0x30] sm:$0xff] %v177
  %190 = vst [vmem:[%s3 + $0x38] sm:$0xff] %v180
  // Predicated region
  $region14: #{cvae_forward.5} parent=0 // pred_check
    _
  $region15: #{cvae_forward.5} parent=0 // pred_check_branch
    %192 = sbr.rel (0) target = $region17
  $region16: #{cvae_forward.5} parent=0 // pred_region
    _
  $region17: #{cvae_forward.5} parent=0 // pred_fallthru
    _
  // Predicated region
  $region18: #{cvae_forward.5} parent=0 // pred_check
    _
  $region19: #{cvae_forward.5} parent=0 // pred_check_branch
    %194 = sbr.rel (0) target = $region21
  $region20: #{cvae_forward.5} parent=0 // pred_region
    _
  $region21: #{cvae_forward.5} parent=0 // pred_fallthru
    _

// kernel: cvae_forward.4
$region0: #{cvae_forward.4}
  #allocation0 [shape = 'u32[]', space=smem, size = 0x4, offset = 0x4, fixed_abs, tag = 'smem constant byte address 0x4 - core index']
  #allocation1 [shape = 'u32[144,128]{1,0:T(1,128)}', space=vmem, size = 0x12000, scoped, tag = 'internal scratch']
  #allocation2 [shape = 'f32[64,512]{1,0:T(8,128)}', space=vmem, size = 0x20000, scoped, tag = 'scratch operand']
  #allocation3 [shape = 'f32[8,128]{1,0:T(8,128)}', space=vmem, size = 0x1000, scoped, tag = 'scratch operand']
  #allocation4 [shape = 'f32[8,128]{1,0:T(8,128)}', space=vmem, size = 0x1000, scoped, tag = 'scratch operand']
  %s0 = inlined_call_operand.vmem [shape: bf16[1,64,128], index: 0, kind: input, shape index: {}]
  %s1 = inlined_call_operand.vmem [shape: bf16[128,512], index: 1, kind: input, shape index: {}]
  %s2 = inlined_call_operand.vmem [shape: bf16[128,512], index: 2, kind: input, shape index: {}]
  %s3 = inlined_call_operand.vmem [shape: f32[1,512], index: 3, kind: input, shape index: {}]
  %s4 = inlined_call_operand.vmem [shape: bf16[1,64,128], index: 4, kind: output, shape index: {}]
  %s5 = sld [smem:[#allocation0]]
  $region30: #{cvae_forward.4} parent=0
    _
  %s7 = ssub.s32 1, %s5
  %s8 = scalar_select 0, %s7, %s5
  // Predicated region
  $region2: #{cvae_forward.4} parent=0 // pred_check
    _
  $region3: #{cvae_forward.4} parent=0 // pred_check_branch
    %10 = sbr.rel (0) target = $region5
  $region4: #{cvae_forward.4} parent=0 // pred_region
    _
  $region5: #{cvae_forward.4} parent=0 // pred_fallthru
    _
  // Predicated region
  $region6: #{cvae_forward.4} parent=0 // pred_check
    _
  $region7: #{cvae_forward.4} parent=0 // pred_check_branch
    %12 = sbr.rel (0) target = $region9
  $region8: #{cvae_forward.4} parent=0 // pred_region
    _
  $region9: #{cvae_forward.4} parent=0 // pred_fallthru
    _
  // Predicated region
  $region10: #{cvae_forward.4} parent=0 // pred_check
    _
  $region11: #{cvae_forward.4} parent=0 // pred_check_branch
    %14 = sbr.rel (0) target = $region13
  $region12: #{cvae_forward.4} parent=0 // pred_region
    _
  $region13: #{cvae_forward.4} parent=0 // pred_fallthru
    _
  // Predicated region
  $region14: #{cvae_forward.4} parent=0 // pred_check
    _
  $region15: #{cvae_forward.4} parent=0 // pred_check_branch
    %16 = sbr.rel (0) target = $region17
  $region16: #{cvae_forward.4} parent=0 // pred_region
    _
  $region17: #{cvae_forward.4} parent=0 // pred_fallthru
    _
  %p18 = scmp.eq.s32.totalorder 0, 0
  // Predicated region
  $region18: #{cvae_forward.4} parent=0 // pred_check
    %p19 = pneg %p18
  $region19: #{cvae_forward.4} parent=0 // pred_check_branch
    %21 = sbr.rel (%p19) target = $region21
  $region20: #{cvae_forward.4} parent=0 // pred_region
    %22 = vst [vmem:[#allocation3] sm:$0xff] 0.0
    %23 = vst [vmem:[#allocation4] sm:$0xff] 0.0
  $region21: #{cvae_forward.4} parent=0 // pred_fallthru
    _
  %v24 = vld [vmem:[%s0] sm:$0xf]
  %v25 = vld [vmem:[%s0 + $0x4] sm:$0xf]
  %v26 = vld [vmem:[%s0 + $0x8] sm:$0xf]
  %v27 = vld [vmem:[%s0 + $0xc] sm:$0xf]
  %v28 = vld [vmem:[%s0 + $0x10] sm:$0xf]
  %v29 = vld [vmem:[%s0 + $0x14] sm:$0xf]
  %v30 = vld [vmem:[%s0 + $0x18] sm:$0xf]
  %v31 = vld [vmem:[%s0 + $0x1c] sm:$0xf]
  %v32 = vld [vmem:[%s1] sm:$0xff]
  %v33 = vld [vmem:[%s1 + $0x8] sm:$0xff]
  %v34 = vld [vmem:[%s1 + $0x10] sm:$0xff]
  %v35 = vld [vmem:[%s1 + $0x18] sm:$0xff]
  %v36 = vld [vmem:[%s1 + $0x20] sm:$0xff]
  %v37 = vld [vmem:[%s1 + $0x28] sm:$0xff]
  %v38 = vld [vmem:[%s1 + $0x30] sm:$0xff]
  %v39 = vld [vmem:[%s1 + $0x38] sm:$0xff]
  %v40 = vld [vmem:[%s1 + $0x40] sm:$0xff]
  %v41 = vld [vmem:[%s1 + $0x48] sm:$0xff]
  %v42 = vld [vmem:[%s1 + $0x50] sm:$0xff]
  %v43 = vld [vmem:[%s1 + $0x58] sm:$0xff]
  %v44 = vld [vmem:[%s1 + $0x60] sm:$0xff]
  %v45 = vld [vmem:[%s1 + $0x68] sm:$0xff]
  %v46 = vld [vmem:[%s1 + $0x70] sm:$0xff]
  %v47 = vld [vmem:[%s1 + $0x78] sm:$0xff]
  %v48 = vld [vmem:[%s1 + $0x80] sm:$0xff]
  %v49 = vld [vmem:[%s1 + $0x88] sm:$0xff]
  %v50 = vld [vmem:[%s1 + $0x90] sm:$0xff]
  %v51 = vld [vmem:[%s1 + $0x98] sm:$0xff]
  %v52 = vld [vmem:[%s1 + $0xa0] sm:$0xff]
  %v53 = vld [vmem:[%s1 + $0xa8] sm:$0xff]
  %v54 = vld [vmem:[%s1 + $0xb0] sm:$0xff]
  %v55 = vld [vmem:[%s1 + $0xb8] sm:$0xff]
  %v56 = vld [vmem:[%s1 + $0xc0] sm:$0xff]
  %v57 = vld [vmem:[%s1 + $0xc8] sm:$0xff]
  %v58 = vld [vmem:[%s1 + $0xd0] sm:$0xff]
  %v59 = vld [vmem:[%s1 + $0xd8] sm:$0xff]
  %v60 = vld [vmem:[%s1 + $0xe0] sm:$0xff]
  %v61 = vld [vmem:[%s1 + $0xe8] sm:$0xff]
  %v62 = vld [vmem:[%s1 + $0xf0] sm:$0xff]
  %v63 = vld [vmem:[%s1 + $0xf8] sm:$0xff]
  %v64 = vld [vmem:[%s3] sm:$0xf]
  %v66 = vlaneseq
  %v67 = vshrl.u32 %v66, 7
  %v68 = vsub.s32 0, %v67
  %v69 = vrot.slane %v64, %v68
  %v70 = vlaneseq
  %v71 = vshrl.u32 %v70, 7
  %v72 = vsub.s32 1, %v71
  %v73 = vrot.slane %v64, %v72
  %v74 = vlaneseq
  %v75 = vshrl.u32 %v74, 7
  %v76 = vsub.s32 2, %v75
  %v77 = vrot.slane %v64, %v76
  %v78 = vlaneseq
  %v79 = vshrl.u32 %v78, 7
  %v80 = vsub.s32 3, %v79
  %v81 = vrot.slane %v64, %v80
  %v94 = vunpack.c.l.b16 %v24
  %v95 = vunpack.c.l.b16 %v25
  %v96 = vunpack.c.l.b16 %v26
  %v97 = vunpack.c.l.b16 %v27
  %v98 = vunpack.c.l.b16 %v28
  %v99 = vunpack.c.l.b16 %v29
  %v100 = vunpack.c.l.b16 %v30
  %v101 = vunpack.c.l.b16 %v31
  %v102 = vpack.c.b16 %v95, %v94
  %v103 = vpack.c.b16 %v97, %v96
  %v104 = vpack.c.b16 %v99, %v98
  %v105 = vpack.c.b16 %v101, %v100
  %v142 = vunpack.c.l.b16 %v32
  %v143 = vunpack.c.h.b16 %v32
  %v144 = vunpack.c.l.b16 %v33
  %v145 = vunpack.c.h.b16 %v33
  %v146 = vunpack.c.l.b16 %v34
  %v147 = vunpack.c.h.b16 %v34
  %v148 = vunpack.c.l.b16 %v35
  %v149 = vunpack.c.h.b16 %v35
  %v150 = vunpack.c.l.b16 %v36
  %v151 = vunpack.c.h.b16 %v36
  %v152 = vunpack.c.l.b16 %v37
  %v153 = vunpack.c.h.b16 %v37
  %v154 = vunpack.c.l.b16 %v38
  %v155 = vunpack.c.h.b16 %v38
  %v156 = vunpack.c.l.b16 %v39
  %v157 = vunpack.c.h.b16 %v39
  %v158 = vunpack.c.l.b16 %v40
  %v159 = vunpack.c.h.b16 %v40
  %v160 = vunpack.c.l.b16 %v41
  %v161 = vunpack.c.h.b16 %v41
  %v162 = vunpack.c.l.b16 %v42
  %v163 = vunpack.c.h.b16 %v42
  %v164 = vunpack.c.l.b16 %v43
  %v165 = vunpack.c.h.b16 %v43
  %v166 = vunpack.c.l.b16 %v44
  %v167 = vunpack.c.h.b16 %v44
  %v168 = vunpack.c.l.b16 %v45
  %v169 = vunpack.c.h.b16 %v45
  %v170 = vunpack.c.l.b16 %v46
  %v171 = vunpack.c.h.b16 %v46
  %v172 = vunpack.c.l.b16 %v47
  %v173 = vunpack.c.h.b16 %v47
  %v174 = vunpack.c.l.b16 %v48
  %v175 = vunpack.c.h.b16 %v48
  %v176 = vunpack.c.l.b16 %v49
  %v177 = vunpack.c.h.b16 %v49
  %v178 = vunpack.c.l.b16 %v50
  %v179 = vunpack.c.h.b16 %v50
  %v180 = vunpack.c.l.b16 %v51
  %v181 = vunpack.c.h.b16 %v51
  %v182 = vunpack.c.l.b16 %v52
  %v183 = vunpack.c.h.b16 %v52
  %v184 = vunpack.c.l.b16 %v53
  %v185 = vunpack.c.h.b16 %v53
  %v186 = vunpack.c.l.b16 %v54
  %v187 = vunpack.c.h.b16 %v54
  %v188 = vunpack.c.l.b16 %v55
  %v189 = vunpack.c.h.b16 %v55
  %v190 = vunpack.c.l.b16 %v56
  %v191 = vunpack.c.h.b16 %v56
  %v192 = vunpack.c.l.b16 %v57
  %v193 = vunpack.c.h.b16 %v57
  %v194 = vunpack.c.l.b16 %v58
  %v195 = vunpack.c.h.b16 %v58
  %v196 = vunpack.c.l.b16 %v59
  %v197 = vunpack.c.h.b16 %v59
  %v198 = vunpack.c.l.b16 %v60
  %v199 = vunpack.c.h.b16 %v60
  %v200 = vunpack.c.l.b16 %v61
  %v201 = vunpack.c.h.b16 %v61
  %v202 = vunpack.c.l.b16 %v62
  %v203 = vunpack.c.h.b16 %v62
  %v204 = vunpack.c.l.b16 %v63
  %v205 = vunpack.c.h.b16 %v63
  %v206 = vpack.c.b16 %v146, %v142
  %v207 = vpack.c.b16 %v147, %v143
  %v208 = vpack.c.b16 %v148, %v144
  %v209 = vpack.c.b16 %v149, %v145
  %v210 = vpack.c.b16 %v154, %v150
  %v211 = vpack.c.b16 %v155, %v151
  %v212 = vpack.c.b16 %v156, %v152
  %v213 = vpack.c.b16 %v157, %v153
  %v214 = vpack.c.b16 %v162, %v158
  %v215 = vpack.c.b16 %v163, %v159
  %v216 = vpack.c.b16 %v164, %v160
  %v217 = vpack.c.b16 %v165, %v161
  %v218 = vpack.c.b16 %v170, %v166
  %v219 = vpack.c.b16 %v171, %v167
  %v220 = vpack.c.b16 %v172, %v168
  %v221 = vpack.c.b16 %v173, %v169
  %v222 = vpack.c.b16 %v178, %v174
  %v223 = vpack.c.b16 %v179, %v175
  %v224 = vpack.c.b16 %v180, %v176
  %v225 = vpack.c.b16 %v181, %v177
  %v226 = vpack.c.b16 %v186, %v182
  %v227 = vpack.c.b16 %v187, %v183
  %v228 = vpack.c.b16 %v188, %v184
  %v229 = vpack.c.b16 %v189, %v185
  %v230 = vpack.c.b16 %v194, %v190
  %v231 = vpack.c.b16 %v195, %v191
  %v232 = vpack.c.b16 %v196, %v192
  %v233 = vpack.c.b16 %v197, %v193
  %v234 = vpack.c.b16 %v202, %v198
  %v235 = vpack.c.b16 %v203, %v199
  %v236 = vpack.c.b16 %v204, %v200
  %v237 = vpack.c.b16 %v205, %v201
  %270 = vmatprep.subr.bf16.mxu0 %v207
  %271 = vmatpush1.bf16.msra.mxu0 %v206
  %272 = vmatprep.subr.bf16.mxu0 %v211
  %273 = vmatpush1.bf16.msra.mxu0 %v210
  %274 = vmatprep.subr.bf16.mxu0 %v215
  %275 = vmatpush1.bf16.msra.mxu0 %v214
  %276 = vmatprep.subr.bf16.mxu0 %v219
  %277 = vmatpush1.bf16.msra.mxu0 %v218
  %278 = vmatprep.subr.bf16.mxu0 %v223
  %279 = vmatpush1.bf16.msra.mxu0 %v222
  %280 = vmatprep.subr.bf16.mxu0 %v227
  %281 = vmatpush1.bf16.msra.mxu0 %v226
  %282 = vmatprep.subr.bf16.mxu0 %v231
  %283 = vmatpush1.bf16.msra.mxu0 %v230
  %284 = vmatprep.subr.bf16.mxu0 %v235
  %285 = vmatpush1.bf16.msra.mxu0 %v234
  %286 = vmatprep.subr.bf16.mxu0 0
  %287 = vmatpush1.bf16.msra.mxu0 0
  %288 = vmatprep.subr.bf16.mxu0 0
  %289 = vmatpush1.bf16.msra.mxu0 0
  %290 = vmatprep.subr.bf16.mxu0 0
  %291 = vmatpush1.bf16.msra.mxu0 0
  %292 = vmatprep.subr.bf16.mxu0 0
  %293 = vmatpush1.bf16.msra.mxu0 0
  %294 = vmatprep.subr.bf16.mxu0 0
  %295 = vmatpush1.bf16.msra.mxu0 0
  %296 = vmatprep.subr.bf16.mxu0 0
  %297 = vmatpush1.bf16.msra.mxu0 0
  %298 = vmatprep.subr.bf16.mxu0 0
  %299 = vmatpush1.bf16.msra.mxu0 0
  %300 = vmatprep.subr.bf16.mxu0 0
  %301 = vmatpush1.bf16.msra.mxu0 0
  %302 = vmatprep.mubr.bf16.mxu0 0
  %303 = vmatmul.mubr.bf16.gmra.mrb[0].mxu0 %v102
  %v304 = vpop.f32.mrb[0].mxu0
  %v305 = vadd.f32 %v69, %v304
  %v306 = vpop.f32.mrb[0].mxu0
  %v307 = vadd.f32 %v73, %v306
  %v308 = vpop.f32.mrb[0].mxu0
  %v309 = vadd.f32 %v69, %v308
  %v310 = vpop.f32.mrb[0].mxu0
  %v311 = vadd.f32 %v73, %v310
  %312 = vmatprep.mubr.bf16.mxu0 0
  %313 = vmatmul.mubr.bf16.gmra.mrb[0].mxu0 %v103
  %v314 = vpop.f32.mrb[0].mxu0
  %v315 = vadd.f32 %v69, %v314
  %v316 = vpop.f32.mrb[0].mxu0
  %v317 = vadd.f32 %v73, %v316
  %v318 = vpop.f32.mrb[0].mxu0
  %v319 = vadd.f32 %v69, %v318
  %v320 = vpop.f32.mrb[0].mxu0
  %v321 = vadd.f32 %v73, %v320
  %322 = vmatprep.mubr.bf16.mxu0 0
  %323 = vmatmul.mubr.bf16.gmra.mrb[0].mxu0 %v104
  %v324 = vpop.f32.mrb[0].mxu0
  %v325 = vadd.f32 %v69, %v324
  %v326 = vpop.f32.mrb[0].mxu0
  %v327 = vadd.f32 %v73, %v326
  %v328 = vpop.f32.mrb[0].mxu0
  %v329 = vadd.f32 %v69, %v328
  %v330 = vpop.f32.mrb[0].mxu0
  %v331 = vadd.f32 %v73, %v330
  %332 = vmatprep.mubr.bf16.mxu0 0
  %333 = vmatmul.mubr.bf16.gmra.mrb[0].mxu0 %v105
  %v334 = vpop.f32.mrb[0].mxu0
  %v335 = vadd.f32 %v69, %v334
  %v336 = vpop.f32.mrb[0].mxu0
  %v337 = vadd.f32 %v73, %v336
  %v338 = vpop.f32.mrb[0].mxu0
  %v339 = vadd.f32 %v69, %v338
  %v340 = vpop.f32.mrb[0].mxu0
  %v341 = vadd.f32 %v73, %v340
  %342 = vdwg.mxu0
  %343 = vmatprep.subr.bf16.mxu0 %v209
  %344 = vmatpush1.bf16.msra.mxu0 %v208
  %345 = vmatprep.subr.bf16.mxu0 %v213
  %346 = vmatpush1.bf16.msra.mxu0 %v212
  %347 = vmatprep.subr.bf16.mxu0 %v217
  %348 = vmatpush1.bf16.msra.mxu0 %v216
  %349 = vmatprep.subr.bf16.mxu0 %v221
  %350 = vmatpush1.bf16.msra.mxu0 %v220
  %351 = vmatprep.subr.bf16.mxu0 %v225
  %352 = vmatpush1.bf16.msra.mxu0 %v224
  %353 = vmatprep.subr.bf16.mxu0 %v229
  %354 = vmatpush1.bf16.msra.mxu0 %v228
  %355 = vmatprep.subr.bf16.mxu0 %v233
  %356 = vmatpush1.bf16.msra.mxu0 %v232
  %357 = vmatprep.subr.bf16.mxu0 %v237
  %358 = vmatpush1.bf16.msra.mxu0 %v236
  %359 = vmatprep.subr.bf16.mxu0 0
  %360 = vmatpush1.bf16.msra.mxu0 0
  %361 = vmatprep.subr.bf16.mxu0 0
  %362 = vmatpush1.bf16.msra.mxu0 0
  %363 = vmatprep.subr.bf16.mxu0 0
  %364 = vmatpush1.bf16.msra.mxu0 0
  %365 = vmatprep.subr.bf16.mxu0 0
  %366 = vmatpush1.bf16.msra.mxu0 0
  %367 = vmatprep.subr.bf16.mxu0 0
  %368 = vmatpush1.bf16.msra.mxu0 0
  %369 = vmatprep.subr.bf16.mxu0 0
  %370 = vmatpush1.bf16.msra.mxu0 0
  %371 = vmatprep.subr.bf16.mxu0 0
  %372 = vmatpush1.bf16.msra.mxu0 0
  %373 = vmatprep.subr.bf16.mxu0 0
  %374 = vmatpush1.bf16.msra.mxu0 0
  %375 = vmatprep.mubr.bf16.mxu0 0
  %376 = vmatmul.mubr.bf16.gmra.mrb[0].mxu0 %v102
  %v377 = vpop.f32.mrb[0].mxu0
  %v378 = vadd.f32 %v77, %v377
  %v379 = vpop.f32.mrb[0].mxu0
  %v380 = vadd.f32 %v81, %v379
  %v381 = vpop.f32.mrb[0].mxu0
  %v382 = vadd.f32 %v77, %v381
  %v383 = vpop.f32.mrb[0].mxu0
  %v384 = vadd.f32 %v81, %v383
  %385 = vmatprep.mubr.bf16.mxu0 0
  %386 = vmatmul.mubr.bf16.gmra.mrb[0].mxu0 %v103
  %v387 = vpop.f32.mrb[0].mxu0
  %v388 = vadd.f32 %v77, %v387
  %v389 = vpop.f32.mrb[0].mxu0
  %v390 = vadd.f32 %v81, %v389
  %v391 = vpop.f32.mrb[0].mxu0
  %v392 = vadd.f32 %v77, %v391
  %v393 = vpop.f32.mrb[0].mxu0
  %v394 = vadd.f32 %v81, %v393
  %395 = vmatprep.mubr.bf16.mxu0 0
  %396 = vmatmul.mubr.bf16.gmra.mrb[0].mxu0 %v104
  %v397 = vpop.f32.mrb[0].mxu0
  %v398 = vadd.f32 %v77, %v397
  %v399 = vpop.f32.mrb[0].mxu0
  %v400 = vadd.f32 %v81, %v399
  %v401 = vpop.f32.mrb[0].mxu0
  %v402 = vadd.f32 %v77, %v401
  %v403 = vpop.f32.mrb[0].mxu0
  %v404 = vadd.f32 %v81, %v403
  %405 = vmatprep.mubr.bf16.mxu0 0
  %406 = vmatmul.mubr.bf16.gmra.mrb[0].mxu0 %v105
  %v407 = vpop.f32.mrb[0].mxu0
  %v408 = vadd.f32 %v77, %v407
  %v409 = vpop.f32.mrb[0].mxu0
  %v410 = vadd.f32 %v81, %v409
  %v411 = vpop.f32.mrb[0].mxu0
  %v412 = vadd.f32 %v77, %v411
  %v413 = vpop.f32.mrb[0].mxu0
  %v414 = vadd.f32 %v81, %v413
  %415 = vdwg.mxu0
  %416 = vst [vmem:[#allocation2] sm:$0xff] %v305
  %417 = vst [vmem:[#allocation2 + $0x8] sm:$0xff] %v307
  %418 = vst [vmem:[#allocation2 + $0x10] sm:$0xff] %v378
  %419 = vst [vmem:[#allocation2 + $0x18] sm:$0xff] %v380
  %420 = vst [vmem:[#allocation2 + $0x20] sm:$0xff] %v309
  %421 = vst [vmem:[#allocation2 + $0x28] sm:$0xff] %v311
  %422 = vst [vmem:[#allocation2 + $0x30] sm:$0xff] %v382
  %423 = vst [vmem:[#allocation2 + $0x38] sm:$0xff] %v384
  %424 = vst [vmem:[#allocation2 + $0x40] sm:$0xff] %v315
  %425 = vst [vmem:[#allocation2 + $0x48] sm:$0xff] %v317
  %426 = vst [vmem:[#allocation2 + $0x50] sm:$0xff] %v388
  %427 = vst [vmem:[#allocation2 + $0x58] sm:$0xff] %v390
  %428 = vst [vmem:[#allocation2 + $0x60] sm:$0xff] %v319
  %429 = vst [vmem:[#allocation2 + $0x68] sm:$0xff] %v321
  %430 = vst [vmem:[#allocation2 + $0x70] sm:$0xff] %v392
  %431 = vst [vmem:[#allocation2 + $0x78] sm:$0xff] %v394
  %432 = vst [vmem:[#allocation2 + $0x80] sm:$0xff] %v325
  %433 = vst [vmem:[#allocation2 + $0x88] sm:$0xff] %v327
  %434 = vst [vmem:[#allocation2 + $0x90] sm:$0xff] %v398
  %435 = vst [vmem:[#allocation2 + $0x98] sm:$0xff] %v400
  %436 = vst [vmem:[#allocation2 + $0xa0] sm:$0xff] %v329
  %437 = vst [vmem:[#allocation2 + $0xa8] sm:$0xff] %v331
  %438 = vst [vmem:[#allocation2 + $0xb0] sm:$0xff] %v402
  %439 = vst [vmem:[#allocation2 + $0xb8] sm:$0xff] %v404
  %440 = vst [vmem:[#allocation2 + $0xc0] sm:$0xff] %v335
  %441 = vst [vmem:[#allocation2 + $0xc8] sm:$0xff] %v337
  %442 = vst [vmem:[#allocation2 + $0xd0] sm:$0xff] %v408
  %443 = vst [vmem:[#allocation2 + $0xd8] sm:$0xff] %v410
  %444 = vst [vmem:[#allocation2 + $0xe0] sm:$0xff] %v339
  %445 = vst [vmem:[#allocation2 + $0xe8] sm:$0xff] %v341
  %446 = vst [vmem:[#allocation2 + $0xf0] sm:$0xff] %v412
  %447 = vst [vmem:[#allocation2 + $0xf8] sm:$0xff] %v414
  %v448 = vld [vmem:[%s2] sm:$0xff]
  %v449 = vld [vmem:[%s2 + $0x8] sm:$0xff]
  %v450 = vld [vmem:[%s2 + $0x10] sm:$0xff]
  %v451 = vld [vmem:[%s2 + $0x18] sm:$0xff]
  %v452 = vld [vmem:[%s2 + $0x20] sm:$0xff]
  %v453 = vld [vmem:[%s2 + $0x28] sm:$0xff]
  %v454 = vld [vmem:[%s2 + $0x30] sm:$0xff]
  %v455 = vld [vmem:[%s2 + $0x38] sm:$0xff]
  %v456 = vld [vmem:[%s2 + $0x40] sm:$0xff]
  %v457 = vld [vmem:[%s2 + $0x48] sm:$0xff]
  %v458 = vld [vmem:[%s2 + $0x50] sm:$0xff]
  %v459 = vld [vmem:[%s2 + $0x58] sm:$0xff]
  %v460 = vld [vmem:[%s2 + $0x60] sm:$0xff]
  %v461 = vld [vmem:[%s2 + $0x68] sm:$0xff]
  %v462 = vld [vmem:[%s2 + $0x70] sm:$0xff]
  %v463 = vld [vmem:[%s2 + $0x78] sm:$0xff]
  %v464 = vld [vmem:[%s2 + $0x80] sm:$0xff]
  %v465 = vld [vmem:[%s2 + $0x88] sm:$0xff]
  %v466 = vld [vmem:[%s2 + $0x90] sm:$0xff]
  %v467 = vld [vmem:[%s2 + $0x98] sm:$0xff]
  %v468 = vld [vmem:[%s2 + $0xa0] sm:$0xff]
  %v469 = vld [vmem:[%s2 + $0xa8] sm:$0xff]
  %v470 = vld [vmem:[%s2 + $0xb0] sm:$0xff]
  %v471 = vld [vmem:[%s2 + $0xb8] sm:$0xff]
  %v472 = vld [vmem:[%s2 + $0xc0] sm:$0xff]
  %v473 = vld [vmem:[%s2 + $0xc8] sm:$0xff]
  %v474 = vld [vmem:[%s2 + $0xd0] sm:$0xff]
  %v475 = vld [vmem:[%s2 + $0xd8] sm:$0xff]
  %v476 = vld [vmem:[%s2 + $0xe0] sm:$0xff]
  %v477 = vld [vmem:[%s2 + $0xe8] sm:$0xff]
  %v478 = vld [vmem:[%s2 + $0xf0] sm:$0xff]
  %v479 = vld [vmem:[%s2 + $0xf8] sm:$0xff]
  %v480 = vld [vmem:[#allocation3] sm:$0xff]
  %v481 = vld [vmem:[#allocation4] sm:$0xff]
  %v482 = vpack.c.bf16 %v480, %v480
  %v515 = vunpack.c.l.b16 %v448
  %v516 = vunpack.c.h.b16 %v448
  %v517 = vunpack.c.l.b16 %v449
  %v518 = vunpack.c.h.b16 %v449
  %v519 = vunpack.c.l.b16 %v450
  %v520 = vunpack.c.h.b16 %v450
  %v521 = vunpack.c.l.b16 %v451
  %v522 = vunpack.c.h.b16 %v451
  %v523 = vunpack.c.l.b16 %v452
  %v524 = vunpack.c.h.b16 %v452
  %v525 = vunpack.c.l.b16 %v453
  %v526 = vunpack.c.h.b16 %v453
  %v527 = vunpack.c.l.b16 %v454
  %v528 = vunpack.c.h.b16 %v454
  %v529 = vunpack.c.l.b16 %v455
  %v530 = vunpack.c.h.b16 %v455
  %v531 = vunpack.c.l.b16 %v456
  %v532 = vunpack.c.h.b16 %v456
  %v533 = vunpack.c.l.b16 %v457
  %v534 = vunpack.c.h.b16 %v457
  %v535 = vunpack.c.l.b16 %v458
  %v536 = vunpack.c.h.b16 %v458
  %v537 = vunpack.c.l.b16 %v459
  %v538 = vunpack.c.h.b16 %v459
  %v539 = vunpack.c.l.b16 %v460
  %v540 = vunpack.c.h.b16 %v460
  %v541 = vunpack.c.l.b16 %v461
  %v542 = vunpack.c.h.b16 %v461
  %v543 = vunpack.c.l.b16 %v462
  %v544 = vunpack.c.h.b16 %v462
  %v545 = vunpack.c.l.b16 %v463
  %v546 = vunpack.c.h.b16 %v463
  %v547 = vunpack.c.l.b16 %v464
  %v548 = vunpack.c.h.b16 %v464
  %v549 = vunpack.c.l.b16 %v465
  %v550 = vunpack.c.h.b16 %v465
  %v551 = vunpack.c.l.b16 %v466
  %v552 = vunpack.c.h.b16 %v466
  %v553 = vunpack.c.l.b16 %v467
  %v554 = vunpack.c.h.b16 %v467
  %v555 = vunpack.c.l.b16 %v468
  %v556 = vunpack.c.h.b16 %v468
  %v557 = vunpack.c.l.b16 %v469
  %v558 = vunpack.c.h.b16 %v469
  %v559 = vunpack.c.l.b16 %v470
  %v560 = vunpack.c.h.b16 %v470
  %v561 = vunpack.c.l.b16 %v471
  %v562 = vunpack.c.h.b16 %v471
  %v563 = vunpack.c.l.b16 %v472
  %v564 = vunpack.c.h.b16 %v472
  %v565 = vunpack.c.l.b16 %v473
  %v566 = vunpack.c.h.b16 %v473
  %v567 = vunpack.c.l.b16 %v474
  %v568 = vunpack.c.h.b16 %v474
  %v569 = vunpack.c.l.b16 %v475
  %v570 = vunpack.c.h.b16 %v475
  %v571 = vunpack.c.l.b16 %v476
  %v572 = vunpack.c.h.b16 %v476
  %v573 = vunpack.c.l.b16 %v477
  %v574 = vunpack.c.h.b16 %v477
  %v575 = vunpack.c.l.b16 %v478
  %v576 = vunpack.c.h.b16 %v478
  %v577 = vunpack.c.l.b16 %v479
  %v578 = vunpack.c.h.b16 %v479
  %v579 = vpack.c.b16 %v519, %v515
  %v580 = vpack.c.b16 %v520, %v516
  %v581 = vpack.c.b16 %v521, %v517
  %v582 = vpack.c.b16 %v522, %v518
  %v583 = vpack.c.b16 %v527, %v523
  %v584 = vpack.c.b16 %v528, %v524
  %v585 = vpack.c.b16 %v529, %v525
  %v586 = vpack.c.b16 %v530, %v526
  %v587 = vpack.c.b16 %v535, %v531
  %v588 = vpack.c.b16 %v536, %v532
  %v589 = vpack.c.b16 %v537, %v533
  %v590 = vpack.c.b16 %v538, %v534
  %v591 = vpack.c.b16 %v543, %v539
  %v592 = vpack.c.b16 %v544, %v540
  %v593 = vpack.c.b16 %v545, %v541
  %v594 = vpack.c.b16 %v546, %v542
  %v595 = vpack.c.b16 %v551, %v547
  %v596 = vpack.c.b16 %v552, %v548
  %v597 = vpack.c.b16 %v553, %v549
  %v598 = vpack.c.b16 %v554, %v550
  %v599 = vpack.c.b16 %v559, %v555
  %v600 = vpack.c.b16 %v560, %v556
  %v601 = vpack.c.b16 %v561, %v557
  %v602 = vpack.c.b16 %v562, %v558
  %v603 = vpack.c.b16 %v567, %v563
  %v604 = vpack.c.b16 %v568, %v564
  %v605 = vpack.c.b16 %v569, %v565
  %v606 = vpack.c.b16 %v570, %v566
  %v607 = vpack.c.b16 %v575, %v571
  %v608 = vpack.c.b16 %v576, %v572
  %v609 = vpack.c.b16 %v577, %v573
  %v610 = vpack.c.b16 %v578, %v574
  %643 = vmatprep.subr.bf16.mxu0 %v580
  %644 = vmatpush1.bf16.msra.mxu0 %v579
  %645 = vmatprep.subr.bf16.mxu0 %v584
  %646 = vmatpush1.bf16.msra.mxu0 %v583
  %647 = vmatprep.subr.bf16.mxu0 %v588
  %648 = vmatpush1.bf16.msra.mxu0 %v587
  %649 = vmatprep.subr.bf16.mxu0 %v592
  %650 = vmatpush1.bf16.msra.mxu0 %v591
  %651 = vmatprep.subr.bf16.mxu0 %v596
  %652 = vmatpush1.bf16.msra.mxu0 %v595
  %653 = vmatprep.subr.bf16.mxu0 %v600
  %654 = vmatpush1.bf16.msra.mxu0 %v599
  %655 = vmatprep.subr.bf16.mxu0 %v604
  %656 = vmatpush1.bf16.msra.mxu0 %v603
  %657 = vmatprep.subr.bf16.mxu0 %v608
  %658 = vmatpush1.bf16.msra.mxu0 %v607
  %659 = vmatprep.subr.bf16.mxu0 0
  %660 = vmatpush1.bf16.msra.mxu0 0
  %661 = vmatprep.subr.bf16.mxu0 0
  %662 = vmatpush1.bf16.msra.mxu0 0
  %663 = vmatprep.subr.bf16.mxu0 0
  %664 = vmatpush1.bf16.msra.mxu0 0
  %665 = vmatprep.subr.bf16.mxu0 0
  %666 = vmatpush1.bf16.msra.mxu0 0
  %667 = vmatprep.subr.bf16.mxu0 0
  %668 = vmatpush1.bf16.msra.mxu0 0
  %669 = vmatprep.subr.bf16.mxu0 0
  %670 = vmatpush1.bf16.msra.mxu0 0
  %671 = vmatprep.subr.bf16.mxu0 0
  %672 = vmatpush1.bf16.msra.mxu0 0
  %673 = vmatprep.subr.bf16.mxu0 0
  %674 = vmatpush1.bf16.msra.mxu0 0
  %675 = vmatprep.mubr.bf16.mxu0 0
  %676 = vmatmul.mubr.bf16.gmra.mrb[0].mxu0 %v482
  %v677 = vpop.f32.mrb[0].mxu0
  %v678 = vadd.f32 0.0, %v677
  %v679 = vpop.f32.mrb[0].mxu0
  %v680 = vadd.f32 0.0, %v679
  %v681 = vpop.f32.mrb[0].mxu0
  %v682 = vpop.f32.mrb[0].mxu0
  %683 = vdwg.mxu0
  %684 = vmatprep.subr.bf16.mxu0 %v582
  %685 = vmatpush1.bf16.msra.mxu0 %v581
  %686 = vmatprep.subr.bf16.mxu0 %v586
  %687 = vmatpush1.bf16.msra.mxu0 %v585
  %688 = vmatprep.subr.bf16.mxu0 %v590
  %689 = vmatpush1.bf16.msra.mxu0 %v589
  %690 = vmatprep.subr.bf16.mxu0 %v594
  %691 = vmatpush1.bf16.msra.mxu0 %v593
  %692 = vmatprep.subr.bf16.mxu0 %v598
  %693 = vmatpush1.bf16.msra.mxu0 %v597
  %694 = vmatprep.subr.bf16.mxu0 %v602
  %695 = vmatpush1.bf16.msra.mxu0 %v601
  %696 = vmatprep.subr.bf16.mxu0 %v606
  %697 = vmatpush1.bf16.msra.mxu0 %v605
  %698 = vmatprep.subr.bf16.mxu0 %v610
  %699 = vmatpush1.bf16.msra.mxu0 %v609
  %700 = vmatprep.subr.bf16.mxu0 0
  %701 = vmatpush1.bf16.msra.mxu0 0
  %702 = vmatprep.subr.bf16.mxu0 0
  %703 = vmatpush1.bf16.msra.mxu0 0
  %704 = vmatprep.subr.bf16.mxu0 0
  %705 = vmatpush1.bf16.msra.mxu0 0
  %706 = vmatprep.subr.bf16.mxu0 0
  %707 = vmatpush1.bf16.msra.mxu0 0
  %708 = vmatprep.subr.bf16.mxu0 0
  %709 = vmatpush1.bf16.msra.mxu0 0
  %710 = vmatprep.subr.bf16.mxu0 0
  %711 = vmatpush1.bf16.msra.mxu0 0
  %712 = vmatprep.subr.bf16.mxu0 0
  %713 = vmatpush1.bf16.msra.mxu0 0
  %714 = vmatprep.subr.bf16.mxu0 0
  %715 = vmatpush1.bf16.msra.mxu0 0
  %716 = vmatprep.mubr.bf16.mxu0 0
  %717 = vmatmul.mubr.bf16.gmra.mrb[0].mxu0 %v482
  %v718 = vpop.f32.mrb[0].mxu0
  %v719 = vadd.f32 0.0, %v718
  %v720 = vpop.f32.mrb[0].mxu0
  %v721 = vadd.f32 0.0, %v720
  %v722 = vpop.f32.mrb[0].mxu0
  %v723 = vpop.f32.mrb[0].mxu0
  %724 = vdwg.mxu0
  %s725 = smul.u32 0, 4
  %s726 = smul.addr %s725, 8
  %s727 = scalar_lea.vmem [#allocation2], %s726
  %v728 = vld [vmem:[%s727] sm:$0xff]
  %v729 = vld [vmem:[%s727 + $0x8] sm:$0xff]
  %v730 = vld [vmem:[%s727 + $0x10] sm:$0xff]
  %v731 = vld [vmem:[%s727 + $0x18] sm:$0xff]
  %v732 = vadd.f32 %v728, %v678
  %v733 = vadd.f32 %v729, %v680
  %v734 = vadd.f32 %v730, %v719
  %v735 = vadd.f32 %v731, %v721
  %v736 = vxor.u32 %v732, 2147483648
  %v737 = vxor.u32 %v733, 2147483648
  %v738 = vxor.u32 %v734, 2147483648
  %v739 = vmul.f32 %v736, 1.442695
  %v740 = vpow.pop %v739
  %v741 = vmul.f32 %v737, 1.442695
  %v742 = vpow.pop %v741
  %v743 = vmul.f32 %v738, 1.442695
  %v744 = vpow.pop %v743
  %v745 = vadd.f32 %v740, 1.0
  %v746 = vadd.f32 %v742, 1.0
  %v747 = vadd.f32 %v744, 1.0
  %v748 = vrcp.pop %v745
  %v749 = vmul.f32 1.0, %v748
  %v750 = vrcp.pop %v746
  %v751 = vmul.f32 1.0, %v750
  %v752 = vrcp.pop %v747
  %v753 = vmul.f32 1.0, %v752
  %v754 = vtanh.pop %v735
  %v755 = vmul.f32 %v751, %v481
  %v756 = vmul.f32 %v749, %v754
  %v757 = vadd.f32 %v755, %v756
  %v758 = vtanh.pop %v757
  %v759 = vmul.f32 %v753, %v758
  %v760 = vpack.c.bf16 %v759, %v759
  %761 = vst [vmem:[%s4] sm:$0xf] %v760
  %762 = vmatprep.subr.bf16.mxu0 %v580
  %763 = vmatpush1.bf16.msra.mxu0 %v579
  %764 = vmatprep.subr.bf16.mxu0 %v584
  %765 = vmatpush1.bf16.msra.mxu0 %v583
  %766 = vmatprep.subr.bf16.mxu0 %v588
  %767 = vmatpush1.bf16.msra.mxu0 %v587
  %768 = vmatprep.subr.bf16.mxu0 %v592
  %769 = vmatpush1.bf16.msra.mxu0 %v591
  %770 = vmatprep.subr.bf16.mxu0 %v596
  %771 = vmatpush1.bf16.msra.mxu0 %v595
  %772 = vmatprep.subr.bf16.mxu0 %v600
  %773 = vmatpush1.bf16.msra.mxu0 %v599
  %774 = vmatprep.subr.bf16.mxu0 %v604
  %775 = vmatpush1.bf16.msra.mxu0 %v603
  %776 = vmatprep.subr.bf16.mxu0 %v608
  %777 = vmatpush1.bf16.msra.mxu0 %v607
  %778 = vmatprep.subr.bf16.mxu0 0
  %779 = vmatpush1.bf16.msra.mxu0 0
  %780 = vmatprep.subr.bf16.mxu0 0
  %781 = vmatpush1.bf16.msra.mxu0 0
  %782 = vmatprep.subr.bf16.mxu0 0
  %783 = vmatpush1.bf16.msra.mxu0 0
  %784 = vmatprep.subr.bf16.mxu0 0
  %785 = vmatpush1.bf16.msra.mxu0 0
  %786 = vmatprep.subr.bf16.mxu0 0
  %787 = vmatpush1.bf16.msra.mxu0 0
  %788 = vmatprep.subr.bf16.mxu0 0
  %789 = vmatpush1.bf16.msra.mxu0 0
  %790 = vmatprep.subr.bf16.mxu0 0
  %791 = vmatpush1.bf16.msra.mxu0 0
  %792 = vmatprep.subr.bf16.mxu0 0
  %793 = vmatpush1.bf16.msra.mxu0 0
  %794 = vmatprep.mubr.bf16.mxu0 0
  %795 = vmatmul.mubr.bf16.gmra.mrb[0].mxu0 %v760
  %v796 = vpop.f32.mrb[0].mxu0
  %v797 = vadd.f32 0.0, %v796
  %v798 = vpop.f32.mrb[0].mxu0
  %v799 = vadd.f32 0.0, %v798
  %v800 = vpop.f32.mrb[0].mxu0
  %v801 = vpop.f32.mrb[0].mxu0
  %802 = vdwg.mxu0
  %803 = vmatprep.subr.bf16.mxu0 %v582
  %804 = vmatpush1.bf16.msra.mxu0 %v581
  %805 = vmatprep.subr.bf16.mxu0 %v586
  %806 = vmatpush1.bf16.msra.mxu0 %v585
  %807 = vmatprep.subr.bf16.mxu0 %v590
  %808 = vmatpush1.bf16.msra.mxu0 %v589
  %809 = vmatprep.subr.bf16.mxu0 %v594
  %810 = vmatpush1.bf16.msra.mxu0 %v593
  %811 = vmatprep.subr.bf16.mxu0 %v598
  %812 = vmatpush1.bf16.msra.mxu0 %v597
  %813 = vmatprep.subr.bf16.mxu0 %v602
  %814 = vmatpush1.bf16.msra.mxu0 %v601
  %815 = vmatprep.subr.bf16.mxu0 %v606
  %816 = vmatpush1.bf16.msra.mxu0 %v605
  %817 = vmatprep.subr.bf16.mxu0 %v610
  %818 = vmatpush1.bf16.msra.mxu0 %v609
  %819 = vmatprep.subr.bf16.mxu0 0
  %820 = vmatpush1.bf16.msra.mxu0 0
  %821 = vmatprep.subr.bf16.mxu0 0
  %822 = vmatpush1.bf16.msra.mxu0 0
  %823 = vmatprep.subr.bf16.mxu0 0
  %824 = vmatpush1.bf16.msra.mxu0 0
  %825 = vmatprep.subr.bf16.mxu0 0
  %826 = vmatpush1.bf16.msra.mxu0 0
  %827 = vmatprep.subr.bf16.mxu0 0
  %828 = vmatpush1.bf16.msra.mxu0 0
  %829 = vmatprep.subr.bf16.mxu0 0
  %830 = vmatpush1.bf16.msra.mxu0 0
  %831 = vmatprep.subr.bf16.mxu0 0
  %832 = vmatpush1.bf16.msra.mxu0 0
  %833 = vmatprep.subr.bf16.mxu0 0
  %834 = vmatpush1.bf16.msra.mxu0 0
  %835 = vmatprep.mubr.bf16.mxu0 0
  %836 = vmatmul.mubr.bf16.gmra.mrb[0].mxu0 %v760
  %v837 = vpop.f32.mrb[0].mxu0
  %v838 = vadd.f32 0.0, %v837
  %v839 = vpop.f32.mrb[0].mxu0
  %v840 = vadd.f32 0.0, %v839
  %v841 = vpop.f32.mrb[0].mxu0
  %v842 = vpop.f32.mrb[0].mxu0
  %843 = vdwg.mxu0
  %s844 = smul.u32 1, 4
  %s845 = smul.addr %s844, 8
  %s846 = scalar_lea.vmem [#allocation2], %s845
  %v847 = vld [vmem:[%s846] sm:$0xff]
  %v848 = vld [vmem:[%s846 + $0x8] sm:$0xff]
  %v849 = vld [vmem:[%s846 + $0x10] sm:$0xff]
  %v850 = vld [vmem:[%s846 + $0x18] sm:$0xff]
  %v851 = vadd.f32 %v847, %v797
  %v852 = vadd.f32 %v848, %v799
  %v853 = vadd.f32 %v849, %v838
  %v854 = vadd.f32 %v850, %v840
  %v855 = vxor.u32 %v851, 2147483648
  %v856 = vxor.u32 %v852, 2147483648
  %v857 = vxor.u32 %v853, 2147483648
  %v858 = vmul.f32 %v855, 1.442695
  %v859 = vpow.pop %v858
  %v860 = vmul.f32 %v856, 1.442695
  %v861 = vpow.pop %v860
  %v862 = vmul.f32 %v857, 1.442695
  %v863 = vpow.pop %v862
  %v864 = vadd.f32 %v859, 1.0
  %v865 = vadd.f32 %v861, 1.0
  %v866 = vadd.f32 %v863, 1.0
  %v867 = vrcp.pop %v864
  %v868 = vmul.f32 1.0, %v867
  %v869 = vrcp.pop %v865
  %v870 = vmul.f32 1.0, %v869
  %v871 = vrcp.pop %v866
  %v872 = vmul.f32 1.0, %v871
  %v873 = vtanh.pop %v854
  %v874 = vmul.f32 %v870, %v757
  %v875 = vmul.f32 %v868, %v873
  %v876 = vadd.f32 %v874, %v875
  %v877 = vtanh.pop %v876
  %v878 = vmul.f32 %v872, %v877
  %v879 = vpack.c.bf16 %v878, %v878
  %s880 = scalar_lea.vmem %s4, 4
  %881 = vst [vmem:[%s880] sm:$0xf] %v879
  %882 = vmatprep.subr.bf16.mxu0 %v580
  %883 = vmatpush1.bf16.msra.mxu0 %v579
  %884 = vmatprep.subr.bf16.mxu0 %v584
  %885 = vmatpush1.bf16.msra.mxu0 %v583
  %886 = vmatprep.subr.bf16.mxu0 %v588
  %887 = vmatpush1.bf16.msra.mxu0 %v587
  %888 = vmatprep.subr.bf16.mxu0 %v592
  %889 = vmatpush1.bf16.msra.mxu0 %v591
  %890 = vmatprep.subr.bf16.mxu0 %v596
  %891 = vmatpush1.bf16.msra.mxu0 %v595
  %892 = vmatprep.subr.bf16.mxu0 %v600
  %893 = vmatpush1.bf16.msra.mxu0 %v599
  %894 = vmatprep.subr.bf16.mxu0 %v604
  %895 = vmatpush1.bf16.msra.mxu0 %v603
  %896 = vmatprep.subr.bf16.mxu0 %v608
  %897 = vmatpush1.bf16.msra.mxu0 %v607
  %898 = vmatprep.subr.bf16.mxu0 0
  %899 = vmatpush1.bf16.msra.mxu0 0
  %900 = vmatprep.subr.bf16.mxu0 0
  %901 = vmatpush1.bf16.msra.mxu0 0
  %902 = vmatprep.subr.bf16.mxu0 0
  %903 = vmatpush1.bf16.msra.mxu0 0
  %904 = vmatprep.subr.bf16.mxu0 0
  %905 = vmatpush1.bf16.msra.mxu0 0
  %906 = vmatprep.subr.bf16.mxu0 0
  %907 = vmatpush1.bf16.msra.mxu0 0
  %908 = vmatprep.subr.bf16.mxu0 0
  %909 = vmatpush1.bf16.msra.mxu0 0
  %910 = vmatprep.subr.bf16.mxu0 0
  %911 = vmatpush1.bf16.msra.mxu0 0
  %912 = vmatprep.subr.bf16.mxu0 0
  %913 = vmatpush1.bf16.msra.mxu0 0
  %914 = vmatprep.mubr.bf16.mxu0 0
  %915 = vmatmul.mubr.bf16.gmra.mrb[0].mxu0 %v879
  %v916 = vpop.f32.mrb[0].mxu0
  %v917 = vadd.f32 0.0, %v916
  %v918 = vpop.f32.mrb[0].mxu0
  %v919 = vadd.f32 0.0, %v918
  %v920 = vpop.f32.mrb[0].mxu0
  %v921 = vpop.f32.mrb[0].mxu0
  %922 = vdwg.mxu0
  %923 = vmatprep.subr.bf16.mxu0 %v582
  %924 = vmatpush1.bf16.msra.mxu0 %v581
  %925 = vmatprep.subr.bf16.mxu0 %v586
  %926 = vmatpush1.bf16.msra.mxu0 %v585
  %927 = vmatprep.subr.bf16.mxu0 %v590
  %928 = vmatpush1.bf16.msra.mxu0 %v589
  %929 = vmatprep.subr.bf16.mxu0 %v594
  %930 = vmatpush1.bf16.msra.mxu0 %v593
  %931 = vmatprep.subr.bf16.mxu0 %v598
  %932 = vmatpush1.bf16.msra.mxu0 %v597
  %933 = vmatprep.subr.bf16.mxu0 %v602
  %934 = vmatpush1.bf16.msra.mxu0 %v601
  %935 = vmatprep.subr.bf16.mxu0 %v606
  %936 = vmatpush1.bf16.msra.mxu0 %v605
  %937 = vmatprep.subr.bf16.mxu0 %v610
  %938 = vmatpush1.bf16.msra.mxu0 %v609
  %939 = vmatprep.subr.bf16.mxu0 0
  %940 = vmatpush1.bf16.msra.mxu0 0
  %941 = vmatprep.subr.bf16.mxu0 0
  %942 = vmatpush1.bf16.msra.mxu0 0
  %943 = vmatprep.subr.bf16.mxu0 0
  %944 = vmatpush1.bf16.msra.mxu0 0
  %945 = vmatprep.subr.bf16.mxu0 0
  %946 = vmatpush1.bf16.msra.mxu0 0
  %947 = vmatprep.subr.bf16.mxu0 0
  %948 = vmatpush1.bf16.msra.mxu0 0
  %949 = vmatprep.subr.bf16.mxu0 0
  %950 = vmatpush1.bf16.msra.mxu0 0
  %951 = vmatprep.subr.bf16.mxu0 0
  %952 = vmatpush1.bf16.msra.mxu0 0
  %953 = vmatprep.subr.bf16.mxu0 0
  %954 = vmatpush1.bf16.msra.mxu0 0
  %955 = vmatprep.mubr.bf16.mxu0 0
  %956 = vmatmul.mubr.bf16.gmra.mrb[0].mxu0 %v879
  %v957 = vpop.f32.mrb[0].mxu0
  %v958 = vadd.f32 0.0, %v957
  %v959 = vpop.f32.mrb[0].mxu0
  %v960 = vadd.f32 0.0, %v959
  %v961 = vpop.f32.mrb[0].mxu0
  %v962 = vpop.f32.mrb[0].mxu0
  %963 = vdwg.mxu0
  %s964 = smul.u32 2, 4
  %s965 = smul.addr %s964, 8
  %s966 = scalar_lea.vmem [#allocation2], %s965
  %v967 = vld [vmem:[%s966] sm:$0xff]
  %v968 = vld [vmem:[%s966 + $0x8] sm:$0xff]
  %v969 = vld [vmem:[%s966 + $0x10] sm:$0xff]
  %v970 = vld [vmem:[%s966 + $0x18] sm:$0xff]
  %v971 = vadd.f32 %v967, %v917
  %v972 = vadd.f32 %v968, %v919
  %v973 = vadd.f32 %v969, %v958
  %v974 = vadd.f32 %v970, %v960
  %v975 = vxor.u32 %v971, 2147483648
  %v976 = vxor.u32 %v972, 2147483648
  %v977 = vxor.u32 %v973, 2147483648
  %v978 = vmul.f32 %v975, 1.442695
  %v979 = vpow.pop %v978
  %v980 = vmul.f32 %v976, 1.442695
  %v981 = vpow.pop %v980
  %v982 = vmul.f32 %v977, 1.442695
  %v983 = vpow.pop %v982
  %v984 = vadd.f32 %v979, 1.0
  %v985 = vadd.f32 %v981, 1.0
  %v986 = vadd.f32 %v983, 1.0
  %v987 = vrcp.pop %v984
  %v988 = vmul.f32 1.0, %v987
  %v989 = vrcp.pop %v985
  %v990 = vmul.f32 1.0, %v989
  %v991 = vrcp.pop %v986
  %v992 = vmul.f32 1.0, %v991
  %v993 = vtanh.pop %v974
  %v994 = vmul.f32 %v990, %v876
  %v995 = vmul.f32 %v988, %v993
  %v996 = vadd.f32 %v994, %v995
  %v997 = vtanh.pop %v996
  %v998 = vmul.f32 %v992, %v997
  %v999 = vpack.c.bf16 %v998, %v998
  %s1000 = scalar_lea.vmem %s4, 8
  %1001 = vst [vmem:[%s1000] sm:$0xf] %v999
  %1002 = vmatprep.subr.bf16.mxu0 %v580
  %1003 = vmatpush1.bf16.msra.mxu0 %v579
  %1004 = vmatprep.subr.bf16.mxu0 %v584
  %1005 = vmatpush1.bf16.msra.mxu0 %v583
  %1006 = vmatprep.subr.bf16.mxu0 %v588
  %1007 = vmatpush1.bf16.msra.mxu0 %v587
  %1008 = vmatprep.subr.bf16.mxu0 %v592
  %1009 = vmatpush1.bf16.msra.mxu0 %v591
  %1010 = vmatprep.subr.bf16.mxu0 %v596
  %1011 = vmatpush1.bf16.msra.mxu0 %v595
  %1012 = vmatprep.subr.bf16.mxu0 %v600
  %1013 = vmatpush1.bf16.msra.mxu0 %v599
  %1014 = vmatprep.subr.bf16.mxu0 %v604
  %1015 = vmatpush1.bf16.msra.mxu0 %v603
  %1016 = vmatprep.subr.bf16.mxu0 %v608
  %1017 = vmatpush1.bf16.msra.mxu0 %v607
  %1018 = vmatprep.subr.bf16.mxu0 0
  %1019 = vmatpush1.bf16.msra.mxu0 0
  %1020 = vmatprep.subr.bf16.mxu0 0
  %1021 = vmatpush1.bf16.msra.mxu0 0
  %1022 = vmatprep.subr.bf16.mxu0 0
  %1023 = vmatpush1.bf16.msra.mxu0 0
  %1024 = vmatprep.subr.bf16.mxu0 0
  %1025 = vmatpush1.bf16.msra.mxu0 0
  %1026 = vmatprep.subr.bf16.mxu0 0
  %1027 = vmatpush1.bf16.msra.mxu0 0
  %1028 = vmatprep.subr.bf16.mxu0 0
  %1029 = vmatpush1.bf16.msra.mxu0 0
  %1030 = vmatprep.subr.bf16.mxu0 0
  %1031 = vmatpush1.bf16.msra.mxu0 0
  %1032 = vmatprep.subr.bf16.mxu0 0
  %1033 = vmatpush1.bf16.msra.mxu0 0
  %1034 = vmatprep.mubr.bf16.mxu0 0
  %1035 = vmatmul.mubr.bf16.gmra.mrb[0].mxu0 %v999
  %v1036 = vpop.f32.mrb[0].mxu0
  %v1037 = vadd.f32 0.0, %v1036
  %v1038 = vpop.f32.mrb[0].mxu0
  %v1039 = vadd.f32 0.0, %v1038
  %v1040 = vpop.f32.mrb[0].mxu0
  %v1041 = vpop.f32.mrb[0].mxu0
  %1042 = vdwg.mxu0
  %1043 = vmatprep.subr.bf16.mxu0 %v582
  %1044 = vmatpush1.bf16.msra.mxu0 %v581
  %1045 = vmatprep.subr.bf16.mxu0 %v586
  %1046 = vmatpush1.bf16.msra.mxu0 %v585
  %1047 = vmatprep.subr.bf16.mxu0 %v590
  %1048 = vmatpush1.bf16.msra.mxu0 %v589
  %1049 = vmatprep.subr.bf16.mxu0 %v594
  %1050 = vmatpush1.bf16.msra.mxu0 %v593
  %1051 = vmatprep.subr.bf16.mxu0 %v598
  %1052 = vmatpush1.bf16.msra.mxu0 %v597
  %1053 = vmatprep.subr.bf16.mxu0 %v602
  %1054 = vmatpush1.bf16.msra.mxu0 %v601
  %1055 = vmatprep.subr.bf16.mxu0 %v606
  %1056 = vmatpush1.bf16.msra.mxu0 %v605
  %1057 = vmatprep.subr.bf16.mxu0 %v610
  %1058 = vmatpush1.bf16.msra.mxu0 %v609
  %1059 = vmatprep.subr.bf16.mxu0 0
  %1060 = vmatpush1.bf16.msra.mxu0 0
  %1061 = vmatprep.subr.bf16.mxu0 0
  %1062 = vmatpush1.bf16.msra.mxu0 0
  %1063 = vmatprep.subr.bf16.mxu0 0
  %1064 = vmatpush1.bf16.msra.mxu0 0
  %1065 = vmatprep.subr.bf16.mxu0 0
  %1066 = vmatpush1.bf16.msra.mxu0 0
  %1067 = vmatprep.subr.bf16.mxu0 0
  %1068 = vmatpush1.bf16.msra.mxu0 0
  %1069 = vmatprep.subr.bf16.mxu0 0
  %1070 = vmatpush1.bf16.msra.mxu0 0
  %1071 = vmatprep.subr.bf16.mxu0 0
  %1072 = vmatpush1.bf16.msra.mxu0 0
  %1073 = vmatprep.subr.bf16.mxu0 0
  %1074 = vmatpush1.bf16.msra.mxu0 0
  %1075 = vmatprep.mubr.bf16.mxu0 0
  %1076 = vmatmul.mubr.bf16.gmra.mrb[0].mxu0 %v999
  %v1077 = vpop.f32.mrb[0].mxu0
  %v1078 = vadd.f32 0.0, %v1077
  %v1079 = vpop.f32.mrb[0].mxu0
  %v1080 = vadd.f32 0.0, %v1079
  %v1081 = vpop.f32.mrb[0].mxu0
  %v1082 = vpop.f32.mrb[0].mxu0
  %1083 = vdwg.mxu0
  %s1084 = smul.u32 3, 4
  %s1085 = smul.addr %s1084, 8
  %s1086 = scalar_lea.vmem [#allocation2], %s1085
  %v1087 = vld [vmem:[%s1086] sm:$0xff]
  %v1088 = vld [vmem:[%s1086 + $0x8] sm:$0xff]
  %v1089 = vld [vmem:[%s1086 + $0x10] sm:$0xff]
  %v1090 = vld [vmem:[%s1086 + $0x18] sm:$0xff]
  %v1091 = vadd.f32 %v1087, %v1037
  %v1092 = vadd.f32 %v1088, %v1039
  %v1093 = vadd.f32 %v1089, %v1078
  %v1094 = vadd.f32 %v1090, %v1080
  %v1095 = vxor.u32 %v1091, 2147483648
  %v1096 = vxor.u32 %v1092, 2147483648
  %v1097 = vxor.u32 %v1093, 2147483648
  %v1098 = vmul.f32 %v1095, 1.442695
  %v1099 = vpow.pop %v1098
  %v1100 = vmul.f32 %v1096, 1.442695
  %v1101 = vpow.pop %v1100
  %v1102 = vmul.f32 %v1097, 1.442695
  %v1103 = vpow.pop %v1102
  %v1104 = vadd.f32 %v1099, 1.0
  %v1105 = vadd.f32 %v1101, 1.0
  %v1106 = vadd.f32 %v1103, 1.0
  %v1107 = vrcp.pop %v1104
  %v1108 = vmul.f32 1.0, %v1107
  %v1109 = vrcp.pop %v1105
  %v1110 = vmul.f32 1.0, %v1109
  %v1111 = vrcp.pop %v1106
  %v1112 = vmul.f32 1.0, %v1111
  %v1113 = vtanh.pop %v1094
  %v1114 = vmul.f32 %v1110, %v996
  %v1115 = vmul.f32 %v1108, %v1113
  %v1116 = vadd.f32 %v1114, %v1115
  %v1117 = vtanh.pop %v1116
  %v1118 = vmul.f32 %v1112, %v1117
  %v1119 = vpack.c.bf16 %v1118, %v1118
  %s1120 = scalar_lea.vmem %s4, 12
  %1121 = vst [vmem:[%s1120] sm:$0xf] %v1119
  %1122 = vmatprep.subr.bf16.mxu0 %v580
  %1123 = vmatpush1.bf16.msra.mxu0 %v579
  %1124 = vmatprep.subr.bf16.mxu0 %v584
  %1125 = vmatpush1.bf16.msra.mxu0 %v583
  %1126 = vmatprep.subr.bf16.mxu0 %v588
  %1127 = vmatpush1.bf16.msra.mxu0 %v587
  %1128 = vmatprep.subr.bf16.mxu0 %v592
  %1129 = vmatpush1.bf16.msra.mxu0 %v591
  %1130 = vmatprep.subr.bf16.mxu0 %v596
  %1131 = vmatpush1.bf16.msra.mxu0 %v595
  %1132 = vmatprep.subr.bf16.mxu0 %v600
  %1133 = vmatpush1.bf16.msra.mxu0 %v599
  %1134 = vmatprep.subr.bf16.mxu0 %v604
  %1135 = vmatpush1.bf16.msra.mxu0 %v603
  %1136 = vmatprep.subr.bf16.mxu0 %v608
  %1137 = vmatpush1.bf16.msra.mxu0 %v607
  %1138 = vmatprep.subr.bf16.mxu0 0
  %1139 = vmatpush1.bf16.msra.mxu0 0
  %1140 = vmatprep.subr.bf16.mxu0 0
  %1141 = vmatpush1.bf16.msra.mxu0 0
  %1142 = vmatprep.subr.bf16.mxu0 0
  %1143 = vmatpush1.bf16.msra.mxu0 0
  %1144 = vmatprep.subr.bf16.mxu0 0
  %1145 = vmatpush1.bf16.msra.mxu0 0
  %1146 = vmatprep.subr.bf16.mxu0 0
  %1147 = vmatpush1.bf16.msra.mxu0 0
  %1148 = vmatprep.subr.bf16.mxu0 0
  %1149 = vmatpush1.bf16.msra.mxu0 0
  %1150 = vmatprep.subr.bf16.mxu0 0
  %1151 = vmatpush1.bf16.msra.mxu0 0
  %1152 = vmatprep.subr.bf16.mxu0 0
  %1153 = vmatpush1.bf16.msra.mxu0 0
  %1154 = vmatprep.mubr.bf16.mxu0 0
  %1155 = vmatmul.mubr.bf16.gmra.mrb[0].mxu0 %v1119
  %v1156 = vpop.f32.mrb[0].mxu0
  %v1157 = vadd.f32 0.0, %v1156
  %v1158 = vpop.f32.mrb[0].mxu0
  %v1159 = vadd.f32 0.0, %v1158
  %v1160 = vpop.f32.mrb[0].mxu0
  %v1161 = vpop.f32.mrb[0].mxu0
  %1162 = vdwg.mxu0
  %1163 = vmatprep.subr.bf16.mxu0 %v582
  %1164 = vmatpush1.bf16.msra.mxu0 %v581
  %1165 = vmatprep.subr.bf16.mxu0 %v586
  %1166 = vmatpush1.bf16.msra.mxu0 %v585
  %1167 = vmatprep.subr.bf16.mxu0 %v590
  %1168 = vmatpush1.bf16.msra.mxu0 %v589
  %1169 = vmatprep.subr.bf16.mxu0 %v594
  %1170 = vmatpush1.bf16.msra.mxu0 %v593
  %1171 = vmatprep.subr.bf16.mxu0 %v598
  %1172 = vmatpush1.bf16.msra.mxu0 %v597
  %1173 = vmatprep.subr.bf16.mxu0 %v602
  %1174 = vmatpush1.bf16.msra.mxu0 %v601
  %1175 = vmatprep.subr.bf16.mxu0 %v606
  %1176 = vmatpush1.bf16.msra.mxu0 %v605
  %1177 = vmatprep.subr.bf16.mxu0 %v610
  %1178 = vmatpush1.bf16.msra.mxu0 %v609
  %1179 = vmatprep.subr.bf16.mxu0 0
  %1180 = vmatpush1.bf16.msra.mxu0 0
  %1181 = vmatprep.subr.bf16.mxu0 0
  %1182 = vmatpush1.bf16.msra.mxu0 0
  %1183 = vmatprep.subr.bf16.mxu0 0
  %1184 = vmatpush1.bf16.msra.mxu0 0
  %1185 = vmatprep.subr.bf16.mxu0 0
  %1186 = vmatpush1.bf16.msra.mxu0 0
  %1187 = vmatprep.subr.bf16.mxu0 0
  %1188 = vmatpush1.bf16.msra.mxu0 0
  %1189 = vmatprep.subr.bf16.mxu0 0
  %1190 = vmatpush1.bf16.msra.mxu0 0
  %1191 = vmatprep.subr.bf16.mxu0 0
  %1192 = vmatpush1.bf16.msra.mxu0 0
  %1193 = vmatprep.subr.bf16.mxu0 0
  %1194 = vmatpush1.bf16.msra.mxu0 0
  %1195 = vmatprep.mubr.bf16.mxu0 0
  %1196 = vmatmul.mubr.bf16.gmra.mrb[0].mxu0 %v1119
  %v1197 = vpop.f32.mrb[0].mxu0
  %v1198 = vadd.f32 0.0, %v1197
  %v1199 = vpop.f32.mrb[0].mxu0
  %v1200 = vadd.f32 0.0, %v1199
  %v1201 = vpop.f32.mrb[0].mxu0
  %v1202 = vpop.f32.mrb[0].mxu0
  %1203 = vdwg.mxu0
  %s1204 = smul.u32 4, 4
  %s1205 = smul.addr %s1204, 8
  %s1206 = scalar_lea.vmem [#allocation2], %s1205
  %v1207 = vld [vmem:[%s1206] sm:$0xff]
  %v1208 = vld [vmem:[%s1206 + $0x8] sm:$0xff]
  %v1209 = vld [vmem:[%s1206 + $0x10] sm:$0xff]
  %v1210 = vld [vmem:[%s1206 + $0x18] sm:$0xff]
  %v1211 = vadd.f32 %v1207, %v1157
  %v1212 = vadd.f32 %v1208, %v1159
  %v1213 = vadd.f32 %v1209, %v1198
  %v1214 = vadd.f32 %v1210, %v1200
  %v1215 = vxor.u32 %v1211, 2147483648
  %v1216 = vxor.u32 %v1212, 2147483648
  %v1217 = vxor.u32 %v1213, 2147483648
  %v1218 = vmul.f32 %v1215, 1.442695
  %v1219 = vpow.pop %v1218
  %v1220 = vmul.f32 %v1216, 1.442695
  %v1221 = vpow.pop %v1220
  %v1222 = vmul.f32 %v1217, 1.442695
  %v1223 = vpow.pop %v1222
  %v1224 = vadd.f32 %v1219, 1.0
  %v1225 = vadd.f32 %v1221, 1.0
  %v1226 = vadd.f32 %v1223, 1.0
  %v1227 = vrcp.pop %v1224
  %v1228 = vmul.f32 1.0, %v1227
  %v1229 = vrcp.pop %v1225
  %v1230 = vmul.f32 1.0, %v1229
  %v1231 = vrcp.pop %v1226
  %v1232 = vmul.f32 1.0, %v1231
  %v1233 = vtanh.pop %v1214
  %v1234 = vmul.f32 %v1230, %v1116
  %v1235 = vmul.f32 %v1228, %v1233
  %v1236 = vadd.f32 %v1234, %v1235
  %v1237 = vtanh.pop %v1236
  %v1238 = vmul.f32 %v1232, %v1237
  %v1239 = vpack.c.bf16 %v1238, %v1238
  %s1240 = scalar_lea.vmem %s4, 16
  %1241 = vst [vmem:[%s1240] sm:$0xf] %v1239
  %1242 = vmatprep.subr.bf16.mxu0 %v580
  %1243 = vmatpush1.bf16.msra.mxu0 %v579
  %1244 = vmatprep.subr.bf16.mxu0 %v584
  %1245 = vmatpush1.bf16.msra.mxu0 %v583
  %1246 = vmatprep.subr.bf16.mxu0 %v588
  %1247 = vmatpush1.bf16.msra.mxu0 %v587
  %1248 = vmatprep.subr.bf16.mxu0 %v592
  %1249 = vmatpush1.bf16.msra.mxu0 %v591
  %1250 = vmatprep.subr.bf16.mxu0 %v596
  %1251 = vmatpush1.bf16.msra.mxu0 %v595
  %1252 = vmatprep.subr.bf16.mxu0 %v600
  %1253 = vmatpush1.bf16.msra.mxu0 %v599
  %1254 = vmatprep.subr.bf16.mxu0 %v604
  %1255 = vmatpush1.bf16.msra.mxu0 %v603
  %1256 = vmatprep.subr.bf16.mxu0 %v608
  %1257 = vmatpush1.bf16.msra.mxu0 %v607
  %1258 = vmatprep.subr.bf16.mxu0 0
  %1259 = vmatpush1.bf16.msra.mxu0 0
  %1260 = vmatprep.subr.bf16.mxu0 0
  %1261 = vmatpush1.bf16.msra.mxu0 0
  %1262 = vmatprep.subr.bf16.mxu0 0
  %1263 = vmatpush1.bf16.msra.mxu0 0
  %1264 = vmatprep.subr.bf16.mxu0 0
  %1265 = vmatpush1.bf16.msra.mxu0 0
  %1266 = vmatprep.subr.bf16.mxu0 0
  %1267 = vmatpush1.bf16.msra.mxu0 0
  %1268 = vmatprep.subr.bf16.mxu0 0
  %1269 = vmatpush1.bf16.msra.mxu0 0
  %1270 = vmatprep.subr.bf16.mxu0 0
  %1271 = vmatpush1.bf16.msra.mxu0 0
  %1272 = vmatprep.subr.bf16.mxu0 0
  %1273 = vmatpush1.bf16.msra.mxu0 0
  %1274 = vmatprep.mubr.bf16.mxu0 0
  %1275 = vmatmul.mubr.bf16.gmra.mrb[0].mxu0 %v1239
  %v1276 = vpop.f32.mrb[0].mxu0
  %v1277 = vadd.f32 0.0, %v1276
  %v1278 = vpop.f32.mrb[0].mxu0
  %v1279 = vadd.f32 0.0, %v1278
  %v1280 = vpop.f32.mrb[0].mxu0
  %v1281 = vpop.f32.mrb[0].mxu0
  %1282 = vdwg.mxu0
  %1283 = vmatprep.subr.bf16.mxu0 %v582
  %1284 = vmatpush1.bf16.msra.mxu0 %v581
  %1285 = vmatprep.subr.bf16.mxu0 %v586
  %1286 = vmatpush1.bf16.msra.mxu0 %v585
  %1287 = vmatprep.subr.bf16.mxu0 %v590
  %1288 = vmatpush1.bf16.msra.mxu0 %v589
  %1289 = vmatprep.subr.bf16.mxu0 %v594
  %1290 = vmatpush1.bf16.msra.mxu0 %v593
  %1291 = vmatprep.subr.bf16.mxu0 %v598
  %1292 = vmatpush1.bf16.msra.mxu0 %v597
  %1293 = vmatprep.subr.bf16.mxu0 %v602
  %1294 = vmatpush1.bf16.msra.mxu0 %v601
  %1295 = vmatprep.subr.bf16.mxu0 %v606
  %1296 = vmatpush1.bf16.msra.mxu0 %v605
  %1297 = vmatprep.subr.bf16.mxu0 %v610
  %1298 = vmatpush1.bf16.msra.mxu0 %v609
  %1299 = vmatprep.subr.bf16.mxu0 0
  %1300 = vmatpush1.bf16.msra.mxu0 0
  %1301 = vmatprep.subr.bf16.mxu0 0
  %1302 = vmatpush1.bf16.msra.mxu0 0
  %1303 = vmatprep.subr.bf16.mxu0 0
  %1304 = vmatpush1.bf16.msra.mxu0 0
  %1305 = vmatprep.subr.bf16.mxu0 0
  %1306 = vmatpush1.bf16.msra.mxu0 0
  %1307 = vmatprep.subr.bf16.mxu0 0
  %1308 = vmatpush1.bf16.msra.mxu0 0
  %1309 = vmatprep.subr.bf16.mxu0 0
  %1310 = vmatpush1.bf16.msra.mxu0 0
  %1311 = vmatprep.subr.bf16.mxu0 0
  %1312 = vmatpush1.bf16.msra.mxu0 0
  %1313 = vmatprep.subr.bf16.mxu0 0
  %1314 = vmatpush1.bf16.msra.mxu0 0
  %1315 = vmatprep.mubr.bf16.mxu0 0
  %1316 = vmatmul.mubr.bf16.gmra.mrb[0].mxu0 %v1239
  %v1317 = vpop.f32.mrb[0].mxu0
  %v1318 = vadd.f32 0.0, %v1317
  %v1319 = vpop.f32.mrb[0].mxu0
  %v1320 = vadd.f32 0.0, %v1319
  %v1321 = vpop.f32.mrb[0].mxu0
  %v1322 = vpop.f32.mrb[0].mxu0
  %1323 = vdwg.mxu0
  %s1324 = smul.u32 5, 4
  %s1325 = smul.addr %s1324, 8
  %s1326 = scalar_lea.vmem [#allocation2], %s1325
  %v1327 = vld [vmem:[%s1326] sm:$0xff]
  %v1328 = vld [vmem:[%s1326 + $0x8] sm:$0xff]
  %v1329 = vld [vmem:[%s1326 + $0x10] sm:$0xff]
  %v1330 = vld [vmem:[%s1326 + $0x18] sm:$0xff]
  %v1331 = vadd.f32 %v1327, %v1277
  %v1332 = vadd.f32 %v1328, %v1279
  %v1333 = vadd.f32 %v1329, %v1318
  %v1334 = vadd.f32 %v1330, %v1320
  %v1335 = vxor.u32 %v1331, 2147483648
  %v1336 = vxor.u32 %v1332, 2147483648
  %v1337 = vxor.u32 %v1333, 2147483648
  %v1338 = vmul.f32 %v1335, 1.442695
  %v1339 = vpow.pop %v1338
  %v1340 = vmul.f32 %v1336, 1.442695
  %v1341 = vpow.pop %v1340
  %v1342 = vmul.f32 %v1337, 1.442695
  %v1343 = vpow.pop %v1342
  %v1344 = vadd.f32 %v1339, 1.0
  %v1345 = vadd.f32 %v1341, 1.0
  %v1346 = vadd.f32 %v1343, 1.0
  %v1347 = vrcp.pop %v1344
  %v1348 = vmul.f32 1.0, %v1347
  %v1349 = vrcp.pop %v1345
  %v1350 = vmul.f32 1.0, %v1349
  %v1351 = vrcp.pop %v1346
  %v1352 = vmul.f32 1.0, %v1351
  %v1353 = vtanh.pop %v1334
  %v1354 = vmul.f32 %v1350, %v1236
  %v1355 = vmul.f32 %v1348, %v1353
  %v1356 = vadd.f32 %v1354, %v1355
  %v1357 = vtanh.pop %v1356
  %v1358 = vmul.f32 %v1352, %v1357
  %v1359 = vpack.c.bf16 %v1358, %v1358
  %s1360 = scalar_lea.vmem %s4, 20
  %1361 = vst [vmem:[%s1360] sm:$0xf] %v1359
  %1362 = vmatprep.subr.bf16.mxu0 %v580
  %1363 = vmatpush1.bf16.msra.mxu0 %v579
  %1364 = vmatprep.subr.bf16.mxu0 %v584
  %1365 = vmatpush1.bf16.msra.mxu0 %v583
  %1366 = vmatprep.subr.bf16.mxu0 %v588
  %1367 = vmatpush1.bf16.msra.mxu0 %v587
  %1368 = vmatprep.subr.bf16.mxu0 %v592
  %1369 = vmatpush1.bf16.msra.mxu0 %v591
  %1370 = vmatprep.subr.bf16.mxu0 %v596
  %1371 = vmatpush1.bf16.msra.mxu0 %v595
  %1372 = vmatprep.subr.bf16.mxu0 %v600
  %1373 = vmatpush1.bf16.msra.mxu0 %v599
  %1374 = vmatprep.subr.bf16.mxu0 %v604
  %1375 = vmatpush1.bf16.msra.mxu0 %v603
  %1376 = vmatprep.subr.bf16.mxu0 %v608
  %1377 = vmatpush1.bf16.msra.mxu0 %v607
  %1378 = vmatprep.subr.bf16.mxu0 0
  %1379 = vmatpush1.bf16.msra.mxu0 0
  %1380 = vmatprep.subr.bf16.mxu0 0
  %1381 = vmatpush1.bf16.msra.mxu0 0
  %1382 = vmatprep.subr.bf16.mxu0 0
  %1383 = vmatpush1.bf16.msra.mxu0 0
  %1384 = vmatprep.subr.bf16.mxu0 0
  %1385 = vmatpush1.bf16.msra.mxu0 0
  %1386 = vmatprep.subr.bf16.mxu0 0
  %1387 = vmatpush1.bf16.msra.mxu0 0
  %1388 = vmatprep.subr.bf16.mxu0 0
  %1389 = vmatpush1.bf16.msra.mxu0 0
  %1390 = vmatprep.subr.bf16.mxu0 0
  %1391 = vmatpush1.bf16.msra.mxu0 0
  %1392 = vmatprep.subr.bf16.mxu0 0
  %1393 = vmatpush1.bf16.msra.mxu0 0
  %1394 = vmatprep.mubr.bf16.mxu0 0
  %1395 = vmatmul.mubr.bf16.gmra.mrb[0].mxu0 %v1359
  %v1396 = vpop.f32.mrb[0].mxu0
  %v1397 = vadd.f32 0.0, %v1396
  %v1398 = vpop.f32.mrb[0].mxu0
  %v1399 = vadd.f32 0.0, %v1398
  %v1400 = vpop.f32.mrb[0].mxu0
  %v1401 = vpop.f32.mrb[0].mxu0
  %1402 = vdwg.mxu0
  %1403 = vmatprep.subr.bf16.mxu0 %v582
  %1404 = vmatpush1.bf16.msra.mxu0 %v581
  %1405 = vmatprep.subr.bf16.mxu0 %v586
  %1406 = vmatpush1.bf16.msra.mxu0 %v585
  %1407 = vmatprep.subr.bf16.mxu0 %v590
  %1408 = vmatpush1.bf16.msra.mxu0 %v589
  %1409 = vmatprep.subr.bf16.mxu0 %v594
  %1410 = vmatpush1.bf16.msra.mxu0 %v593
  %1411 = vmatprep.subr.bf16.mxu0 %v598
  %1412 = vmatpush1.bf16.msra.mxu0 %v597
  %1413 = vmatprep.subr.bf16.mxu0 %v602
  %1414 = vmatpush1.bf16.msra.mxu0 %v601
  %1415 = vmatprep.subr.bf16.mxu0 %v606
  %1416 = vmatpush1.bf16.msra.mxu0 %v605
  %1417 = vmatprep.subr.bf16.mxu0 %v610
  %1418 = vmatpush1.bf16.msra.mxu0 %v609
  %1419 = vmatprep.subr.bf16.mxu0 0
  %1420 = vmatpush1.bf16.msra.mxu0 0
  %1421 = vmatprep.subr.bf16.mxu0 0
  %1422 = vmatpush1.bf16.msra.mxu0 0
  %1423 = vmatprep.subr.bf16.mxu0 0
  %1424 = vmatpush1.bf16.msra.mxu0 0
  %1425 = vmatprep.subr.bf16.mxu0 0
  %1426 = vmatpush1.bf16.msra.mxu0 0
  %1427 = vmatprep.subr.bf16.mxu0 0
  %1428 = vmatpush1.bf16.msra.mxu0 0
  %1429 = vmatprep.subr.bf16.mxu0 0
  %1430 = vmatpush1.bf16.msra.mxu0 0
  %1431 = vmatprep.subr.bf16.mxu0 0
  %1432 = vmatpush1.bf16.msra.mxu0 0
  %1433 = vmatprep.subr.bf16.mxu0 0
  %1434 = vmatpush1.bf16.msra.mxu0 0
  %1435 = vmatprep.mubr.bf16.mxu0 0
  %1436 = vmatmul.mubr.bf16.gmra.mrb[0].mxu0 %v1359
  %v1437 = vpop.f32.mrb[0].mxu0
  %v1438 = vadd.f32 0.0, %v1437
  %v1439 = vpop.f32.mrb[0].mxu0
  %v1440 = vadd.f32 0.0, %v1439
  %v1441 = vpop.f32.mrb[0].mxu0
  %v1442 = vpop.f32.mrb[0].mxu0
  %1443 = vdwg.mxu0
  %s1444 = smul.u32 6, 4
  %s1445 = smul.addr %s1444, 8
  %s1446 = scalar_lea.vmem [#allocation2], %s1445
  %v1447 = vld [vmem:[%s1446] sm:$0xff]
  %v1448 = vld [vmem:[%s1446 + $0x8] sm:$0xff]
  %v1449 = vld [vmem:[%s1446 + $0x10] sm:$0xff]
  %v1450 = vld [vmem:[%s1446 + $0x18] sm:$0xff]
  %v1451 = vadd.f32 %v1447, %v1397
  %v1452 = vadd.f32 %v1448, %v1399
  %v1453 = vadd.f32 %v1449, %v1438
  %v1454 = vadd.f32 %v1450, %v1440
  %v1455 = vxor.u32 %v1451, 2147483648
  %v1456 = vxor.u32 %v1452, 2147483648
  %v1457 = vxor.u32 %v1453, 2147483648
  %v1458 = vmul.f32 %v1455, 1.442695
  %v1459 = vpow.pop %v1458
  %v1460 = vmul.f32 %v1456, 1.442695
  %v1461 = vpow.pop %v1460
  %v1462 = vmul.f32 %v1457, 1.442695
  %v1463 = vpow.pop %v1462
  %v1464 = vadd.f32 %v1459, 1.0
  %v1465 = vadd.f32 %v1461, 1.0
  %v1466 = vadd.f32 %v1463, 1.0
  %v1467 = vrcp.pop %v1464
  %v1468 = vmul.f32 1.0, %v1467
  %v1469 = vrcp.pop %v1465
  %v1470 = vmul.f32 1.0, %v1469
  %v1471 = vrcp.pop %v1466
  %v1472 = vmul.f32 1.0, %v1471
  %v1473 = vtanh.pop %v1454
  %v1474 = vmul.f32 %v1470, %v1356
  %v1475 = vmul.f32 %v1468, %v1473
  %v1476 = vadd.f32 %v1474, %v1475
  %v1477 = vtanh.pop %v1476
  %v1478 = vmul.f32 %v1472, %v1477
  %v1479 = vpack.c.bf16 %v1478, %v1478
  %s1480 = scalar_lea.vmem %s4, 24
  %1481 = vst [vmem:[%s1480] sm:$0xf] %v1479
  %1482 = vmatprep.subr.bf16.mxu0 %v580
  %1483 = vmatpush1.bf16.msra.mxu0 %v579
  %1484 = vmatprep.subr.bf16.mxu0 %v584
  %1485 = vmatpush1.bf16.msra.mxu0 %v583
  %1486 = vmatprep.subr.bf16.mxu0 %v588
  %1487 = vmatpush1.bf16.msra.mxu0 %v587
  %1488 = vmatprep.subr.bf16.mxu0 %v592
  %1489 = vmatpush1.bf16.msra.mxu0 %v591
  %1490 = vmatprep.subr.bf16.mxu0 %v596
  %1491 = vmatpush1.bf16.msra.mxu0 %v595
  %1492 = vmatprep.subr.bf16.mxu0 %v600
  %1493 = vmatpush1.bf16.msra.mxu0 %v599
  %1494 = vmatprep.subr.bf16.mxu0 %v604
  %1495 = vmatpush1.bf16.msra.mxu0 %v603
  %1496 = vmatprep.subr.bf16.mxu0 %v608
  %1497 = vmatpush1.bf16.msra.mxu0 %v607
  %1498 = vmatprep.subr.bf16.mxu0 0
  %1499 = vmatpush1.bf16.msra.mxu0 0
  %1500 = vmatprep.subr.bf16.mxu0 0
  %1501 = vmatpush1.bf16.msra.mxu0 0
  %1502 = vmatprep.subr.bf16.mxu0 0
  %1503 = vmatpush1.bf16.msra.mxu0 0
  %1504 = vmatprep.subr.bf16.mxu0 0
  %1505 = vmatpush1.bf16.msra.mxu0 0
  %1506 = vmatprep.subr.bf16.mxu0 0
  %1507 = vmatpush1.bf16.msra.mxu0 0
  %1508 = vmatprep.subr.bf16.mxu0 0
  %1509 = vmatpush1.bf16.msra.mxu0 0
  %1510 = vmatprep.subr.bf16.mxu0 0
  %1511 = vmatpush1.bf16.msra.mxu0 0
  %1512 = vmatprep.subr.bf16.mxu0 0
  %1513 = vmatpush1.bf16.msra.mxu0 0
  %1514 = vmatprep.mubr.bf16.mxu0 0
  %1515 = vmatmul.mubr.bf16.gmra.mrb[0].mxu0 %v1479
  %v1516 = vpop.f32.mrb[0].mxu0
  %v1517 = vadd.f32 0.0, %v1516
  %v1518 = vpop.f32.mrb[0].mxu0
  %v1519 = vadd.f32 0.0, %v1518
  %v1520 = vpop.f32.mrb[0].mxu0
  %v1521 = vpop.f32.mrb[0].mxu0
  %1522 = vdwg.mxu0
  %1523 = vmatprep.subr.bf16.mxu0 %v582
  %1524 = vmatpush1.bf16.msra.mxu0 %v581
  %1525 = vmatprep.subr.bf16.mxu0 %v586
  %1526 = vmatpush1.bf16.msra.mxu0 %v585
  %1527 = vmatprep.subr.bf16.mxu0 %v590
  %1528 = vmatpush1.bf16.msra.mxu0 %v589
  %1529 = vmatprep.subr.bf16.mxu0 %v594
  %1530 = vmatpush1.bf16.msra.mxu0 %v593
  %1531 = vmatprep.subr.bf16.mxu0 %v598
  %1532 = vmatpush1.bf16.msra.mxu0 %v597
  %1533 = vmatprep.subr.bf16.mxu0 %v602
  %1534 = vmatpush1.bf16.msra.mxu0 %v601
  %1535 = vmatprep.subr.bf16.mxu0 %v606
  %1536 = vmatpush1.bf16.msra.mxu0 %v605
  %1537 = vmatprep.subr.bf16.mxu0 %v610
  %1538 = vmatpush1.bf16.msra.mxu0 %v609
  %1539 = vmatprep.subr.bf16.mxu0 0
  %1540 = vmatpush1.bf16.msra.mxu0 0
  %1541 = vmatprep.subr.bf16.mxu0 0
  %1542 = vmatpush1.bf16.msra.mxu0 0
  %1543 = vmatprep.subr.bf16.mxu0 0
  %1544 = vmatpush1.bf16.msra.mxu0 0
  %1545 = vmatprep.subr.bf16.mxu0 0
  %1546 = vmatpush1.bf16.msra.mxu0 0
  %1547 = vmatprep.subr.bf16.mxu0 0
  %1548 = vmatpush1.bf16.msra.mxu0 0
  %1549 = vmatprep.subr.bf16.mxu0 0
  %1550 = vmatpush1.bf16.msra.mxu0 0
  %1551 = vmatprep.subr.bf16.mxu0 0
  %1552 = vmatpush1.bf16.msra.mxu0 0
  %1553 = vmatprep.subr.bf16.mxu0 0
  %1554 = vmatpush1.bf16.msra.mxu0 0
  %1555 = vmatprep.mubr.bf16.mxu0 0
  %1556 = vmatmul.mubr.bf16.gmra.mrb[0].mxu0 %v1479
  %v1557 = vpop.f32.mrb[0].mxu0
  %v1558 = vadd.f32 0.0, %v1557
  %v1559 = vpop.f32.mrb[0].mxu0
  %v1560 = vadd.f32 0.0, %v1559
  %v1561 = vpop.f32.mrb[0].mxu0
  %v1562 = vpop.f32.mrb[0].mxu0
  %1563 = vdwg.mxu0
  %s1564 = smul.u32 7, 4
  %s1565 = smul.addr %s1564, 8
  %s1566 = scalar_lea.vmem [#allocation2], %s1565
  %v1567 = vld [vmem:[%s1566] sm:$0xff]
  %v1568 = vld [vmem:[%s1566 + $0x8] sm:$0xff]
  %v1569 = vld [vmem:[%s1566 + $0x10] sm:$0xff]
  %v1570 = vld [vmem:[%s1566 + $0x18] sm:$0xff]
  %v1571 = vadd.f32 %v1567, %v1517
  %v1572 = vadd.f32 %v1568, %v1519
  %v1573 = vadd.f32 %v1569, %v1558
  %v1574 = vadd.f32 %v1570, %v1560
  %v1575 = vxor.u32 %v1571, 2147483648
  %v1576 = vxor.u32 %v1572, 2147483648
  %v1577 = vxor.u32 %v1573, 2147483648
  %v1578 = vmul.f32 %v1575, 1.442695
  %v1579 = vpow.pop %v1578
  %v1580 = vmul.f32 %v1576, 1.442695
  %v1581 = vpow.pop %v1580
  %v1582 = vmul.f32 %v1577, 1.442695
  %v1583 = vpow.pop %v1582
  %v1584 = vadd.f32 %v1579, 1.0
  %v1585 = vadd.f32 %v1581, 1.0
  %v1586 = vadd.f32 %v1583, 1.0
  %v1587 = vrcp.pop %v1584
  %v1588 = vmul.f32 1.0, %v1587
  %v1589 = vrcp.pop %v1585
  %v1590 = vmul.f32 1.0, %v1589
  %v1591 = vrcp.pop %v1586
  %v1592 = vmul.f32 1.0, %v1591
  %v1593 = vtanh.pop %v1574
  %v1594 = vmul.f32 %v1590, %v1476
  %v1595 = vmul.f32 %v1588, %v1593
  %v1596 = vadd.f32 %v1594, %v1595
  %v1597 = vtanh.pop %v1596
  %v1598 = vmul.f32 %v1592, %v1597
  %v1599 = vpack.c.bf16 %v1598, %v1598
  %s1600 = scalar_lea.vmem %s4, 28
  %1601 = vst [vmem:[%s1600] sm:$0xf] %v1599
  %1602 = vst [vmem:[#allocation3] sm:$0xff] %v1598
  %1603 = vst [vmem:[#allocation4] sm:$0xff] %v1596
  // Predicated region
  $region22: #{cvae_forward.4} parent=0 // pred_check
    _
  $region23: #{cvae_forward.4} parent=0 // pred_check_branch
    %1605 = sbr.rel (0) target = $region25
  $region24: #{cvae_forward.4} parent=0 // pred_region
    _
  $region25: #{cvae_forward.4} parent=0 // pred_fallthru
    _
  // Predicated region
  $region26: #{cvae_forward.4} parent=0 // pred_check
    _
  $region27: #{cvae_forward.4} parent=0 // pred_check_branch
    %1607 = sbr.rel (0) target = $region29
  $region28: #{cvae_forward.4} parent=0 // pred_region
    _
  $region29: #{cvae_forward.4} parent=0 // pred_fallthru
    _

// kernel: cvae_forward.3
$region0: #{cvae_forward.3}
  #allocation0 [shape = 'u32[]', space=smem, size = 0x4, offset = 0x4, fixed_abs, tag = 'smem constant byte address 0x4 - core index']
  #allocation1 [shape = 'u32[144,128]{1,0:T(1,128)}', space=vmem, size = 0x12000, scoped, tag = 'internal scratch']
  #allocation2 [shape = 'f32[64,512]{1,0:T(8,128)}', space=vmem, size = 0x20000, scoped, tag = 'scratch operand']
  #allocation3 [shape = 'f32[8,128]{1,0:T(8,128)}', space=vmem, size = 0x1000, scoped, tag = 'scratch operand']
  #allocation4 [shape = 'f32[8,128]{1,0:T(8,128)}', space=vmem, size = 0x1000, scoped, tag = 'scratch operand']
  %s0 = inlined_call_operand.vmem [shape: bf16[1,64,128], index: 0, kind: input, shape index: {}]
  %s1 = inlined_call_operand.vmem [shape: bf16[128,512], index: 1, kind: input, shape index: {}]
  %s2 = inlined_call_operand.hbm [shape: bf16[128,512], index: 2, kind: input, shape index: {}]
  %s3 = inlined_call_operand.vmem [shape: f32[1,512], index: 3, kind: input, shape index: {}]
  %s4 = inlined_call_operand.vmem [shape: bf16[1,64,128], index: 4, kind: output, shape index: {}]
  %s5 = sld [smem:[#allocation0]]
  $region34: #{cvae_forward.3} parent=0
    _
  %s7 = ssub.s32 1, %s5
  %s8 = scalar_select 0, %s7, %s5
  $region1: #{cvae_forward.3} parent=0
    #allocation5 [shape = 'u8[131072]{0}', space=vmem, size = 0x20000, scoped, tag = 'input window, operand 2, single buffered']
    #allocation6 [shape = 's32[1]{0}', space=sflag, size = 0x4, scoped, tag = 'scoped memory for cvae_forward.3']
    %9 = vsyncpa [#allocation6], 0
    // Predicated region
    $region2: #{cvae_forward.3} parent=1 // pred_check
      _
    $region3: #{cvae_forward.3} parent=1 // pred_check_branch
      %11 = sbr.rel (0) target = $region5
    $region4: #{cvae_forward.3} parent=1 // pred_region
      _
    $region5: #{cvae_forward.3} parent=1 // pred_fallthru
      _
    // Predicated region
    $region6: #{cvae_forward.3} parent=1 // pred_check
      _
    $region7: #{cvae_forward.3} parent=1 // pred_check_branch
      %13 = sbr.rel (0) target = $region9
    $region8: #{cvae_forward.3} parent=1 // pred_region
      _
    $region9: #{cvae_forward.3} parent=1 // pred_fallthru
      _
    // Predicated region
    $region10: #{cvae_forward.3} parent=1 // pred_check
      _
    $region11: #{cvae_forward.3} parent=1 // pred_check_branch
      %15 = sbr.rel (0) target = $region13
    $region12: #{cvae_forward.3} parent=1 // pred_region
      %s17 = ssub.s32 4096, 4096
      %18 = vsyncadd [#allocation6], %s17
      %s19 = sshll.u32 [#allocation5], 4
      %s20 = int_to_ptr.vmem [resolvable:$true] %s19
      %25 = dma.hbm_to_vmem [thread:$0]  %s2, 4096, %s20, [#allocation6], 256, 256, 16
    $region13: #{cvae_forward.3} parent=1 // pred_fallthru
      _
    // Predicated region
    $region14: #{cvae_forward.3} parent=1 // pred_check
      _
    $region15: #{cvae_forward.3} parent=1 // pred_check_branch
      %27 = sbr.rel (0) target = $region17
    $region16: #{cvae_forward.3} parent=1 // pred_region
      _
    $region17: #{cvae_forward.3} parent=1 // pred_fallthru
      _
    // Predicated region
    $region18: #{cvae_forward.3} parent=1 // pred_check
      _
    $region19: #{cvae_forward.3} parent=1 // pred_check_branch
      %29 = sbr.rel (0) target = $region21
    $region20: #{cvae_forward.3} parent=1 // pred_region
      %30 = dma.done [#allocation6], 4096
    $region21: #{cvae_forward.3} parent=1 // pred_fallthru
      _
    %p32 = scmp.eq.s32.totalorder 0, 0
    // Predicated region
    $region22: #{cvae_forward.3} parent=1 // pred_check
      %p33 = pneg %p32
    $region23: #{cvae_forward.3} parent=1 // pred_check_branch
      %35 = sbr.rel (%p33) target = $region25
    $region24: #{cvae_forward.3} parent=1 // pred_region
      %36 = vst [vmem:[#allocation3] sm:$0xff] 0.0
      %37 = vst [vmem:[#allocation4] sm:$0xff] 0.0
    $region25: #{cvae_forward.3} parent=1 // pred_fallthru
      _
    %v38 = vld [vmem:[%s0] sm:$0xf]
    %v39 = vld [vmem:[%s0 + $0x4] sm:$0xf]
    %v40 = vld [vmem:[%s0 + $0x8] sm:$0xf]
    %v41 = vld [vmem:[%s0 + $0xc] sm:$0xf]
    %v42 = vld [vmem:[%s0 + $0x10] sm:$0xf]
    %v43 = vld [vmem:[%s0 + $0x14] sm:$0xf]
    %v44 = vld [vmem:[%s0 + $0x18] sm:$0xf]
    %v45 = vld [vmem:[%s0 + $0x1c] sm:$0xf]
    %v46 = vld [vmem:[%s1] sm:$0xff]
    %v47 = vld [vmem:[%s1 + $0x8] sm:$0xff]
    %v48 = vld [vmem:[%s1 + $0x10] sm:$0xff]
    %v49 = vld [vmem:[%s1 + $0x18] sm:$0xff]
    %v50 = vld [vmem:[%s1 + $0x20] sm:$0xff]
    %v51 = vld [vmem:[%s1 + $0x28] sm:$0xff]
    %v52 = vld [vmem:[%s1 + $0x30] sm:$0xff]
    %v53 = vld [vmem:[%s1 + $0x38] sm:$0xff]
    %v54 = vld [vmem:[%s1 + $0x40] sm:$0xff]
    %v55 = vld [vmem:[%s1 + $0x48] sm:$0xff]
    %v56 = vld [vmem:[%s1 + $0x50] sm:$0xff]
    %v57 = vld [vmem:[%s1 + $0x58] sm:$0xff]
    %v58 = vld [vmem:[%s1 + $0x60] sm:$0xff]
    %v59 = vld [vmem:[%s1 + $0x68] sm:$0xff]
    %v60 = vld [vmem:[%s1 + $0x70] sm:$0xff]
    %v61 = vld [vmem:[%s1 + $0x78] sm:$0xff]
    %v62 = vld [vmem:[%s1 + $0x80] sm:$0xff]
    %v63 = vld [vmem:[%s1 + $0x88] sm:$0xff]
    %v64 = vld [vmem:[%s1 + $0x90] sm:$0xff]
    %v65 = vld [vmem:[%s1 + $0x98] sm:$0xff]
    %v66 = vld [vmem:[%s1 + $0xa0] sm:$0xff]
    %v67 = vld [vmem:[%s1 + $0xa8] sm:$0xff]
    %v68 = vld [vmem:[%s1 + $0xb0] sm:$0xff]
    %v69 = vld [vmem:[%s1 + $0xb8] sm:$0xff]
    %v70 = vld [vmem:[%s1 + $0xc0] sm:$0xff]
    %v71 = vld [vmem:[%s1 + $0xc8] sm:$0xff]
    %v72 = vld [vmem:[%s1 + $0xd0] sm:$0xff]
    %v73 = vld [vmem:[%s1 + $0xd8] sm:$0xff]
    %v74 = vld [vmem:[%s1 + $0xe0] sm:$0xff]
    %v75 = vld [vmem:[%s1 + $0xe8] sm:$0xff]
    %v76 = vld [vmem:[%s1 + $0xf0] sm:$0xff]
    %v77 = vld [vmem:[%s1 + $0xf8] sm:$0xff]
    %v78 = vld [vmem:[%s3] sm:$0xf]
    %v80 = vlaneseq
    %v81 = vshrl.u32 %v80, 7
    %v82 = vsub.s32 0, %v81
    %v83 = vrot.slane %v78, %v82
    %v84 = vlaneseq
    %v85 = vshrl.u32 %v84, 7
    %v86 = vsub.s32 1, %v85
    %v87 = vrot.slane %v78, %v86
    %v88 = vlaneseq
    %v89 = vshrl.u32 %v88, 7
    %v90 = vsub.s32 2, %v89
    %v91 = vrot.slane %v78, %v90
    %v92 = vlaneseq
    %v93 = vshrl.u32 %v92, 7
    %v94 = vsub.s32 3, %v93
    %v95 = vrot.slane %v78, %v94
    %v108 = vunpack.c.l.b16 %v38
    %v109 = vunpack.c.l.b16 %v39
    %v110 = vunpack.c.l.b16 %v40
    %v111 = vunpack.c.l.b16 %v41
    %v112 = vunpack.c.l.b16 %v42
    %v113 = vunpack.c.l.b16 %v43
    %v114 = vunpack.c.l.b16 %v44
    %v115 = vunpack.c.l.b16 %v45
    %v116 = vpack.c.b16 %v109, %v108
    %v117 = vpack.c.b16 %v111, %v110
    %v118 = vpack.c.b16 %v113, %v112
    %v119 = vpack.c.b16 %v115, %v114
    %v156 = vunpack.c.l.b16 %v46
    %v157 = vunpack.c.h.b16 %v46
    %v158 = vunpack.c.l.b16 %v47
    %v159 = vunpack.c.h.b16 %v47
    %v160 = vunpack.c.l.b16 %v48
    %v161 = vunpack.c.h.b16 %v48
    %v162 = vunpack.c.l.b16 %v49
    %v163 = vunpack.c.h.b16 %v49
    %v164 = vunpack.c.l.b16 %v50
    %v165 = vunpack.c.h.b16 %v50
    %v166 = vunpack.c.l.b16 %v51
    %v167 = vunpack.c.h.b16 %v51
    %v168 = vunpack.c.l.b16 %v52
    %v169 = vunpack.c.h.b16 %v52
    %v170 = vunpack.c.l.b16 %v53
    %v171 = vunpack.c.h.b16 %v53
    %v172 = vunpack.c.l.b16 %v54
    %v173 = vunpack.c.h.b16 %v54
    %v174 = vunpack.c.l.b16 %v55
    %v175 = vunpack.c.h.b16 %v55
    %v176 = vunpack.c.l.b16 %v56
    %v177 = vunpack.c.h.b16 %v56
    %v178 = vunpack.c.l.b16 %v57
    %v179 = vunpack.c.h.b16 %v57
    %v180 = vunpack.c.l.b16 %v58
    %v181 = vunpack.c.h.b16 %v58
    %v182 = vunpack.c.l.b16 %v59
    %v183 = vunpack.c.h.b16 %v59
    %v184 = vunpack.c.l.b16 %v60
    %v185 = vunpack.c.h.b16 %v60
    %v186 = vunpack.c.l.b16 %v61
    %v187 = vunpack.c.h.b16 %v61
    %v188 = vunpack.c.l.b16 %v62
    %v189 = vunpack.c.h.b16 %v62
    %v190 = vunpack.c.l.b16 %v63
    %v191 = vunpack.c.h.b16 %v63
    %v192 = vunpack.c.l.b16 %v64
    %v193 = vunpack.c.h.b16 %v64
    %v194 = vunpack.c.l.b16 %v65
    %v195 = vunpack.c.h.b16 %v65
    %v196 = vunpack.c.l.b16 %v66
    %v197 = vunpack.c.h.b16 %v66
    %v198 = vunpack.c.l.b16 %v67
    %v199 = vunpack.c.h.b16 %v67
    %v200 = vunpack.c.l.b16 %v68
    %v201 = vunpack.c.h.b16 %v68
    %v202 = vunpack.c.l.b16 %v69
    %v203 = vunpack.c.h.b16 %v69
    %v204 = vunpack.c.l.b16 %v70
    %v205 = vunpack.c.h.b16 %v70
    %v206 = vunpack.c.l.b16 %v71
    %v207 = vunpack.c.h.b16 %v71
    %v208 = vunpack.c.l.b16 %v72
    %v209 = vunpack.c.h.b16 %v72
    %v210 = vunpack.c.l.b16 %v73
    %v211 = vunpack.c.h.b16 %v73
    %v212 = vunpack.c.l.b16 %v74
    %v213 = vunpack.c.h.b16 %v74
    %v214 = vunpack.c.l.b16 %v75
    %v215 = vunpack.c.h.b16 %v75
    %v216 = vunpack.c.l.b16 %v76
    %v217 = vunpack.c.h.b16 %v76
    %v218 = vunpack.c.l.b16 %v77
    %v219 = vunpack.c.h.b16 %v77
    %v220 = vpack.c.b16 %v160, %v156
    %v221 = vpack.c.b16 %v161, %v157
    %v222 = vpack.c.b16 %v162, %v158
    %v223 = vpack.c.b16 %v163, %v159
    %v224 = vpack.c.b16 %v168, %v164
    %v225 = vpack.c.b16 %v169, %v165
    %v226 = vpack.c.b16 %v170, %v166
    %v227 = vpack.c.b16 %v171, %v167
    %v228 = vpack.c.b16 %v176, %v172
    %v229 = vpack.c.b16 %v177, %v173
    %v230 = vpack.c.b16 %v178, %v174
    %v231 = vpack.c.b16 %v179, %v175
    %v232 = vpack.c.b16 %v184, %v180
    %v233 = vpack.c.b16 %v185, %v181
    %v234 = vpack.c.b16 %v186, %v182
    %v235 = vpack.c.b16 %v187, %v183
    %v236 = vpack.c.b16 %v192, %v188
    %v237 = vpack.c.b16 %v193, %v189
    %v238 = vpack.c.b16 %v194, %v190
    %v239 = vpack.c.b16 %v195, %v191
    %v240 = vpack.c.b16 %v200, %v196
    %v241 = vpack.c.b16 %v201, %v197
    %v242 = vpack.c.b16 %v202, %v198
    %v243 = vpack.c.b16 %v203, %v199
    %v244 = vpack.c.b16 %v208, %v204
    %v245 = vpack.c.b16 %v209, %v205
    %v246 = vpack.c.b16 %v210, %v206
    %v247 = vpack.c.b16 %v211, %v207
    %v248 = vpack.c.b16 %v216, %v212
    %v249 = vpack.c.b16 %v217, %v213
    %v250 = vpack.c.b16 %v218, %v214
    %v251 = vpack.c.b16 %v219, %v215
    %284 = vmatprep.subr.bf16.mxu0 %v221
    %285 = vmatpush1.bf16.msra.mxu0 %v220
    %286 = vmatprep.subr.bf16.mxu0 %v225
    %287 = vmatpush1.bf16.msra.mxu0 %v224
    %288 = vmatprep.subr.bf16.mxu0 %v229
    %289 = vmatpush1.bf16.msra.mxu0 %v228
    %290 = vmatprep.subr.bf16.mxu0 %v233
    %291 = vmatpush1.bf16.msra.mxu0 %v232
    %292 = vmatprep.subr.bf16.mxu0 %v237
    %293 = vmatpush1.bf16.msra.mxu0 %v236
    %294 = vmatprep.subr.bf16.mxu0 %v241
    %295 = vmatpush1.bf16.msra.mxu0 %v240
    %296 = vmatprep.subr.bf16.mxu0 %v245
    %297 = vmatpush1.bf16.msra.mxu0 %v244
    %298 = vmatprep.subr.bf16.mxu0 %v249
    %299 = vmatpush1.bf16.msra.mxu0 %v248
    %300 = vmatprep.subr.bf16.mxu0 0
    %301 = vmatpush1.bf16.msra.mxu0 0
    %302 = vmatprep.subr.bf16.mxu0 0
    %303 = vmatpush1.bf16.msra.mxu0 0
    %304 = vmatprep.subr.bf16.mxu0 0
    %305 = vmatpush1.bf16.msra.mxu0 0
    %306 = vmatprep.subr.bf16.mxu0 0
    %307 = vmatpush1.bf16.msra.mxu0 0
    %308 = vmatprep.subr.bf16.mxu0 0
    %309 = vmatpush1.bf16.msra.mxu0 0
    %310 = vmatprep.subr.bf16.mxu0 0
    %311 = vmatpush1.bf16.msra.mxu0 0
    %312 = vmatprep.subr.bf16.mxu0 0
    %313 = vmatpush1.bf16.msra.mxu0 0
    %314 = vmatprep.subr.bf16.mxu0 0
    %315 = vmatpush1.bf16.msra.mxu0 0
    %316 = vmatprep.mubr.bf16.mxu0 0
    %317 = vmatmul.mubr.bf16.gmra.mrb[0].mxu0 %v116
    %v318 = vpop.f32.mrb[0].mxu0
    %v319 = vadd.f32 %v83, %v318
    %v320 = vpop.f32.mrb[0].mxu0
    %v321 = vadd.f32 %v87, %v320
    %v322 = vpop.f32.mrb[0].mxu0
    %v323 = vadd.f32 %v83, %v322
    %v324 = vpop.f32.mrb[0].mxu0
    %v325 = vadd.f32 %v87, %v324
    %326 = vmatprep.mubr.bf16.mxu0 0
    %327 = vmatmul.mubr.bf16.gmra.mrb[0].mxu0 %v117
    %v328 = vpop.f32.mrb[0].mxu0
    %v329 = vadd.f32 %v83, %v328
    %v330 = vpop.f32.mrb[0].mxu0
    %v331 = vadd.f32 %v87, %v330
    %v332 = vpop.f32.mrb[0].mxu0
    %v333 = vadd.f32 %v83, %v332
    %v334 = vpop.f32.mrb[0].mxu0
    %v335 = vadd.f32 %v87, %v334
    %336 = vmatprep.mubr.bf16.mxu0 0
    %337 = vmatmul.mubr.bf16.gmra.mrb[0].mxu0 %v118
    %v338 = vpop.f32.mrb[0].mxu0
    %v339 = vadd.f32 %v83, %v338
    %v340 = vpop.f32.mrb[0].mxu0
    %v341 = vadd.f32 %v87, %v340
    %v342 = vpop.f32.mrb[0].mxu0
    %v343 = vadd.f32 %v83, %v342
    %v344 = vpop.f32.mrb[0].mxu0
    %v345 = vadd.f32 %v87, %v344
    %346 = vmatprep.mubr.bf16.mxu0 0
    %347 = vmatmul.mubr.bf16.gmra.mrb[0].mxu0 %v119
    %v348 = vpop.f32.mrb[0].mxu0
    %v349 = vadd.f32 %v83, %v348
    %v350 = vpop.f32.mrb[0].mxu0
    %v351 = vadd.f32 %v87, %v350
    %v352 = vpop.f32.mrb[0].mxu0
    %v353 = vadd.f32 %v83, %v352
    %v354 = vpop.f32.mrb[0].mxu0
    %v355 = vadd.f32 %v87, %v354
    %356 = vdwg.mxu0
    %357 = vmatprep.subr.bf16.mxu0 %v223
    %358 = vmatpush1.bf16.msra.mxu0 %v222
    %359 = vmatprep.subr.bf16.mxu0 %v227
    %360 = vmatpush1.bf16.msra.mxu0 %v226
    %361 = vmatprep.subr.bf16.mxu0 %v231
    %362 = vmatpush1.bf16.msra.mxu0 %v230
    %363 = vmatprep.subr.bf16.mxu0 %v235
    %364 = vmatpush1.bf16.msra.mxu0 %v234
    %365 = vmatprep.subr.bf16.mxu0 %v239
    %366 = vmatpush1.bf16.msra.mxu0 %v238
    %367 = vmatprep.subr.bf16.mxu0 %v243
    %368 = vmatpush1.bf16.msra.mxu0 %v242
    %369 = vmatprep.subr.bf16.mxu0 %v247
    %370 = vmatpush1.bf16.msra.mxu0 %v246
    %371 = vmatprep.subr.bf16.mxu0 %v251
    %372 = vmatpush1.bf16.msra.mxu0 %v250
    %373 = vmatprep.subr.bf16.mxu0 0
    %374 = vmatpush1.bf16.msra.mxu0 0
    %375 = vmatprep.subr.bf16.mxu0 0
    %376 = vmatpush1.bf16.msra.mxu0 0
    %377 = vmatprep.subr.bf16.mxu0 0
    %378 = vmatpush1.bf16.msra.mxu0 0
    %379 = vmatprep.subr.bf16.mxu0 0
    %380 = vmatpush1.bf16.msra.mxu0 0
    %381 = vmatprep.subr.bf16.mxu0 0
    %382 = vmatpush1.bf16.msra.mxu0 0
    %383 = vmatprep.subr.bf16.mxu0 0
    %384 = vmatpush1.bf16.msra.mxu0 0
    %385 = vmatprep.subr.bf16.mxu0 0
    %386 = vmatpush1.bf16.msra.mxu0 0
    %387 = vmatprep.subr.bf16.mxu0 0
    %388 = vmatpush1.bf16.msra.mxu0 0
    %389 = vmatprep.mubr.bf16.mxu0 0
    %390 = vmatmul.mubr.bf16.gmra.mrb[0].mxu0 %v116
    %v391 = vpop.f32.mrb[0].mxu0
    %v392 = vadd.f32 %v91, %v391
    %v393 = vpop.f32.mrb[0].mxu0
    %v394 = vadd.f32 %v95, %v393
    %v395 = vpop.f32.mrb[0].mxu0
    %v396 = vadd.f32 %v91, %v395
    %v397 = vpop.f32.mrb[0].mxu0
    %v398 = vadd.f32 %v95, %v397
    %399 = vmatprep.mubr.bf16.mxu0 0
    %400 = vmatmul.mubr.bf16.gmra.mrb[0].mxu0 %v117
    %v401 = vpop.f32.mrb[0].mxu0
    %v402 = vadd.f32 %v91, %v401
    %v403 = vpop.f32.mrb[0].mxu0
    %v404 = vadd.f32 %v95, %v403
    %v405 = vpop.f32.mrb[0].mxu0
    %v406 = vadd.f32 %v91, %v405
    %v407 = vpop.f32.mrb[0].mxu0
    %v408 = vadd.f32 %v95, %v407
    %409 = vmatprep.mubr.bf16.mxu0 0
    %410 = vmatmul.mubr.bf16.gmra.mrb[0].mxu0 %v118
    %v411 = vpop.f32.mrb[0].mxu0
    %v412 = vadd.f32 %v91, %v411
    %v413 = vpop.f32.mrb[0].mxu0
    %v414 = vadd.f32 %v95, %v413
    %v415 = vpop.f32.mrb[0].mxu0
    %v416 = vadd.f32 %v91, %v415
    %v417 = vpop.f32.mrb[0].mxu0
    %v418 = vadd.f32 %v95, %v417
    %419 = vmatprep.mubr.bf16.mxu0 0
    %420 = vmatmul.mubr.bf16.gmra.mrb[0].mxu0 %v119
    %v421 = vpop.f32.mrb[0].mxu0
    %v422 = vadd.f32 %v91, %v421
    %v423 = vpop.f32.mrb[0].mxu0
    %v424 = vadd.f32 %v95, %v423
    %v425 = vpop.f32.mrb[0].mxu0
    %v426 = vadd.f32 %v91, %v425
    %v427 = vpop.f32.mrb[0].mxu0
    %v428 = vadd.f32 %v95, %v427
    %429 = vdwg.mxu0
    %430 = vst [vmem:[#allocation2] sm:$0xff] %v319
    %431 = vst [vmem:[#allocation2 + $0x8] sm:$0xff] %v321
    %432 = vst [vmem:[#allocation2 + $0x10] sm:$0xff] %v392
    %433 = vst [vmem:[#allocation2 + $0x18] sm:$0xff] %v394
    %434 = vst [vmem:[#allocation2 + $0x20] sm:$0xff] %v323
    %435 = vst [vmem:[#allocation2 + $0x28] sm:$0xff] %v325
    %436 = vst [vmem:[#allocation2 + $0x30] sm:$0xff] %v396
    %437 = vst [vmem:[#allocation2 + $0x38] sm:$0xff] %v398
    %438 = vst [vmem:[#allocation2 + $0x40] sm:$0xff] %v329
    %439 = vst [vmem:[#allocation2 + $0x48] sm:$0xff] %v331
    %440 = vst [vmem:[#allocation2 + $0x50] sm:$0xff] %v402
    %441 = vst [vmem:[#allocation2 + $0x58] sm:$0xff] %v404
    %442 = vst [vmem:[#allocation2 + $0x60] sm:$0xff] %v333
    %443 = vst [vmem:[#allocation2 + $0x68] sm:$0xff] %v335
    %444 = vst [vmem:[#allocation2 + $0x70] sm:$0xff] %v406
    %445 = vst [vmem:[#allocation2 + $0x78] sm:$0xff] %v408
    %446 = vst [vmem:[#allocation2 + $0x80] sm:$0xff] %v339
    %447 = vst [vmem:[#allocation2 + $0x88] sm:$0xff] %v341
    %448 = vst [vmem:[#allocation2 + $0x90] sm:$0xff] %v412
    %449 = vst [vmem:[#allocation2 + $0x98] sm:$0xff] %v414
    %450 = vst [vmem:[#allocation2 + $0xa0] sm:$0xff] %v343
    %451 = vst [vmem:[#allocation2 + $0xa8] sm:$0xff] %v345
    %452 = vst [vmem:[#allocation2 + $0xb0] sm:$0xff] %v416
    %453 = vst [vmem:[#allocation2 + $0xb8] sm:$0xff] %v418
    %454 = vst [vmem:[#allocation2 + $0xc0] sm:$0xff] %v349
    %455 = vst [vmem:[#allocation2 + $0xc8] sm:$0xff] %v351
    %456 = vst [vmem:[#allocation2 + $0xd0] sm:$0xff] %v422
    %457 = vst [vmem:[#allocation2 + $0xd8] sm:$0xff] %v424
    %458 = vst [vmem:[#allocation2 + $0xe0] sm:$0xff] %v353
    %459 = vst [vmem:[#allocation2 + $0xe8] sm:$0xff] %v355
    %460 = vst [vmem:[#allocation2 + $0xf0] sm:$0xff] %v426
    %461 = vst [vmem:[#allocation2 + $0xf8] sm:$0xff] %v428
    %v462 = vld [vmem:[#allocation5] sm:$0xff]
    %v463 = vld [vmem:[#allocation5 + $0x8] sm:$0xff]
    %v464 = vld [vmem:[#allocation5 + $0x10] sm:$0xff]
    %v465 = vld [vmem:[#allocation5 + $0x18] sm:$0xff]
    %v466 = vld [vmem:[#allocation5 + $0x20] sm:$0xff]
    %v467 = vld [vmem:[#allocation5 + $0x28] sm:$0xff]
    %v468 = vld [vmem:[#allocation5 + $0x30] sm:$0xff]
    %v469 = vld [vmem:[#allocation5 + $0x38] sm:$0xff]
    %v470 = vld [vmem:[#allocation5 + $0x40] sm:$0xff]
    %v471 = vld [vmem:[#allocation5 + $0x48] sm:$0xff]
    %v472 = vld [vmem:[#allocation5 + $0x50] sm:$0xff]
    %v473 = vld [vmem:[#allocation5 + $0x58] sm:$0xff]
    %v474 = vld [vmem:[#allocation5 + $0x60] sm:$0xff]
    %v475 = vld [vmem:[#allocation5 + $0x68] sm:$0xff]
    %v476 = vld [vmem:[#allocation5 + $0x70] sm:$0xff]
    %v477 = vld [vmem:[#allocation5 + $0x78] sm:$0xff]
    %v478 = vld [vmem:[#allocation5 + $0x80] sm:$0xff]
    %v479 = vld [vmem:[#allocation5 + $0x88] sm:$0xff]
    %v480 = vld [vmem:[#allocation5 + $0x90] sm:$0xff]
    %v481 = vld [vmem:[#allocation5 + $0x98] sm:$0xff]
    %v482 = vld [vmem:[#allocation5 + $0xa0] sm:$0xff]
    %v483 = vld [vmem:[#allocation5 + $0xa8] sm:$0xff]
    %v484 = vld [vmem:[#allocation5 + $0xb0] sm:$0xff]
    %v485 = vld [vmem:[#allocation5 + $0xb8] sm:$0xff]
    %v486 = vld [vmem:[#allocation5 + $0xc0] sm:$0xff]
    %v487 = vld [vmem:[#allocation5 + $0xc8] sm:$0xff]
    %v488 = vld [vmem:[#allocation5 + $0xd0] sm:$0xff]
    %v489 = vld [vmem:[#allocation5 + $0xd8] sm:$0xff]
    %v490 = vld [vmem:[#allocation5 + $0xe0] sm:$0xff]
    %v491 = vld [vmem:[#allocation5 + $0xe8] sm:$0xff]
    %v492 = vld [vmem:[#allocation5 + $0xf0] sm:$0xff]
    %v493 = vld [vmem:[#allocation5 + $0xf8] sm:$0xff]
    %v494 = vld [vmem:[#allocation3] sm:$0xff]
    %v495 = vld [vmem:[#allocation4] sm:$0xff]
    %v496 = vpack.c.bf16 %v494, %v494
    %v529 = vunpack.c.l.b16 %v462
    %v530 = vunpack.c.h.b16 %v462
    %v531 = vunpack.c.l.b16 %v463
    %v532 = vunpack.c.h.b16 %v463
    %v533 = vunpack.c.l.b16 %v464
    %v534 = vunpack.c.h.b16 %v464
    %v535 = vunpack.c.l.b16 %v465
    %v536 = vunpack.c.h.b16 %v465
    %v537 = vunpack.c.l.b16 %v466
    %v538 = vunpack.c.h.b16 %v466
    %v539 = vunpack.c.l.b16 %v467
    %v540 = vunpack.c.h.b16 %v467
    %v541 = vunpack.c.l.b16 %v468
    %v542 = vunpack.c.h.b16 %v468
    %v543 = vunpack.c.l.b16 %v469
    %v544 = vunpack.c.h.b16 %v469
    %v545 = vunpack.c.l.b16 %v470
    %v546 = vunpack.c.h.b16 %v470
    %v547 = vunpack.c.l.b16 %v471
    %v548 = vunpack.c.h.b16 %v471
    %v549 = vunpack.c.l.b16 %v472
    %v550 = vunpack.c.h.b16 %v472
    %v551 = vunpack.c.l.b16 %v473
    %v552 = vunpack.c.h.b16 %v473
    %v553 = vunpack.c.l.b16 %v474
    %v554 = vunpack.c.h.b16 %v474
    %v555 = vunpack.c.l.b16 %v475
    %v556 = vunpack.c.h.b16 %v475
    %v557 = vunpack.c.l.b16 %v476
    %v558 = vunpack.c.h.b16 %v476
    %v559 = vunpack.c.l.b16 %v477
    %v560 = vunpack.c.h.b16 %v477
    %v561 = vunpack.c.l.b16 %v478
    %v562 = vunpack.c.h.b16 %v478
    %v563 = vunpack.c.l.b16 %v479
    %v564 = vunpack.c.h.b16 %v479
    %v565 = vunpack.c.l.b16 %v480
    %v566 = vunpack.c.h.b16 %v480
    %v567 = vunpack.c.l.b16 %v481
    %v568 = vunpack.c.h.b16 %v481
    %v569 = vunpack.c.l.b16 %v482
    %v570 = vunpack.c.h.b16 %v482
    %v571 = vunpack.c.l.b16 %v483
    %v572 = vunpack.c.h.b16 %v483
    %v573 = vunpack.c.l.b16 %v484
    %v574 = vunpack.c.h.b16 %v484
    %v575 = vunpack.c.l.b16 %v485
    %v576 = vunpack.c.h.b16 %v485
    %v577 = vunpack.c.l.b16 %v486
    %v578 = vunpack.c.h.b16 %v486
    %v579 = vunpack.c.l.b16 %v487
    %v580 = vunpack.c.h.b16 %v487
    %v581 = vunpack.c.l.b16 %v488
    %v582 = vunpack.c.h.b16 %v488
    %v583 = vunpack.c.l.b16 %v489
    %v584 = vunpack.c.h.b16 %v489
    %v585 = vunpack.c.l.b16 %v490
    %v586 = vunpack.c.h.b16 %v490
    %v587 = vunpack.c.l.b16 %v491
    %v588 = vunpack.c.h.b16 %v491
    %v589 = vunpack.c.l.b16 %v492
    %v590 = vunpack.c.h.b16 %v492
    %v591 = vunpack.c.l.b16 %v493
    %v592 = vunpack.c.h.b16 %v493
    %v593 = vpack.c.b16 %v533, %v529
    %v594 = vpack.c.b16 %v534, %v530
    %v595 = vpack.c.b16 %v535, %v531
    %v596 = vpack.c.b16 %v536, %v532
    %v597 = vpack.c.b16 %v541, %v537
    %v598 = vpack.c.b16 %v542, %v538
    %v599 = vpack.c.b16 %v543, %v539
    %v600 = vpack.c.b16 %v544, %v540
    %v601 = vpack.c.b16 %v549, %v545
    %v602 = vpack.c.b16 %v550, %v546
    %v603 = vpack.c.b16 %v551, %v547
    %v604 = vpack.c.b16 %v552, %v548
    %v605 = vpack.c.b16 %v557, %v553
    %v606 = vpack.c.b16 %v558, %v554
    %v607 = vpack.c.b16 %v559, %v555
    %v608 = vpack.c.b16 %v560, %v556
    %v609 = vpack.c.b16 %v565, %v561
    %v610 = vpack.c.b16 %v566, %v562
    %v611 = vpack.c.b16 %v567, %v563
    %v612 = vpack.c.b16 %v568, %v564
    %v613 = vpack.c.b16 %v573, %v569
    %v614 = vpack.c.b16 %v574, %v570
    %v615 = vpack.c.b16 %v575, %v571
    %v616 = vpack.c.b16 %v576, %v572
    %v617 = vpack.c.b16 %v581, %v577
    %v618 = vpack.c.b16 %v582, %v578
    %v619 = vpack.c.b16 %v583, %v579
    %v620 = vpack.c.b16 %v584, %v580
    %v621 = vpack.c.b16 %v589, %v585
    %v622 = vpack.c.b16 %v590, %v586
    %v623 = vpack.c.b16 %v591, %v587
    %v624 = vpack.c.b16 %v592, %v588
    %657 = vmatprep.subr.bf16.mxu0 %v594
    %658 = vmatpush1.bf16.msra.mxu0 %v593
    %659 = vmatprep.subr.bf16.mxu0 %v598
    %660 = vmatpush1.bf16.msra.mxu0 %v597
    %661 = vmatprep.subr.bf16.mxu0 %v602
    %662 = vmatpush1.bf16.msra.mxu0 %v601
    %663 = vmatprep.subr.bf16.mxu0 %v606
    %664 = vmatpush1.bf16.msra.mxu0 %v605
    %665 = vmatprep.subr.bf16.mxu0 %v610
    %666 = vmatpush1.bf16.msra.mxu0 %v609
    %667 = vmatprep.subr.bf16.mxu0 %v614
    %668 = vmatpush1.bf16.msra.mxu0 %v613
    %669 = vmatprep.subr.bf16.mxu0 %v618
    %670 = vmatpush1.bf16.msra.mxu0 %v617
    %671 = vmatprep.subr.bf16.mxu0 %v622
    %672 = vmatpush1.bf16.msra.mxu0 %v621
    %673 = vmatprep.subr.bf16.mxu0 0
    %674 = vmatpush1.bf16.msra.mxu0 0
    %675 = vmatprep.subr.bf16.mxu0 0
    %676 = vmatpush1.bf16.msra.mxu0 0
    %677 = vmatprep.subr.bf16.mxu0 0
    %678 = vmatpush1.bf16.msra.mxu0 0
    %679 = vmatprep.subr.bf16.mxu0 0
    %680 = vmatpush1.bf16.msra.mxu0 0
    %681 = vmatprep.subr.bf16.mxu0 0
    %682 = vmatpush1.bf16.msra.mxu0 0
    %683 = vmatprep.subr.bf16.mxu0 0
    %684 = vmatpush1.bf16.msra.mxu0 0
    %685 = vmatprep.subr.bf16.mxu0 0
    %686 = vmatpush1.bf16.msra.mxu0 0
    %687 = vmatprep.subr.bf16.mxu0 0
    %688 = vmatpush1.bf16.msra.mxu0 0
    %689 = vmatprep.mubr.bf16.mxu0 0
    %690 = vmatmul.mubr.bf16.gmra.mrb[0].mxu0 %v496
    %v691 = vpop.f32.mrb[0].mxu0
    %v692 = vadd.f32 0.0, %v691
    %v693 = vpop.f32.mrb[0].mxu0
    %v694 = vadd.f32 0.0, %v693
    %v695 = vpop.f32.mrb[0].mxu0
    %v696 = vpop.f32.mrb[0].mxu0
    %697 = vdwg.mxu0
    %698 = vmatprep.subr.bf16.mxu0 %v596
    %699 = vmatpush1.bf16.msra.mxu0 %v595
    %700 = vmatprep.subr.bf16.mxu0 %v600
    %701 = vmatpush1.bf16.msra.mxu0 %v599
    %702 = vmatprep.subr.bf16.mxu0 %v604
    %703 = vmatpush1.bf16.msra.mxu0 %v603
    %704 = vmatprep.subr.bf16.mxu0 %v608
    %705 = vmatpush1.bf16.msra.mxu0 %v607
    %706 = vmatprep.subr.bf16.mxu0 %v612
    %707 = vmatpush1.bf16.msra.mxu0 %v611
    %708 = vmatprep.subr.bf16.mxu0 %v616
    %709 = vmatpush1.bf16.msra.mxu0 %v615
    %710 = vmatprep.subr.bf16.mxu0 %v620
    %711 = vmatpush1.bf16.msra.mxu0 %v619
    %712 = vmatprep.subr.bf16.mxu0 %v624
    %713 = vmatpush1.bf16.msra.mxu0 %v623
    %714 = vmatprep.subr.bf16.mxu0 0
    %715 = vmatpush1.bf16.msra.mxu0 0
    %716 = vmatprep.subr.bf16.mxu0 0
    %717 = vmatpush1.bf16.msra.mxu0 0
    %718 = vmatprep.subr.bf16.mxu0 0
    %719 = vmatpush1.bf16.msra.mxu0 0
    %720 = vmatprep.subr.bf16.mxu0 0
    %721 = vmatpush1.bf16.msra.mxu0 0
    %722 = vmatprep.subr.bf16.mxu0 0
    %723 = vmatpush1.bf16.msra.mxu0 0
    %724 = vmatprep.subr.bf16.mxu0 0
    %725 = vmatpush1.bf16.msra.mxu0 0
    %726 = vmatprep.subr.bf16.mxu0 0
    %727 = vmatpush1.bf16.msra.mxu0 0
    %728 = vmatprep.subr.bf16.mxu0 0
    %729 = vmatpush1.bf16.msra.mxu0 0
    %730 = vmatprep.mubr.bf16.mxu0 0
    %731 = vmatmul.mubr.bf16.gmra.mrb[0].mxu0 %v496
    %v732 = vpop.f32.mrb[0].mxu0
    %v733 = vadd.f32 0.0, %v732
    %v734 = vpop.f32.mrb[0].mxu0
    %v735 = vadd.f32 0.0, %v734
    %v736 = vpop.f32.mrb[0].mxu0
    %v737 = vpop.f32.mrb[0].mxu0
    %738 = vdwg.mxu0
    %s739 = smul.u32 0, 4
    %s740 = smul.addr %s739, 8
    %s741 = scalar_lea.vmem [#allocation2], %s740
    %v742 = vld [vmem:[%s741] sm:$0xff]
    %v743 = vld [vmem:[%s741 + $0x8] sm:$0xff]
    %v744 = vld [vmem:[%s741 + $0x10] sm:$0xff]
    %v745 = vld [vmem:[%s741 + $0x18] sm:$0xff]
    %v746 = vadd.f32 %v742, %v692
    %v747 = vadd.f32 %v743, %v694
    %v748 = vadd.f32 %v744, %v733
    %v749 = vadd.f32 %v745, %v735
    %v750 = vxor.u32 %v746, 2147483648
    %v751 = vxor.u32 %v747, 2147483648
    %v752 = vxor.u32 %v748, 2147483648
    %v753 = vmul.f32 %v750, 1.442695
    %v754 = vpow.pop %v753
    %v755 = vmul.f32 %v751, 1.442695
    %v756 = vpow.pop %v755
    %v757 = vmul.f32 %v752, 1.442695
    %v758 = vpow.pop %v757
    %v759 = vadd.f32 %v754, 1.0
    %v760 = vadd.f32 %v756, 1.0
    %v761 = vadd.f32 %v758, 1.0
    %v762 = vrcp.pop %v759
    %v763 = vmul.f32 1.0, %v762
    %v764 = vrcp.pop %v760
    %v765 = vmul.f32 1.0, %v764
    %v766 = vrcp.pop %v761
    %v767 = vmul.f32 1.0, %v766
    %v768 = vtanh.pop %v749
    %v769 = vmul.f32 %v765, %v495
    %v770 = vmul.f32 %v763, %v768
    %v771 = vadd.f32 %v769, %v770
    %v772 = vtanh.pop %v771
    %v773 = vmul.f32 %v767, %v772
    %v774 = vpack.c.bf16 %v773, %v773
    %775 = vst [vmem:[%s4] sm:$0xf] %v774
    %776 = vmatprep.subr.bf16.mxu0 %v594
    %777 = vmatpush1.bf16.msra.mxu0 %v593
    %778 = vmatprep.subr.bf16.mxu0 %v598
    %779 = vmatpush1.bf16.msra.mxu0 %v597
    %780 = vmatprep.subr.bf16.mxu0 %v602
    %781 = vmatpush1.bf16.msra.mxu0 %v601
    %782 = vmatprep.subr.bf16.mxu0 %v606
    %783 = vmatpush1.bf16.msra.mxu0 %v605
    %784 = vmatprep.subr.bf16.mxu0 %v610
    %785 = vmatpush1.bf16.msra.mxu0 %v609
    %786 = vmatprep.subr.bf16.mxu0 %v614
    %787 = vmatpush1.bf16.msra.mxu0 %v613
    %788 = vmatprep.subr.bf16.mxu0 %v618
    %789 = vmatpush1.bf16.msra.mxu0 %v617
    %790 = vmatprep.subr.bf16.mxu0 %v622
    %791 = vmatpush1.bf16.msra.mxu0 %v621
    %792 = vmatprep.subr.bf16.mxu0 0
    %793 = vmatpush1.bf16.msra.mxu0 0
    %794 = vmatprep.subr.bf16.mxu0 0
    %795 = vmatpush1.bf16.msra.mxu0 0
    %796 = vmatprep.subr.bf16.mxu0 0
    %797 = vmatpush1.bf16.msra.mxu0 0
    %798 = vmatprep.subr.bf16.mxu0 0
    %799 = vmatpush1.bf16.msra.mxu0 0
    %800 = vmatprep.subr.bf16.mxu0 0
    %801 = vmatpush1.bf16.msra.mxu0 0
    %802 = vmatprep.subr.bf16.mxu0 0
    %803 = vmatpush1.bf16.msra.mxu0 0
    %804 = vmatprep.subr.bf16.mxu0 0
    %805 = vmatpush1.bf16.msra.mxu0 0
    %806 = vmatprep.subr.bf16.mxu0 0
    %807 = vmatpush1.bf16.msra.mxu0 0
    %808 = vmatprep.mubr.bf16.mxu0 0
    %809 = vmatmul.mubr.bf16.gmra.mrb[0].mxu0 %v774
    %v810 = vpop.f32.mrb[0].mxu0
    %v811 = vadd.f32 0.0, %v810
    %v812 = vpop.f32.mrb[0].mxu0
    %v813 = vadd.f32 0.0, %v812
    %v814 = vpop.f32.mrb[0].mxu0
    %v815 = vpop.f32.mrb[0].mxu0
    %816 = vdwg.mxu0
    %817 = vmatprep.subr.bf16.mxu0 %v596
    %818 = vmatpush1.bf16.msra.mxu0 %v595
    %819 = vmatprep.subr.bf16.mxu0 %v600
    %820 = vmatpush1.bf16.msra.mxu0 %v599
    %821 = vmatprep.subr.bf16.mxu0 %v604
    %822 = vmatpush1.bf16.msra.mxu0 %v603
    %823 = vmatprep.subr.bf16.mxu0 %v608
    %824 = vmatpush1.bf16.msra.mxu0 %v607
    %825 = vmatprep.subr.bf16.mxu0 %v612
    %826 = vmatpush1.bf16.msra.mxu0 %v611
    %827 = vmatprep.subr.bf16.mxu0 %v616
    %828 = vmatpush1.bf16.msra.mxu0 %v615
    %829 = vmatprep.subr.bf16.mxu0 %v620
    %830 = vmatpush1.bf16.msra.mxu0 %v619
    %831 = vmatprep.subr.bf16.mxu0 %v624
    %832 = vmatpush1.bf16.msra.mxu0 %v623
    %833 = vmatprep.subr.bf16.mxu0 0
    %834 = vmatpush1.bf16.msra.mxu0 0
    %835 = vmatprep.subr.bf16.mxu0 0
    %836 = vmatpush1.bf16.msra.mxu0 0
    %837 = vmatprep.subr.bf16.mxu0 0
    %838 = vmatpush1.bf16.msra.mxu0 0
    %839 = vmatprep.subr.bf16.mxu0 0
    %840 = vmatpush1.bf16.msra.mxu0 0
    %841 = vmatprep.subr.bf16.mxu0 0
    %842 = vmatpush1.bf16.msra.mxu0 0
    %843 = vmatprep.subr.bf16.mxu0 0
    %844 = vmatpush1.bf16.msra.mxu0 0
    %845 = vmatprep.subr.bf16.mxu0 0
    %846 = vmatpush1.bf16.msra.mxu0 0
    %847 = vmatprep.subr.bf16.mxu0 0
    %848 = vmatpush1.bf16.msra.mxu0 0
    %849 = vmatprep.mubr.bf16.mxu0 0
    %850 = vmatmul.mubr.bf16.gmra.mrb[0].mxu0 %v774
    %v851 = vpop.f32.mrb[0].mxu0
    %v852 = vadd.f32 0.0, %v851
    %v853 = vpop.f32.mrb[0].mxu0
    %v854 = vadd.f32 0.0, %v853
    %v855 = vpop.f32.mrb[0].mxu0
    %v856 = vpop.f32.mrb[0].mxu0
    %857 = vdwg.mxu0
    %s858 = smul.u32 1, 4
    %s859 = smul.addr %s858, 8
    %s860 = scalar_lea.vmem [#allocation2], %s859
    %v861 = vld [vmem:[%s860] sm:$0xff]
    %v862 = vld [vmem:[%s860 + $0x8] sm:$0xff]
    %v863 = vld [vmem:[%s860 + $0x10] sm:$0xff]
    %v864 = vld [vmem:[%s860 + $0x18] sm:$0xff]
    %v865 = vadd.f32 %v861, %v811
    %v866 = vadd.f32 %v862, %v813
    %v867 = vadd.f32 %v863, %v852
    %v868 = vadd.f32 %v864, %v854
    %v869 = vxor.u32 %v865, 2147483648
    %v870 = vxor.u32 %v866, 2147483648
    %v871 = vxor.u32 %v867, 2147483648
    %v872 = vmul.f32 %v869, 1.442695
    %v873 = vpow.pop %v872
    %v874 = vmul.f32 %v870, 1.442695
    %v875 = vpow.pop %v874
    %v876 = vmul.f32 %v871, 1.442695
    %v877 = vpow.pop %v876
    %v878 = vadd.f32 %v873, 1.0
    %v879 = vadd.f32 %v875, 1.0
    %v880 = vadd.f32 %v877, 1.0
    %v881 = vrcp.pop %v878
    %v882 = vmul.f32 1.0, %v881
    %v883 = vrcp.pop %v879
    %v884 = vmul.f32 1.0, %v883
    %v885 = vrcp.pop %v880
    %v886 = vmul.f32 1.0, %v885
    %v887 = vtanh.pop %v868
    %v888 = vmul.f32 %v884, %v771
    %v889 = vmul.f32 %v882, %v887
    %v890 = vadd.f32 %v888, %v889
    %v891 = vtanh.pop %v890
    %v892 = vmul.f32 %v886, %v891
    %v893 = vpack.c.bf16 %v892, %v892
    %s894 = scalar_lea.vmem %s4, 4
    %895 = vst [vmem:[%s894] sm:$0xf] %v893
    %896 = vmatprep.subr.bf16.mxu0 %v594
    %897 = vmatpush1.bf16.msra.mxu0 %v593
    %898 = vmatprep.subr.bf16.mxu0 %v598
    %899 = vmatpush1.bf16.msra.mxu0 %v597
    %900 = vmatprep.subr.bf16.mxu0 %v602
    %901 = vmatpush1.bf16.msra.mxu0 %v601
    %902 = vmatprep.subr.bf16.mxu0 %v606
    %903 = vmatpush1.bf16.msra.mxu0 %v605
    %904 = vmatprep.subr.bf16.mxu0 %v610
    %905 = vmatpush1.bf16.msra.mxu0 %v609
    %906 = vmatprep.subr.bf16.mxu0 %v614
    %907 = vmatpush1.bf16.msra.mxu0 %v613
    %908 = vmatprep.subr.bf16.mxu0 %v618
    %909 = vmatpush1.bf16.msra.mxu0 %v617
    %910 = vmatprep.subr.bf16.mxu0 %v622
    %911 = vmatpush1.bf16.msra.mxu0 %v621
    %912 = vmatprep.subr.bf16.mxu0 0
    %913 = vmatpush1.bf16.msra.mxu0 0
    %914 = vmatprep.subr.bf16.mxu0 0
    %915 = vmatpush1.bf16.msra.mxu0 0
    %916 = vmatprep.subr.bf16.mxu0 0
    %917 = vmatpush1.bf16.msra.mxu0 0
    %918 = vmatprep.subr.bf16.mxu0 0
    %919 = vmatpush1.bf16.msra.mxu0 0
    %920 = vmatprep.subr.bf16.mxu0 0
    %921 = vmatpush1.bf16.msra.mxu0 0
    %922 = vmatprep.subr.bf16.mxu0 0
    %923 = vmatpush1.bf16.msra.mxu0 0
    %924 = vmatprep.subr.bf16.mxu0 0
    %925 = vmatpush1.bf16.msra.mxu0 0
    %926 = vmatprep.subr.bf16.mxu0 0
    %927 = vmatpush1.bf16.msra.mxu0 0
    %928 = vmatprep.mubr.bf16.mxu0 0
    %929 = vmatmul.mubr.bf16.gmra.mrb[0].mxu0 %v893
    %v930 = vpop.f32.mrb[0].mxu0
    %v931 = vadd.f32 0.0, %v930
    %v932 = vpop.f32.mrb[0].mxu0
    %v933 = vadd.f32 0.0, %v932
    %v934 = vpop.f32.mrb[0].mxu0
    %v935 = vpop.f32.mrb[0].mxu0
    %936 = vdwg.mxu0
    %937 = vmatprep.subr.bf16.mxu0 %v596
    %938 = vmatpush1.bf16.msra.mxu0 %v595
    %939 = vmatprep.subr.bf16.mxu0 %v600
    %940 = vmatpush1.bf16.msra.mxu0 %v599
    %941 = vmatprep.subr.bf16.mxu0 %v604
    %942 = vmatpush1.bf16.msra.mxu0 %v603
    %943 = vmatprep.subr.bf16.mxu0 %v608
    %944 = vmatpush1.bf16.msra.mxu0 %v607
    %945 = vmatprep.subr.bf16.mxu0 %v612
    %946 = vmatpush1.bf16.msra.mxu0 %v611
    %947 = vmatprep.subr.bf16.mxu0 %v616
    %948 = vmatpush1.bf16.msra.mxu0 %v615
    %949 = vmatprep.subr.bf16.mxu0 %v620
    %950 = vmatpush1.bf16.msra.mxu0 %v619
    %951 = vmatprep.subr.bf16.mxu0 %v624
    %952 = vmatpush1.bf16.msra.mxu0 %v623
    %953 = vmatprep.subr.bf16.mxu0 0
    %954 = vmatpush1.bf16.msra.mxu0 0
    %955 = vmatprep.subr.bf16.mxu0 0
    %956 = vmatpush1.bf16.msra.mxu0 0
    %957 = vmatprep.subr.bf16.mxu0 0
    %958 = vmatpush1.bf16.msra.mxu0 0
    %959 = vmatprep.subr.bf16.mxu0 0
    %960 = vmatpush1.bf16.msra.mxu0 0
    %961 = vmatprep.subr.bf16.mxu0 0
    %962 = vmatpush1.bf16.msra.mxu0 0
    %963 = vmatprep.subr.bf16.mxu0 0
    %964 = vmatpush1.bf16.msra.mxu0 0
    %965 = vmatprep.subr.bf16.mxu0 0
    %966 = vmatpush1.bf16.msra.mxu0 0
    %967 = vmatprep.subr.bf16.mxu0 0
    %968 = vmatpush1.bf16.msra.mxu0 0
    %969 = vmatprep.mubr.bf16.mxu0 0
    %970 = vmatmul.mubr.bf16.gmra.mrb[0].mxu0 %v893
    %v971 = vpop.f32.mrb[0].mxu0
    %v972 = vadd.f32 0.0, %v971
    %v973 = vpop.f32.mrb[0].mxu0
    %v974 = vadd.f32 0.0, %v973
    %v975 = vpop.f32.mrb[0].mxu0
    %v976 = vpop.f32.mrb[0].mxu0
    %977 = vdwg.mxu0
    %s978 = smul.u32 2, 4
    %s979 = smul.addr %s978, 8
    %s980 = scalar_lea.vmem [#allocation2], %s979
    %v981 = vld [vmem:[%s980] sm:$0xff]
    %v982 = vld [vmem:[%s980 + $0x8] sm:$0xff]
    %v983 = vld [vmem:[%s980 + $0x10] sm:$0xff]
    %v984 = vld [vmem:[%s980 + $0x18] sm:$0xff]
    %v985 = vadd.f32 %v981, %v931
    %v986 = vadd.f32 %v982, %v933
    %v987 = vadd.f32 %v983, %v972
    %v988 = vadd.f32 %v984, %v974
    %v989 = vxor.u32 %v985, 2147483648
    %v990 = vxor.u32 %v986, 2147483648
    %v991 = vxor.u32 %v987, 2147483648
    %v992 = vmul.f32 %v989, 1.442695
    %v993 = vpow.pop %v992
    %v994 = vmul.f32 %v990, 1.442695
    %v995 = vpow.pop %v994
    %v996 = vmul.f32 %v991, 1.442695
    %v997 = vpow.pop %v996
    %v998 = vadd.f32 %v993, 1.0
    %v999 = vadd.f32 %v995, 1.0
    %v1000 = vadd.f32 %v997, 1.0
    %v1001 = vrcp.pop %v998
    %v1002 = vmul.f32 1.0, %v1001
    %v1003 = vrcp.pop %v999
    %v1004 = vmul.f32 1.0, %v1003
    %v1005 = vrcp.pop %v1000
    %v1006 = vmul.f32 1.0, %v1005
    %v1007 = vtanh.pop %v988
    %v1008 = vmul.f32 %v1004, %v890
    %v1009 = vmul.f32 %v1002, %v1007
    %v1010 = vadd.f32 %v1008, %v1009
    %v1011 = vtanh.pop %v1010
    %v1012 = vmul.f32 %v1006, %v1011
    %v1013 = vpack.c.bf16 %v1012, %v1012
    %s1014 = scalar_lea.vmem %s4, 8
    %1015 = vst [vmem:[%s1014] sm:$0xf] %v1013
    %1016 = vmatprep.subr.bf16.mxu0 %v594
    %1017 = vmatpush1.bf16.msra.mxu0 %v593
    %1018 = vmatprep.subr.bf16.mxu0 %v598
    %1019 = vmatpush1.bf16.msra.mxu0 %v597
    %1020 = vmatprep.subr.bf16.mxu0 %v602
    %1021 = vmatpush1.bf16.msra.mxu0 %v601
    %1022 = vmatprep.subr.bf16.mxu0 %v606
    %1023 = vmatpush1.bf16.msra.mxu0 %v605
    %1024 = vmatprep.subr.bf16.mxu0 %v610
    %1025 = vmatpush1.bf16.msra.mxu0 %v609
    %1026 = vmatprep.subr.bf16.mxu0 %v614
    %1027 = vmatpush1.bf16.msra.mxu0 %v613
    %1028 = vmatprep.subr.bf16.mxu0 %v618
    %1029 = vmatpush1.bf16.msra.mxu0 %v617
    %1030 = vmatprep.subr.bf16.mxu0 %v622
    %1031 = vmatpush1.bf16.msra.mxu0 %v621
    %1032 = vmatprep.subr.bf16.mxu0 0
    %1033 = vmatpush1.bf16.msra.mxu0 0
    %1034 = vmatprep.subr.bf16.mxu0 0
    %1035 = vmatpush1.bf16.msra.mxu0 0
    %1036 = vmatprep.subr.bf16.mxu0 0
    %1037 = vmatpush1.bf16.msra.mxu0 0
    %1038 = vmatprep.subr.bf16.mxu0 0
    %1039 = vmatpush1.bf16.msra.mxu0 0
    %1040 = vmatprep.subr.bf16.mxu0 0
    %1041 = vmatpush1.bf16.msra.mxu0 0
    %1042 = vmatprep.subr.bf16.mxu0 0
    %1043 = vmatpush1.bf16.msra.mxu0 0
    %1044 = vmatprep.subr.bf16.mxu0 0
    %1045 = vmatpush1.bf16.msra.mxu0 0
    %1046 = vmatprep.subr.bf16.mxu0 0
    %1047 = vmatpush1.bf16.msra.mxu0 0
    %1048 = vmatprep.mubr.bf16.mxu0 0
    %1049 = vmatmul.mubr.bf16.gmra.mrb[0].mxu0 %v1013
    %v1050 = vpop.f32.mrb[0].mxu0
    %v1051 = vadd.f32 0.0, %v1050
    %v1052 = vpop.f32.mrb[0].mxu0
    %v1053 = vadd.f32 0.0, %v1052
    %v1054 = vpop.f32.mrb[0].mxu0
    %v1055 = vpop.f32.mrb[0].mxu0
    %1056 = vdwg.mxu0
    %1057 = vmatprep.subr.bf16.mxu0 %v596
    %1058 = vmatpush1.bf16.msra.mxu0 %v595
    %1059 = vmatprep.subr.bf16.mxu0 %v600
    %1060 = vmatpush1.bf16.msra.mxu0 %v599
    %1061 = vmatprep.subr.bf16.mxu0 %v604
    %1062 = vmatpush1.bf16.msra.mxu0 %v603
    %1063 = vmatprep.subr.bf16.mxu0 %v608
    %1064 = vmatpush1.bf16.msra.mxu0 %v607
    %1065 = vmatprep.subr.bf16.mxu0 %v612
    %1066 = vmatpush1.bf16.msra.mxu0 %v611
    %1067 = vmatprep.subr.bf16.mxu0 %v616
    %1068 = vmatpush1.bf16.msra.mxu0 %v615
    %1069 = vmatprep.subr.bf16.mxu0 %v620
    %1070 = vmatpush1.bf16.msra.mxu0 %v619
    %1071 = vmatprep.subr.bf16.mxu0 %v624
    %1072 = vmatpush1.bf16.msra.mxu0 %v623
    %1073 = vmatprep.subr.bf16.mxu0 0
    %1074 = vmatpush1.bf16.msra.mxu0 0
    %1075 = vmatprep.subr.bf16.mxu0 0
    %1076 = vmatpush1.bf16.msra.mxu0 0
    %1077 = vmatprep.subr.bf16.mxu0 0
    %1078 = vmatpush1.bf16.msra.mxu0 0
    %1079 = vmatprep.subr.bf16.mxu0 0
    %1080 = vmatpush1.bf16.msra.mxu0 0
    %1081 = vmatprep.subr.bf16.mxu0 0
    %1082 = vmatpush1.bf16.msra.mxu0 0
    %1083 = vmatprep.subr.bf16.mxu0 0
    %1084 = vmatpush1.bf16.msra.mxu0 0
    %1085 = vmatprep.subr.bf16.mxu0 0
    %1086 = vmatpush1.bf16.msra.mxu0 0
    %1087 = vmatprep.subr.bf16.mxu0 0
    %1088 = vmatpush1.bf16.msra.mxu0 0
    %1089 = vmatprep.mubr.bf16.mxu0 0
    %1090 = vmatmul.mubr.bf16.gmra.mrb[0].mxu0 %v1013
    %v1091 = vpop.f32.mrb[0].mxu0
    %v1092 = vadd.f32 0.0, %v1091
    %v1093 = vpop.f32.mrb[0].mxu0
    %v1094 = vadd.f32 0.0, %v1093
    %v1095 = vpop.f32.mrb[0].mxu0
    %v1096 = vpop.f32.mrb[0].mxu0
    %1097 = vdwg.mxu0
    %s1098 = smul.u32 3, 4
    %s1099 = smul.addr %s1098, 8
    %s1100 = scalar_lea.vmem [#allocation2], %s1099
    %v1101 = vld [vmem:[%s1100] sm:$0xff]
    %v1102 = vld [vmem:[%s1100 + $0x8] sm:$0xff]
    %v1103 = vld [vmem:[%s1100 + $0x10] sm:$0xff]
    %v1104 = vld [vmem:[%s1100 + $0x18] sm:$0xff]
    %v1105 = vadd.f32 %v1101, %v1051
    %v1106 = vadd.f32 %v1102, %v1053
    %v1107 = vadd.f32 %v1103, %v1092
    %v1108 = vadd.f32 %v1104, %v1094
    %v1109 = vxor.u32 %v1105, 2147483648
    %v1110 = vxor.u32 %v1106, 2147483648
    %v1111 = vxor.u32 %v1107, 2147483648
    %v1112 = vmul.f32 %v1109, 1.442695
    %v1113 = vpow.pop %v1112
    %v1114 = vmul.f32 %v1110, 1.442695
    %v1115 = vpow.pop %v1114
    %v1116 = vmul.f32 %v1111, 1.442695
    %v1117 = vpow.pop %v1116
    %v1118 = vadd.f32 %v1113, 1.0
    %v1119 = vadd.f32 %v1115, 1.0
    %v1120 = vadd.f32 %v1117, 1.0
    %v1121 = vrcp.pop %v1118
    %v1122 = vmul.f32 1.0, %v1121
    %v1123 = vrcp.pop %v1119
    %v1124 = vmul.f32 1.0, %v1123
    %v1125 = vrcp.pop %v1120
    %v1126 = vmul.f32 1.0, %v1125
    %v1127 = vtanh.pop %v1108
    %v1128 = vmul.f32 %v1124, %v1010
    %v1129 = vmul.f32 %v1122, %v1127
    %v1130 = vadd.f32 %v1128, %v1129
    %v1131 = vtanh.pop %v1130
    %v1132 = vmul.f32 %v1126, %v1131
    %v1133 = vpack.c.bf16 %v1132, %v1132
    %s1134 = scalar_lea.vmem %s4, 12
    %1135 = vst [vmem:[%s1134] sm:$0xf] %v1133
    %1136 = vmatprep.subr.bf16.mxu0 %v594
    %1137 = vmatpush1.bf16.msra.mxu0 %v593
    %1138 = vmatprep.subr.bf16.mxu0 %v598
    %1139 = vmatpush1.bf16.msra.mxu0 %v597
    %1140 = vmatprep.subr.bf16.mxu0 %v602
    %1141 = vmatpush1.bf16.msra.mxu0 %v601
    %1142 = vmatprep.subr.bf16.mxu0 %v606
    %1143 = vmatpush1.bf16.msra.mxu0 %v605
    %1144 = vmatprep.subr.bf16.mxu0 %v610
    %1145 = vmatpush1.bf16.msra.mxu0 %v609
    %1146 = vmatprep.subr.bf16.mxu0 %v614
    %1147 = vmatpush1.bf16.msra.mxu0 %v613
    %1148 = vmatprep.subr.bf16.mxu0 %v618
    %1149 = vmatpush1.bf16.msra.mxu0 %v617
    %1150 = vmatprep.subr.bf16.mxu0 %v622
    %1151 = vmatpush1.bf16.msra.mxu0 %v621
    %1152 = vmatprep.subr.bf16.mxu0 0
    %1153 = vmatpush1.bf16.msra.mxu0 0
    %1154 = vmatprep.subr.bf16.mxu0 0
    %1155 = vmatpush1.bf16.msra.mxu0 0
    %1156 = vmatprep.subr.bf16.mxu0 0
    %1157 = vmatpush1.bf16.msra.mxu0 0
    %1158 = vmatprep.subr.bf16.mxu0 0
    %1159 = vmatpush1.bf16.msra.mxu0 0
    %1160 = vmatprep.subr.bf16.mxu0 0
    %1161 = vmatpush1.bf16.msra.mxu0 0
    %1162 = vmatprep.subr.bf16.mxu0 0
    %1163 = vmatpush1.bf16.msra.mxu0 0
    %1164 = vmatprep.subr.bf16.mxu0 0
    %1165 = vmatpush1.bf16.msra.mxu0 0
    %1166 = vmatprep.subr.bf16.mxu0 0
    %1167 = vmatpush1.bf16.msra.mxu0 0
    %1168 = vmatprep.mubr.bf16.mxu0 0
    %1169 = vmatmul.mubr.bf16.gmra.mrb[0].mxu0 %v1133
    %v1170 = vpop.f32.mrb[0].mxu0
    %v1171 = vadd.f32 0.0, %v1170
    %v1172 = vpop.f32.mrb[0].mxu0
    %v1173 = vadd.f32 0.0, %v1172
    %v1174 = vpop.f32.mrb[0].mxu0
    %v1175 = vpop.f32.mrb[0].mxu0
    %1176 = vdwg.mxu0
    %1177 = vmatprep.subr.bf16.mxu0 %v596
    %1178 = vmatpush1.bf16.msra.mxu0 %v595
    %1179 = vmatprep.subr.bf16.mxu0 %v600
    %1180 = vmatpush1.bf16.msra.mxu0 %v599
    %1181 = vmatprep.subr.bf16.mxu0 %v604
    %1182 = vmatpush1.bf16.msra.mxu0 %v603
    %1183 = vmatprep.subr.bf16.mxu0 %v608
    %1184 = vmatpush1.bf16.msra.mxu0 %v607
    %1185 = vmatprep.subr.bf16.mxu0 %v612
    %1186 = vmatpush1.bf16.msra.mxu0 %v611
    %1187 = vmatprep.subr.bf16.mxu0 %v616
    %1188 = vmatpush1.bf16.msra.mxu0 %v615
    %1189 = vmatprep.subr.bf16.mxu0 %v620
    %1190 = vmatpush1.bf16.msra.mxu0 %v619
    %1191 = vmatprep.subr.bf16.mxu0 %v624
    %1192 = vmatpush1.bf16.msra.mxu0 %v623
    %1193 = vmatprep.subr.bf16.mxu0 0
    %1194 = vmatpush1.bf16.msra.mxu0 0
    %1195 = vmatprep.subr.bf16.mxu0 0
    %1196 = vmatpush1.bf16.msra.mxu0 0
    %1197 = vmatprep.subr.bf16.mxu0 0
    %1198 = vmatpush1.bf16.msra.mxu0 0
    %1199 = vmatprep.subr.bf16.mxu0 0
    %1200 = vmatpush1.bf16.msra.mxu0 0
    %1201 = vmatprep.subr.bf16.mxu0 0
    %1202 = vmatpush1.bf16.msra.mxu0 0
    %1203 = vmatprep.subr.bf16.mxu0 0
    %1204 = vmatpush1.bf16.msra.mxu0 0
    %1205 = vmatprep.subr.bf16.mxu0 0
    %1206 = vmatpush1.bf16.msra.mxu0 0
    %1207 = vmatprep.subr.bf16.mxu0 0
    %1208 = vmatpush1.bf16.msra.mxu0 0
    %1209 = vmatprep.mubr.bf16.mxu0 0
    %1210 = vmatmul.mubr.bf16.gmra.mrb[0].mxu0 %v1133
    %v1211 = vpop.f32.mrb[0].mxu0
    %v1212 = vadd.f32 0.0, %v1211
    %v1213 = vpop.f32.mrb[0].mxu0
    %v1214 = vadd.f32 0.0, %v1213
    %v1215 = vpop.f32.mrb[0].mxu0
    %v1216 = vpop.f32.mrb[0].mxu0
    %1217 = vdwg.mxu0
    %s1218 = smul.u32 4, 4
    %s1219 = smul.addr %s1218, 8
    %s1220 = scalar_lea.vmem [#allocation2], %s1219
    %v1221 = vld [vmem:[%s1220] sm:$0xff]
    %v1222 = vld [vmem:[%s1220 + $0x8] sm:$0xff]
    %v1223 = vld [vmem:[%s1220 + $0x10] sm:$0xff]
    %v1224 = vld [vmem:[%s1220 + $0x18] sm:$0xff]
    %v1225 = vadd.f32 %v1221, %v1171
    %v1226 = vadd.f32 %v1222, %v1173
    %v1227 = vadd.f32 %v1223, %v1212
    %v1228 = vadd.f32 %v1224, %v1214
    %v1229 = vxor.u32 %v1225, 2147483648
    %v1230 = vxor.u32 %v1226, 2147483648
    %v1231 = vxor.u32 %v1227, 2147483648
    %v1232 = vmul.f32 %v1229, 1.442695
    %v1233 = vpow.pop %v1232
    %v1234 = vmul.f32 %v1230, 1.442695
    %v1235 = vpow.pop %v1234
    %v1236 = vmul.f32 %v1231, 1.442695
    %v1237 = vpow.pop %v1236
    %v1238 = vadd.f32 %v1233, 1.0
    %v1239 = vadd.f32 %v1235, 1.0
    %v1240 = vadd.f32 %v1237, 1.0
    %v1241 = vrcp.pop %v1238
    %v1242 = vmul.f32 1.0, %v1241
    %v1243 = vrcp.pop %v1239
    %v1244 = vmul.f32 1.0, %v1243
    %v1245 = vrcp.pop %v1240
    %v1246 = vmul.f32 1.0, %v1245
    %v1247 = vtanh.pop %v1228
    %v1248 = vmul.f32 %v1244, %v1130
    %v1249 = vmul.f32 %v1242, %v1247
    %v1250 = vadd.f32 %v1248, %v1249
    %v1251 = vtanh.pop %v1250
    %v1252 = vmul.f32 %v1246, %v1251
    %v1253 = vpack.c.bf16 %v1252, %v1252
    %s1254 = scalar_lea.vmem %s4, 16
    %1255 = vst [vmem:[%s1254] sm:$0xf] %v1253
    %1256 = vmatprep.subr.bf16.mxu0 %v594
    %1257 = vmatpush1.bf16.msra.mxu0 %v593
    %1258 = vmatprep.subr.bf16.mxu0 %v598
    %1259 = vmatpush1.bf16.msra.mxu0 %v597
    %1260 = vmatprep.subr.bf16.mxu0 %v602
    %1261 = vmatpush1.bf16.msra.mxu0 %v601
    %1262 = vmatprep.subr.bf16.mxu0 %v606
    %1263 = vmatpush1.bf16.msra.mxu0 %v605
    %1264 = vmatprep.subr.bf16.mxu0 %v610
    %1265 = vmatpush1.bf16.msra.mxu0 %v609
    %1266 = vmatprep.subr.bf16.mxu0 %v614
    %1267 = vmatpush1.bf16.msra.mxu0 %v613
    %1268 = vmatprep.subr.bf16.mxu0 %v618
    %1269 = vmatpush1.bf16.msra.mxu0 %v617
    %1270 = vmatprep.subr.bf16.mxu0 %v622
    %1271 = vmatpush1.bf16.msra.mxu0 %v621
    %1272 = vmatprep.subr.bf16.mxu0 0
    %1273 = vmatpush1.bf16.msra.mxu0 0
    %1274 = vmatprep.subr.bf16.mxu0 0
    %1275 = vmatpush1.bf16.msra.mxu0 0
    %1276 = vmatprep.subr.bf16.mxu0 0
    %1277 = vmatpush1.bf16.msra.mxu0 0
    %1278 = vmatprep.subr.bf16.mxu0 0
    %1279 = vmatpush1.bf16.msra.mxu0 0
    %1280 = vmatprep.subr.bf16.mxu0 0
    %1281 = vmatpush1.bf16.msra.mxu0 0
    %1282 = vmatprep.subr.bf16.mxu0 0
    %1283 = vmatpush1.bf16.msra.mxu0 0
    %1284 = vmatprep.subr.bf16.mxu0 0
    %1285 = vmatpush1.bf16.msra.mxu0 0
    %1286 = vmatprep.subr.bf16.mxu0 0
    %1287 = vmatpush1.bf16.msra.mxu0 0
    %1288 = vmatprep.mubr.bf16.mxu0 0
    %1289 = vmatmul.mubr.bf16.gmra.mrb[0].mxu0 %v1253
    %v1290 = vpop.f32.mrb[0].mxu0
    %v1291 = vadd.f32 0.0, %v1290
    %v1292 = vpop.f32.mrb[0].mxu0
    %v1293 = vadd.f32 0.0, %v1292
    %v1294 = vpop.f32.mrb[0].mxu0
    %v1295 = vpop.f32.mrb[0].mxu0
    %1296 = vdwg.mxu0
    %1297 = vmatprep.subr.bf16.mxu0 %v596
    %1298 = vmatpush1.bf16.msra.mxu0 %v595
    %1299 = vmatprep.subr.bf16.mxu0 %v600
    %1300 = vmatpush1.bf16.msra.mxu0 %v599
    %1301 = vmatprep.subr.bf16.mxu0 %v604
    %1302 = vmatpush1.bf16.msra.mxu0 %v603
    %1303 = vmatprep.subr.bf16.mxu0 %v608
    %1304 = vmatpush1.bf16.msra.mxu0 %v607
    %1305 = vmatprep.subr.bf16.mxu0 %v612
    %1306 = vmatpush1.bf16.msra.mxu0 %v611
    %1307 = vmatprep.subr.bf16.mxu0 %v616
    %1308 = vmatpush1.bf16.msra.mxu0 %v615
    %1309 = vmatprep.subr.bf16.mxu0 %v620
    %1310 = vmatpush1.bf16.msra.mxu0 %v619
    %1311 = vmatprep.subr.bf16.mxu0 %v624
    %1312 = vmatpush1.bf16.msra.mxu0 %v623
    %1313 = vmatprep.subr.bf16.mxu0 0
    %1314 = vmatpush1.bf16.msra.mxu0 0
    %1315 = vmatprep.subr.bf16.mxu0 0
    %1316 = vmatpush1.bf16.msra.mxu0 0
    %1317 = vmatprep.subr.bf16.mxu0 0
    %1318 = vmatpush1.bf16.msra.mxu0 0
    %1319 = vmatprep.subr.bf16.mxu0 0
    %1320 = vmatpush1.bf16.msra.mxu0 0
    %1321 = vmatprep.subr.bf16.mxu0 0
    %1322 = vmatpush1.bf16.msra.mxu0 0
    %1323 = vmatprep.subr.bf16.mxu0 0
    %1324 = vmatpush1.bf16.msra.mxu0 0
    %1325 = vmatprep.subr.bf16.mxu0 0
    %1326 = vmatpush1.bf16.msra.mxu0 0
    %1327 = vmatprep.subr.bf16.mxu0 0
    %1328 = vmatpush1.bf16.msra.mxu0 0
    %1329 = vmatprep.mubr.bf16.mxu0 0
    %1330 = vmatmul.mubr.bf16.gmra.mrb[0].mxu0 %v1253
    %v1331 = vpop.f32.mrb[0].mxu0
    %v1332 = vadd.f32 0.0, %v1331
    %v1333 = vpop.f32.mrb[0].mxu0
    %v1334 = vadd.f32 0.0, %v1333
    %v1335 = vpop.f32.mrb[0].mxu0
    %v1336 = vpop.f32.mrb[0].mxu0
    %1337 = vdwg.mxu0
    %s1338 = smul.u32 5, 4
    %s1339 = smul.addr %s1338, 8
    %s1340 = scalar_lea.vmem [#allocation2], %s1339
    %v1341 = vld [vmem:[%s1340] sm:$0xff]
    %v1342 = vld [vmem:[%s1340 + $0x8] sm:$0xff]
    %v1343 = vld [vmem:[%s1340 + $0x10] sm:$0xff]
    %v1344 = vld [vmem:[%s1340 + $0x18] sm:$0xff]
    %v1345 = vadd.f32 %v1341, %v1291
    %v1346 = vadd.f32 %v1342, %v1293
    %v1347 = vadd.f32 %v1343, %v1332
    %v1348 = vadd.f32 %v1344, %v1334
    %v1349 = vxor.u32 %v1345, 2147483648
    %v1350 = vxor.u32 %v1346, 2147483648
    %v1351 = vxor.u32 %v1347, 2147483648
    %v1352 = vmul.f32 %v1349, 1.442695
    %v1353 = vpow.pop %v1352
    %v1354 = vmul.f32 %v1350, 1.442695
    %v1355 = vpow.pop %v1354
    %v1356 = vmul.f32 %v1351, 1.442695
    %v1357 = vpow.pop %v1356
    %v1358 = vadd.f32 %v1353, 1.0
    %v1359 = vadd.f32 %v1355, 1.0
    %v1360 = vadd.f32 %v1357, 1.0
    %v1361 = vrcp.pop %v1358
    %v1362 = vmul.f32 1.0, %v1361
    %v1363 = vrcp.pop %v1359
    %v1364 = vmul.f32 1.0, %v1363
    %v1365 = vrcp.pop %v1360
    %v1366 = vmul.f32 1.0, %v1365
    %v1367 = vtanh.pop %v1348
    %v1368 = vmul.f32 %v1364, %v1250
    %v1369 = vmul.f32 %v1362, %v1367
    %v1370 = vadd.f32 %v1368, %v1369
    %v1371 = vtanh.pop %v1370
    %v1372 = vmul.f32 %v1366, %v1371
    %v1373 = vpack.c.bf16 %v1372, %v1372
    %s1374 = scalar_lea.vmem %s4, 20
    %1375 = vst [vmem:[%s1374] sm:$0xf] %v1373
    %1376 = vmatprep.subr.bf16.mxu0 %v594
    %1377 = vmatpush1.bf16.msra.mxu0 %v593
    %1378 = vmatprep.subr.bf16.mxu0 %v598
    %1379 = vmatpush1.bf16.msra.mxu0 %v597
    %1380 = vmatprep.subr.bf16.mxu0 %v602
    %1381 = vmatpush1.bf16.msra.mxu0 %v601
    %1382 = vmatprep.subr.bf16.mxu0 %v606
    %1383 = vmatpush1.bf16.msra.mxu0 %v605
    %1384 = vmatprep.subr.bf16.mxu0 %v610
    %1385 = vmatpush1.bf16.msra.mxu0 %v609
    %1386 = vmatprep.subr.bf16.mxu0 %v614
    %1387 = vmatpush1.bf16.msra.mxu0 %v613
    %1388 = vmatprep.subr.bf16.mxu0 %v618
    %1389 = vmatpush1.bf16.msra.mxu0 %v617
    %1390 = vmatprep.subr.bf16.mxu0 %v622
    %1391 = vmatpush1.bf16.msra.mxu0 %v621
    %1392 = vmatprep.subr.bf16.mxu0 0
    %1393 = vmatpush1.bf16.msra.mxu0 0
    %1394 = vmatprep.subr.bf16.mxu0 0
    %1395 = vmatpush1.bf16.msra.mxu0 0
    %1396 = vmatprep.subr.bf16.mxu0 0
    %1397 = vmatpush1.bf16.msra.mxu0 0
    %1398 = vmatprep.subr.bf16.mxu0 0
    %1399 = vmatpush1.bf16.msra.mxu0 0
    %1400 = vmatprep.subr.bf16.mxu0 0
    %1401 = vmatpush1.bf16.msra.mxu0 0
    %1402 = vmatprep.subr.bf16.mxu0 0
    %1403 = vmatpush1.bf16.msra.mxu0 0
    %1404 = vmatprep.subr.bf16.mxu0 0
    %1405 = vmatpush1.bf16.msra.mxu0 0
    %1406 = vmatprep.subr.bf16.mxu0 0
    %1407 = vmatpush1.bf16.msra.mxu0 0
    %1408 = vmatprep.mubr.bf16.mxu0 0
    %1409 = vmatmul.mubr.bf16.gmra.mrb[0].mxu0 %v1373
    %v1410 = vpop.f32.mrb[0].mxu0
    %v1411 = vadd.f32 0.0, %v1410
    %v1412 = vpop.f32.mrb[0].mxu0
    %v1413 = vadd.f32 0.0, %v1412
    %v1414 = vpop.f32.mrb[0].mxu0
    %v1415 = vpop.f32.mrb[0].mxu0
    %1416 = vdwg.mxu0
    %1417 = vmatprep.subr.bf16.mxu0 %v596
    %1418 = vmatpush1.bf16.msra.mxu0 %v595
    %1419 = vmatprep.subr.bf16.mxu0 %v600
    %1420 = vmatpush1.bf16.msra.mxu0 %v599
    %1421 = vmatprep.subr.bf16.mxu0 %v604
    %1422 = vmatpush1.bf16.msra.mxu0 %v603
    %1423 = vmatprep.subr.bf16.mxu0 %v608
    %1424 = vmatpush1.bf16.msra.mxu0 %v607
    %1425 = vmatprep.subr.bf16.mxu0 %v612
    %1426 = vmatpush1.bf16.msra.mxu0 %v611
    %1427 = vmatprep.subr.bf16.mxu0 %v616
    %1428 = vmatpush1.bf16.msra.mxu0 %v615
    %1429 = vmatprep.subr.bf16.mxu0 %v620
    %1430 = vmatpush1.bf16.msra.mxu0 %v619
    %1431 = vmatprep.subr.bf16.mxu0 %v624
    %1432 = vmatpush1.bf16.msra.mxu0 %v623
    %1433 = vmatprep.subr.bf16.mxu0 0
    %1434 = vmatpush1.bf16.msra.mxu0 0
    %1435 = vmatprep.subr.bf16.mxu0 0
    %1436 = vmatpush1.bf16.msra.mxu0 0
    %1437 = vmatprep.subr.bf16.mxu0 0
    %1438 = vmatpush1.bf16.msra.mxu0 0
    %1439 = vmatprep.subr.bf16.mxu0 0
    %1440 = vmatpush1.bf16.msra.mxu0 0
    %1441 = vmatprep.subr.bf16.mxu0 0
    %1442 = vmatpush1.bf16.msra.mxu0 0
    %1443 = vmatprep.subr.bf16.mxu0 0
    %1444 = vmatpush1.bf16.msra.mxu0 0
    %1445 = vmatprep.subr.bf16.mxu0 0
    %1446 = vmatpush1.bf16.msra.mxu0 0
    %1447 = vmatprep.subr.bf16.mxu0 0
    %1448 = vmatpush1.bf16.msra.mxu0 0
    %1449 = vmatprep.mubr.bf16.mxu0 0
    %1450 = vmatmul.mubr.bf16.gmra.mrb[0].mxu0 %v1373
    %v1451 = vpop.f32.mrb[0].mxu0
    %v1452 = vadd.f32 0.0, %v1451
    %v1453 = vpop.f32.mrb[0].mxu0
    %v1454 = vadd.f32 0.0, %v1453
    %v1455 = vpop.f32.mrb[0].mxu0
    %v1456 = vpop.f32.mrb[0].mxu0
    %1457 = vdwg.mxu0
    %s1458 = smul.u32 6, 4
    %s1459 = smul.addr %s1458, 8
    %s1460 = scalar_lea.vmem [#allocation2], %s1459
    %v1461 = vld [vmem:[%s1460] sm:$0xff]
    %v1462 = vld [vmem:[%s1460 + $0x8] sm:$0xff]
    %v1463 = vld [vmem:[%s1460 + $0x10] sm:$0xff]
    %v1464 = vld [vmem:[%s1460 + $0x18] sm:$0xff]
    %v1465 = vadd.f32 %v1461, %v1411
    %v1466 = vadd.f32 %v1462, %v1413
    %v1467 = vadd.f32 %v1463, %v1452
    %v1468 = vadd.f32 %v1464, %v1454
    %v1469 = vxor.u32 %v1465, 2147483648
    %v1470 = vxor.u32 %v1466, 2147483648
    %v1471 = vxor.u32 %v1467, 2147483648
    %v1472 = vmul.f32 %v1469, 1.442695
    %v1473 = vpow.pop %v1472
    %v1474 = vmul.f32 %v1470, 1.442695
    %v1475 = vpow.pop %v1474
    %v1476 = vmul.f32 %v1471, 1.442695
    %v1477 = vpow.pop %v1476
    %v1478 = vadd.f32 %v1473, 1.0
    %v1479 = vadd.f32 %v1475, 1.0
    %v1480 = vadd.f32 %v1477, 1.0
    %v1481 = vrcp.pop %v1478
    %v1482 = vmul.f32 1.0, %v1481
    %v1483 = vrcp.pop %v1479
    %v1484 = vmul.f32 1.0, %v1483
    %v1485 = vrcp.pop %v1480
    %v1486 = vmul.f32 1.0, %v1485
    %v1487 = vtanh.pop %v1468
    %v1488 = vmul.f32 %v1484, %v1370
    %v1489 = vmul.f32 %v1482, %v1487
    %v1490 = vadd.f32 %v1488, %v1489
    %v1491 = vtanh.pop %v1490
    %v1492 = vmul.f32 %v1486, %v1491
    %v1493 = vpack.c.bf16 %v1492, %v1492
    %s1494 = scalar_lea.vmem %s4, 24
    %1495 = vst [vmem:[%s1494] sm:$0xf] %v1493
    %1496 = vmatprep.subr.bf16.mxu0 %v594
    %1497 = vmatpush1.bf16.msra.mxu0 %v593
    %1498 = vmatprep.subr.bf16.mxu0 %v598
    %1499 = vmatpush1.bf16.msra.mxu0 %v597
    %1500 = vmatprep.subr.bf16.mxu0 %v602
    %1501 = vmatpush1.bf16.msra.mxu0 %v601
    %1502 = vmatprep.subr.bf16.mxu0 %v606
    %1503 = vmatpush1.bf16.msra.mxu0 %v605
    %1504 = vmatprep.subr.bf16.mxu0 %v610
    %1505 = vmatpush1.bf16.msra.mxu0 %v609
    %1506 = vmatprep.subr.bf16.mxu0 %v614
    %1507 = vmatpush1.bf16.msra.mxu0 %v613
    %1508 = vmatprep.subr.bf16.mxu0 %v618
    %1509 = vmatpush1.bf16.msra.mxu0 %v617
    %1510 = vmatprep.subr.bf16.mxu0 %v622
    %1511 = vmatpush1.bf16.msra.mxu0 %v621
    %1512 = vmatprep.subr.bf16.mxu0 0
    %1513 = vmatpush1.bf16.msra.mxu0 0
    %1514 = vmatprep.subr.bf16.mxu0 0
    %1515 = vmatpush1.bf16.msra.mxu0 0
    %1516 = vmatprep.subr.bf16.mxu0 0
    %1517 = vmatpush1.bf16.msra.mxu0 0
    %1518 = vmatprep.subr.bf16.mxu0 0
    %1519 = vmatpush1.bf16.msra.mxu0 0
    %1520 = vmatprep.subr.bf16.mxu0 0
    %1521 = vmatpush1.bf16.msra.mxu0 0
    %1522 = vmatprep.subr.bf16.mxu0 0
    %1523 = vmatpush1.bf16.msra.mxu0 0
    %1524 = vmatprep.subr.bf16.mxu0 0
    %1525 = vmatpush1.bf16.msra.mxu0 0
    %1526 = vmatprep.subr.bf16.mxu0 0
    %1527 = vmatpush1.bf16.msra.mxu0 0
    %1528 = vmatprep.mubr.bf16.mxu0 0
    %1529 = vmatmul.mubr.bf16.gmra.mrb[0].mxu0 %v1493
    %v1530 = vpop.f32.mrb[0].mxu0
    %v1531 = vadd.f32 0.0, %v1530
    %v1532 = vpop.f32.mrb[0].mxu0
    %v1533 = vadd.f32 0.0, %v1532
    %v1534 = vpop.f32.mrb[0].mxu0
    %v1535 = vpop.f32.mrb[0].mxu0
    %1536 = vdwg.mxu0
    %1537 = vmatprep.subr.bf16.mxu0 %v596
    %1538 = vmatpush1.bf16.msra.mxu0 %v595
    %1539 = vmatprep.subr.bf16.mxu0 %v600
    %1540 = vmatpush1.bf16.msra.mxu0 %v599
    %1541 = vmatprep.subr.bf16.mxu0 %v604
    %1542 = vmatpush1.bf16.msra.mxu0 %v603
    %1543 = vmatprep.subr.bf16.mxu0 %v608
    %1544 = vmatpush1.bf16.msra.mxu0 %v607
    %1545 = vmatprep.subr.bf16.mxu0 %v612
    %1546 = vmatpush1.bf16.msra.mxu0 %v611
    %1547 = vmatprep.subr.bf16.mxu0 %v616
    %1548 = vmatpush1.bf16.msra.mxu0 %v615
    %1549 = vmatprep.subr.bf16.mxu0 %v620
    %1550 = vmatpush1.bf16.msra.mxu0 %v619
    %1551 = vmatprep.subr.bf16.mxu0 %v624
    %1552 = vmatpush1.bf16.msra.mxu0 %v623
    %1553 = vmatprep.subr.bf16.mxu0 0
    %1554 = vmatpush1.bf16.msra.mxu0 0
    %1555 = vmatprep.subr.bf16.mxu0 0
    %1556 = vmatpush1.bf16.msra.mxu0 0
    %1557 = vmatprep.subr.bf16.mxu0 0
    %1558 = vmatpush1.bf16.msra.mxu0 0
    %1559 = vmatprep.subr.bf16.mxu0 0
    %1560 = vmatpush1.bf16.msra.mxu0 0
    %1561 = vmatprep.subr.bf16.mxu0 0
    %1562 = vmatpush1.bf16.msra.mxu0 0
    %1563 = vmatprep.subr.bf16.mxu0 0
    %1564 = vmatpush1.bf16.msra.mxu0 0
    %1565 = vmatprep.subr.bf16.mxu0 0
    %1566 = vmatpush1.bf16.msra.mxu0 0
    %1567 = vmatprep.subr.bf16.mxu0 0
    %1568 = vmatpush1.bf16.msra.mxu0 0
    %1569 = vmatprep.mubr.bf16.mxu0 0
    %1570 = vmatmul.mubr.bf16.gmra.mrb[0].mxu0 %v1493
    %v1571 = vpop.f32.mrb[0].mxu0
    %v1572 = vadd.f32 0.0, %v1571
    %v1573 = vpop.f32.mrb[0].mxu0
    %v1574 = vadd.f32 0.0, %v1573
    %v1575 = vpop.f32.mrb[0].mxu0
    %v1576 = vpop.f32.mrb[0].mxu0
    %1577 = vdwg.mxu0
    %s1578 = smul.u32 7, 4
    %s1579 = smul.addr %s1578, 8
    %s1580 = scalar_lea.vmem [#allocation2], %s1579
    %v1581 = vld [vmem:[%s1580] sm:$0xff]
    %v1582 = vld [vmem:[%s1580 + $0x8] sm:$0xff]
    %v1583 = vld [vmem:[%s1580 + $0x10] sm:$0xff]
    %v1584 = vld [vmem:[%s1580 + $0x18] sm:$0xff]
    %v1585 = vadd.f32 %v1581, %v1531
    %v1586 = vadd.f32 %v1582, %v1533
    %v1587 = vadd.f32 %v1583, %v1572
    %v1588 = vadd.f32 %v1584, %v1574
    %v1589 = vxor.u32 %v1585, 2147483648
    %v1590 = vxor.u32 %v1586, 2147483648
    %v1591 = vxor.u32 %v1587, 2147483648
    %v1592 = vmul.f32 %v1589, 1.442695
    %v1593 = vpow.pop %v1592
    %v1594 = vmul.f32 %v1590, 1.442695
    %v1595 = vpow.pop %v1594
    %v1596 = vmul.f32 %v1591, 1.442695
    %v1597 = vpow.pop %v1596
    %v1598 = vadd.f32 %v1593, 1.0
    %v1599 = vadd.f32 %v1595, 1.0
    %v1600 = vadd.f32 %v1597, 1.0
    %v1601 = vrcp.pop %v1598
    %v1602 = vmul.f32 1.0, %v1601
    %v1603 = vrcp.pop %v1599
    %v1604 = vmul.f32 1.0, %v1603
    %v1605 = vrcp.pop %v1600
    %v1606 = vmul.f32 1.0, %v1605
    %v1607 = vtanh.pop %v1588
    %v1608 = vmul.f32 %v1604, %v1490
    %v1609 = vmul.f32 %v1602, %v1607
    %v1610 = vadd.f32 %v1608, %v1609
    %v1611 = vtanh.pop %v1610
    %v1612 = vmul.f32 %v1606, %v1611
    %v1613 = vpack.c.bf16 %v1612, %v1612
    %s1614 = scalar_lea.vmem %s4, 28
    %1615 = vst [vmem:[%s1614] sm:$0xf] %v1613
    %1616 = vst [vmem:[#allocation3] sm:$0xff] %v1612
    %1617 = vst [vmem:[#allocation4] sm:$0xff] %v1610
    // Predicated region
    $region26: #{cvae_forward.3} parent=1 // pred_check
      _
    $region27: #{cvae_forward.3} parent=1 // pred_check_branch
      %1619 = sbr.rel (0) target = $region29
    $region28: #{cvae_forward.3} parent=1 // pred_region
      _
    $region29: #{cvae_forward.3} parent=1 // pred_fallthru
      _
    // Predicated region
    $region30: #{cvae_forward.3} parent=1 // pred_check
      _
    $region31: #{cvae_forward.3} parent=1 // pred_check_branch
      %1621 = sbr.rel (0) target = $region33
    $region32: #{cvae_forward.3} parent=1 // pred_region
      _
    $region33: #{cvae_forward.3} parent=1 // pred_fallthru
      _
    %1622 = vsyncpa [#allocation6], 1

</llo_original>
